<compile_context>
chip_gen: v7x
topology: tpu7x:2x2x1
jax: 0.10.0
libtpu: 0.0.40
codegen_flags: <defaults>
</compile_context>

<pallas_src>
import functools

import jax
import jax.numpy as jnp
from jax.experimental import pallas as pl
from jax.experimental.pallas import tpu as pltpu

N_FEATURES = 40
KSIZE = 9
POOLS = (4, 4, 5)
PADS = (0, 1, 0)
COUTS = (60, 40, 40)


# ----------------------------------------------------------------------------
# Fused kernel: bn0 -> 3x (conv + bn + maxpool + relu) -> fc, one batch element
# ----------------------------------------------------------------------------
def _fused_net_kernel(x_ref, bn0s_ref, bn0b_ref,
                      w1_ref, s1_ref, w2_ref, s2_ref, w3_ref, s3_ref,
                      fcw_ref, fcb_ref,
                      o_ref,
                      y1_ref, y2_ref, y3_ref,
                      *, ksize, pools, pads):
    # (L, Cin) activation; BatchNorm1d(in_channels) as a folded affine.
    h = x_ref[0] * bn0s_ref[...] + bn0b_ref[...]

    def conv_block(h, w_ref, shift_ref, y_ref, pool, pad):
        # Conv1d (BN scale pre-folded into w) + shift + MaxPool1d(pool) + ReLU.
        length, chan = h.shape
        if pad:
            z = jnp.zeros((pad, chan), h.dtype)
            h = jnp.concatenate([z, h, z], axis=0)      # in-kernel zero pad
            length += 2 * pad
        lout = length - ksize + 1
        # im2col: stack the K shifted windows along the contraction axis and
        # run a single (lout, chan*K) x (chan*K, cout) MXU matmul.
        cols = jnp.concatenate([h[k:k + lout, :] for k in range(ksize)],
                               axis=1)
        y_ref[...] = (jnp.dot(cols, w_ref[...],
                              preferred_element_type=jnp.float32)
                      + shift_ref[...])
        # MaxPool1d(pool, stride=pool): max over `pool` sublane-strided phases.
        lp = lout // pool
        pooled = y_ref[pl.ds(0, lp, stride=pool), :]
        for p in range(1, pool):
            pooled = jnp.maximum(pooled, y_ref[pl.ds(p, lp, stride=pool), :])
        return jnp.maximum(pooled, 0.0)                 # ReLU

    h = conv_block(h, w1_ref, s1_ref, y1_ref, pools[0], pads[0])
    h = conv_block(h, w2_ref, s2_ref, y2_ref, pools[1], pads[1])
    h = conv_block(h, w3_ref, s3_ref, y3_ref, pools[2], pads[2])   # (Lp3, 40)

    # Linear(40, n_class).
    # TODO(synk): matches torch `.view(-1, 40)` ordering only when Lp3 == 1
    # (true for the module's intended input lengths, e.g. L = 240).
    out = (jnp.dot(h, fcw_ref[...], preferred_element_type=jnp.float32)
           + fcb_ref[...])
    o_ref[0] = out.astype(o_ref.dtype)


# ----------------------------------------------------------------------------
# Wrapper
# ----------------------------------------------------------------------------
def _block_lens(L):
    l1 = L + 2 * PADS[0] - KSIZE + 1
    lp1 = l1 // POOLS[0]
    l2 = lp1 + 2 * PADS[1] - KSIZE + 1
    lp2 = l2 // POOLS[1]
    l3 = lp2 + 2 * PADS[2] - KSIZE + 1
    lp3 = l3 // POOLS[2]
    return (l1, l2, l3), (lp1, lp2, lp3)


def net_forward(x, kp):
    """x: (B, Cin, L) in the PyTorch Conv1d convention."""
    B, Cin, L = x.shape
    n_class = kp["fc_w"].shape[1]
    (l1, l2, l3), (_, _, lp3) = _block_lens(L)

    xt = jnp.transpose(x, (0, 2, 1))   # (B, L, Cin): layout plumbing only

    kern = functools.partial(_fused_net_kernel, ksize=KSIZE, pools=POOLS,
                             pads=PADS)
    full = lambda b: (0, 0)
    out = pl.pallas_call(
        kern,
        out_shape=jax.ShapeDtypeStruct((B, lp3, n_class), jnp.float32),
        grid=(B,),
        in_specs=[
            pl.BlockSpec((1, L, Cin), lambda b: (b, 0, 0)),
            pl.BlockSpec(kp["bn0_scale"].shape, full),
            pl.BlockSpec(kp["bn0_shift"].shape, full),
            pl.BlockSpec(kp["w1"].shape, full),
            pl.BlockSpec(kp["s1"].shape, full),
            pl.BlockSpec(kp["w2"].shape, full),
            pl.BlockSpec(kp["s2"].shape, full),
            pl.BlockSpec(kp["w3"].shape, full),
            pl.BlockSpec(kp["s3"].shape, full),
            pl.BlockSpec(kp["fc_w"].shape, full),
            pl.BlockSpec(kp["fc_b"].shape, full),
        ],
        out_specs=pl.BlockSpec((1, lp3, n_class), lambda b: (b, 0, 0)),
        scratch_shapes=[
            pltpu.VMEM((l1, COUTS[0]), jnp.float32),
            pltpu.VMEM((l2, COUTS[1]), jnp.float32),
            pltpu.VMEM((l3, COUTS[2]), jnp.float32),
        ],
        compiler_params=pltpu.CompilerParams(
            dimension_semantics=("parallel",)),
    )(xt, kp["bn0_scale"], kp["bn0_shift"],
      kp["w1"], kp["s1"], kp["w2"], kp["s2"], kp["w3"], kp["s3"],
      kp["fc_w"], kp["fc_b"])
    return out.reshape(B * lp3, n_class)


# ----------------------------------------------------------------------------
# Deterministic synthetic parameters (torch-like), plus kernel-side folding
# ----------------------------------------------------------------------------
def init_params(key, in_channels, n_class):
    ks = jax.random.split(key, 10)

    def bn(k, c):
        kg, kb, km, kv = jax.random.split(k, 4)
        gamma = 1.0 + 0.1 * jax.random.normal(kg, (c,), jnp.float32)
        beta = 0.1 * jax.random.normal(kb, (c,), jnp.float32)
        mean = 0.1 * jax.random.normal(km, (c,), jnp.float32)
        var = 0.5 + jnp.abs(jax.random.normal(kv, (c,), jnp.float32))
        scale = gamma * jax.lax.rsqrt(var + 1e-5)
        shift = beta - scale * mean
        return scale, shift

    def conv_w(k, cout, cin, ksz):
        return (cin * ksz) ** -0.5 * jax.random.normal(
            k, (cout, cin, ksz), jnp.float32)

    p = {}
    p["bn0_scale"], p["bn0_shift"] = bn(ks[0], in_channels)
    p["w1"] = conv_w(ks[1], 60, in_channels, KSIZE)
    p["bn1_scale"], p["bn1_shift"] = bn(ks[2], 60)          # conv bias=False
    p["w2"] = conv_w(ks[3], 40, 60, KSIZE)
    p["bn2_scale"], p["bn2_shift"] = bn(ks[4], 40)          # conv bias=False
    p["w3"] = conv_w(ks[5], 40, 40, KSIZE)
    p["b3"] = 0.1 * jax.random.normal(ks[6], (40,), jnp.float32)  # bias=True
    p["bn3_scale"], p["bn3_shift"] = bn(ks[7], 40)
    p["fc_w"] = (N_FEATURES ** -0.5) * jax.random.normal(
        ks[8], (N_FEATURES, n_class), jnp.float32)
    p["fc_b"] = 0.1 * jax.random.normal(ks[9], (n_class,), jnp.float32)
    return p


def fold_params(p):
    """Fold inference-mode BN into conv weights / shifts; kernel layouts."""
    def fold_conv(w, scale, shift, bias=None):
        cout, cin, k = w.shape
        w_eff = (scale[:, None, None] * w).transpose(2, 1, 0).reshape(
            k * cin, cout)                  # row index = k*cin + c
        sh = shift if bias is None else shift + scale * bias
        return w_eff, sh.reshape(1, cout)

    cin = p["bn0_scale"].shape[0]
    kp = {
        "bn0_scale": p["bn0_scale"].reshape(1, cin),
        "bn0_shift": p["bn0_shift"].reshape(1, cin),
        "fc_w": p["fc_w"],
        "fc_b": p["fc_b"].reshape(1, -1),
    }
    kp["w1"], kp["s1"] = fold_conv(p["w1"], p["bn1_scale"], p["bn1_shift"])
    kp["w2"], kp["s2"] = fold_conv(p["w2"], p["bn2_scale"], p["bn2_shift"])
    kp["w3"], kp["s3"] = fold_conv(p["w3"], p["bn3_scale"], p["bn3_shift"],
                                   p["b3"])
    return kp


# ----------------------------------------------------------------------------
# Pure-JAX reference (un-folded, conv-style math) for a sanity check
# ----------------------------------------------------------------------------
def _ref_block(x, w, bias, scale, shift, pool, pad):
    if pad:
        x = jnp.pad(x, ((0, 0), (0, 0), (pad, pad)))
    B, _, L = x.shape
    cout, _, K = w.shape
    lout = L - K + 1
    y = jnp.zeros((B, cout, lout), jnp.float32)
    for k in range(K):
        y = y + jnp.einsum("oi,bil->bol", w[:, :, k], x[:, :, k:k + lout])
    if bias is not None:
        y = y + bias[None, :, None]
    y = y * scale[None, :, None] + shift[None, :, None]
    lp = lout // pool
    y = y[:, :, :lp * pool].reshape(B, cout, lp, pool).max(axis=-1)
    return jnp.maximum(y, 0.0)


def ref_forward(x, p):
    f0 = x * p["bn0_scale"][None, :, None] + p["bn0_shift"][None, :, None]
    f1 = _ref_block(f0, p["w1"], None, p["bn1_scale"], p["bn1_shift"],
                    POOLS[0], PADS[0])
    f2 = _ref_block(f1, p["w2"], None, p["bn2_scale"], p["bn2_shift"],
                    POOLS[1], PADS[1])
    f3 = _ref_block(f2, p["w3"], p["b3"], p["bn3_scale"], p["bn3_shift"],
                    POOLS[2], PADS[2])
    feats = f3.reshape(-1, N_FEATURES)
    return feats @ p["fc_w"] + p["fc_b"][None, :]


# ----------------------------------------------------------------------------
if __name__ == "__main__":
    # L=240 -> 58 -> 13 -> 1 through the blocks, so f3 is (B, 40, 1) and
    # .view(-1, 40) gives (B, 40), matching the module's design.
    B, C_IN, L, N_CLASS = 2, 4, 240, 5

    key = jax.random.PRNGKey(0)
    kx, kparam = jax.random.split(key)
    x = jax.random.normal(kx, (B, C_IN, L), jnp.float32)
    params = init_params(kparam, C_IN, N_CLASS)
    kparams = fold_params(params)

    out = jax.jit(net_forward)(x, kparams)
    out = jax.block_until_ready(out)
    assert out.shape == (B, N_CLASS), out.shape

    ref = ref_forward(x, params)
    if not jnp.allclose(out, ref, atol=1e-2, rtol=1e-2):
        raise AssertionError(
            "kernel/reference mismatch: max |diff| = "
            f"{jnp.max(jnp.abs(out - ref))}")

    print("KERNEL_OK")
</pallas_src>

<mosaic_0001>
module attributes {stable_mosaic.version = 11 : i64} {
  func.func @_fused_net_kernel(%arg0: i32, %arg1: memref<1x240x4xf32, #tpu.memory_space<vmem>>, %arg2: memref<1x4xf32, #tpu.memory_space<vmem>>, %arg3: memref<1x4xf32, #tpu.memory_space<vmem>>, %arg4: memref<36x60xf32, #tpu.memory_space<vmem>>, %arg5: memref<1x60xf32, #tpu.memory_space<vmem>>, %arg6: memref<540x40xf32, #tpu.memory_space<vmem>>, %arg7: memref<1x40xf32, #tpu.memory_space<vmem>>, %arg8: memref<360x40xf32, #tpu.memory_space<vmem>>, %arg9: memref<1x40xf32, #tpu.memory_space<vmem>>, %arg10: memref<40x5xf32, #tpu.memory_space<vmem>>, %arg11: memref<1x5xf32, #tpu.memory_space<vmem>>, %arg12: memref<1x1x5xf32, #tpu.memory_space<vmem>>, %arg13: memref<232x60xf32, #tpu.memory_space<vmem>>, %arg14: memref<52x40xf32, #tpu.memory_space<vmem>>, %arg15: memref<5x40xf32, #tpu.memory_space<vmem>>) attributes {dimension_semantics = [#tpu.dimension_semantics<parallel>], iteration_bounds = array<i64: 2>, scalar_prefetch = 0 : i64, scratch_operands = 3 : i64, tpu.core_type = #tpu.core_type<tc>, window_params = [{transform_indices = @transform_0, window_bounds = array<i64: 1, 240, 4>}, {pipeline_mode = #tpu.pipeline_mode<synchronous>, transform_indices = @transform_1, window_bounds = array<i64: 1, 4>}, {pipeline_mode = #tpu.pipeline_mode<synchronous>, transform_indices = @transform_2, window_bounds = array<i64: 1, 4>}, {pipeline_mode = #tpu.pipeline_mode<synchronous>, transform_indices = @transform_3, window_bounds = array<i64: 36, 60>}, {pipeline_mode = #tpu.pipeline_mode<synchronous>, transform_indices = @transform_4, window_bounds = array<i64: 1, 60>}, {pipeline_mode = #tpu.pipeline_mode<synchronous>, transform_indices = @transform_5, window_bounds = array<i64: 540, 40>}, {pipeline_mode = #tpu.pipeline_mode<synchronous>, transform_indices = @transform_6, window_bounds = array<i64: 1, 40>}, {pipeline_mode = #tpu.pipeline_mode<synchronous>, transform_indices = @transform_7, window_bounds = array<i64: 360, 40>}, {pipeline_mode = #tpu.pipeline_mode<synchronous>, transform_indices = @transform_8, window_bounds = array<i64: 1, 40>}, {pipeline_mode = #tpu.pipeline_mode<synchronous>, transform_indices = @transform_9, window_bounds = array<i64: 40, 5>}, {pipeline_mode = #tpu.pipeline_mode<synchronous>, transform_indices = @transform_10, window_bounds = array<i64: 1, 5>}, {transform_indices = @transform_11, window_bounds = array<i64: 1, 1, 5>}]} {
    %c0 = arith.constant 0 : index
    %c0_0 = arith.constant 0 : index
    %c0_1 = arith.constant 0 : index
    %0 = vector.load %arg1[%c0, %c0_0, %c0_1] : memref<1x240x4xf32, #tpu.memory_space<vmem>>, vector<1x240x4xf32>
    %1 = vector.shape_cast %0 : vector<1x240x4xf32> to vector<240x4xf32>
    %c0_2 = arith.constant 0 : index
    %c0_3 = arith.constant 0 : index
    %2 = vector.load %arg2[%c0_2, %c0_3] : memref<1x4xf32, #tpu.memory_space<vmem>>, vector<1x4xf32>
    %3 = vector.broadcast %2 : vector<1x4xf32> to vector<240x4xf32>
    %4 = arith.mulf %1, %3 : vector<240x4xf32>
    %c0_4 = arith.constant 0 : index
    %c0_5 = arith.constant 0 : index
    %5 = vector.load %arg3[%c0_4, %c0_5] : memref<1x4xf32, #tpu.memory_space<vmem>>, vector<1x4xf32>
    %6 = vector.broadcast %5 : vector<1x4xf32> to vector<240x4xf32>
    %7 = arith.addf %4, %6 : vector<240x4xf32>
    %8 = vector.extract_strided_slice %7 {offsets = [0, 0], sizes = [232, 4], strides = [1, 1]} : vector<240x4xf32> to vector<232x4xf32>
    %9 = vector.extract_strided_slice %7 {offsets = [1, 0], sizes = [232, 4], strides = [1, 1]} : vector<240x4xf32> to vector<232x4xf32>
    %10 = vector.extract_strided_slice %7 {offsets = [2, 0], sizes = [232, 4], strides = [1, 1]} : vector<240x4xf32> to vector<232x4xf32>
    %11 = vector.extract_strided_slice %7 {offsets = [3, 0], sizes = [232, 4], strides = [1, 1]} : vector<240x4xf32> to vector<232x4xf32>
    %12 = vector.extract_strided_slice %7 {offsets = [4, 0], sizes = [232, 4], strides = [1, 1]} : vector<240x4xf32> to vector<232x4xf32>
    %13 = vector.extract_strided_slice %7 {offsets = [5, 0], sizes = [232, 4], strides = [1, 1]} : vector<240x4xf32> to vector<232x4xf32>
    %14 = vector.extract_strided_slice %7 {offsets = [6, 0], sizes = [232, 4], strides = [1, 1]} : vector<240x4xf32> to vector<232x4xf32>
    %15 = vector.extract_strided_slice %7 {offsets = [7, 0], sizes = [232, 4], strides = [1, 1]} : vector<240x4xf32> to vector<232x4xf32>
    %16 = vector.extract_strided_slice %7 {offsets = [8, 0], sizes = [232, 4], strides = [1, 1]} : vector<240x4xf32> to vector<232x4xf32>
    %17 = tpu.concatenate %8, %9, %10, %11, %12, %13, %14, %15, %16 in 1 : vector<232x4xf32>, vector<232x4xf32>, vector<232x4xf32>, vector<232x4xf32>, vector<232x4xf32>, vector<232x4xf32>, vector<232x4xf32>, vector<232x4xf32>, vector<232x4xf32> -> vector<232x36xf32>
    %c0_6 = arith.constant 0 : index
    %c0_7 = arith.constant 0 : index
    %18 = vector.load %arg4[%c0_6, %c0_7] : memref<36x60xf32, #tpu.memory_space<vmem>>, vector<36x60xf32>
    %cst = arith.constant dense<0.000000e+00> : vector<232x60xf32>
    %19 = tpu.matmul %17, %18, %cst {dimension_numbers = #tpu.dot_dimension_numbers<[1], [0], [0], [1], [0, 0, 1, 1], [], []>} : vector<232x36xf32>, vector<36x60xf32>, vector<232x60xf32> -> vector<232x60xf32>
    %c0_8 = arith.constant 0 : index
    %c0_9 = arith.constant 0 : index
    %20 = vector.load %arg5[%c0_8, %c0_9] : memref<1x60xf32, #tpu.memory_space<vmem>>, vector<1x60xf32>
    %21 = vector.broadcast %20 : vector<1x60xf32> to vector<232x60xf32>
    %22 = arith.addf %19, %21 : vector<232x60xf32>
    %c0_10 = arith.constant 0 : index
    %c0_11 = arith.constant 0 : index
    %23 = vector.load %arg13[%c0_10, %c0_11] : memref<232x60xf32, #tpu.memory_space<vmem>>, vector<232x60xf32>
    tpu.vector_store %arg13[%c0_10, %c0_11], %22 {strides = array<i32>} : memref<232x60xf32, #tpu.memory_space<vmem>>, vector<232x60xf32>,
    %c0_12 = arith.constant 0 : index
    %c0_13 = arith.constant 0 : index
    %24 = tpu.strided_load %arg13[%c0_12, %c0_13] {strides = array<i32: 4, 1>} : memref<232x60xf32, #tpu.memory_space<vmem>>, vector<58x60xf32>
    %c1 = arith.constant 1 : index
    %c0_14 = arith.constant 0 : index
    %25 = tpu.strided_load %arg13[%c1, %c0_14] {strides = array<i32: 4, 1>} : memref<232x60xf32, #tpu.memory_space<vmem>>, vector<58x60xf32>
    %26 = arith.maximumf %24, %25 : vector<58x60xf32>
    %c2 = arith.constant 2 : index
    %c0_15 = arith.constant 0 : index
    %27 = tpu.strided_load %arg13[%c2, %c0_15] {strides = array<i32: 4, 1>} : memref<232x60xf32, #tpu.memory_space<vmem>>, vector<58x60xf32>
    %28 = arith.maximumf %26, %27 : vector<58x60xf32>
    %c3 = arith.constant 3 : index
    %c0_16 = arith.constant 0 : index
    %29 = tpu.strided_load %arg13[%c3, %c0_16] {strides = array<i32: 4, 1>} : memref<232x60xf32, #tpu.memory_space<vmem>>, vector<58x60xf32>
    %30 = arith.maximumf %28, %29 : vector<58x60xf32>
    %cst_17 = arith.constant 0.000000e+00 : f32
    %31 = vector.broadcast %cst_17 : f32 to vector<58x60xf32>
    %32 = arith.maximumf %30, %31 : vector<58x60xf32>
    %cst_18 = arith.constant 0.000000e+00 : f32
    %33 = vector.broadcast %cst_18 : f32 to vector<1x60xf32>
    %34 = tpu.concatenate %33, %32, %33 in 0 : vector<1x60xf32>, vector<58x60xf32>, vector<1x60xf32> -> vector<60x60xf32>
    %35 = vector.extract_strided_slice %34 {offsets = [0, 0], sizes = [52, 60], strides = [1, 1]} : vector<60x60xf32> to vector<52x60xf32>
    %36 = vector.extract_strided_slice %34 {offsets = [1, 0], sizes = [52, 60], strides = [1, 1]} : vector<60x60xf32> to vector<52x60xf32>
    %37 = vector.extract_strided_slice %34 {offsets = [2, 0], sizes = [52, 60], strides = [1, 1]} : vector<60x60xf32> to vector<52x60xf32>
    %38 = vector.extract_strided_slice %34 {offsets = [3, 0], sizes = [52, 60], strides = [1, 1]} : vector<60x60xf32> to vector<52x60xf32>
    %39 = vector.extract_strided_slice %34 {offsets = [4, 0], sizes = [52, 60], strides = [1, 1]} : vector<60x60xf32> to vector<52x60xf32>
    %40 = vector.extract_strided_slice %34 {offsets = [5, 0], sizes = [52, 60], strides = [1, 1]} : vector<60x60xf32> to vector<52x60xf32>
    %41 = vector.extract_strided_slice %34 {offsets = [6, 0], sizes = [52, 60], strides = [1, 1]} : vector<60x60xf32> to vector<52x60xf32>
    %42 = vector.extract_strided_slice %34 {offsets = [7, 0], sizes = [52, 60], strides = [1, 1]} : vector<60x60xf32> to vector<52x60xf32>
    %43 = vector.extract_strided_slice %34 {offsets = [8, 0], sizes = [52, 60], strides = [1, 1]} : vector<60x60xf32> to vector<52x60xf32>
    %44 = tpu.concatenate %35, %36, %37, %38, %39, %40, %41, %42, %43 in 1 : vector<52x60xf32>, vector<52x60xf32>, vector<52x60xf32>, vector<52x60xf32>, vector<52x60xf32>, vector<52x60xf32>, vector<52x60xf32>, vector<52x60xf32>, vector<52x60xf32> -> vector<52x540xf32>
    %c0_19 = arith.constant 0 : index
    %c0_20 = arith.constant 0 : index
    %45 = vector.load %arg6[%c0_19, %c0_20] : memref<540x40xf32, #tpu.memory_space<vmem>>, vector<540x40xf32>
    %cst_21 = arith.constant dense<0.000000e+00> : vector<52x40xf32>
    %46 = tpu.matmul %44, %45, %cst_21 {dimension_numbers = #tpu.dot_dimension_numbers<[1], [0], [0], [1], [0, 0, 1, 1], [], []>} : vector<52x540xf32>, vector<540x40xf32>, vector<52x40xf32> -> vector<52x40xf32>
    %c0_22 = arith.constant 0 : index
    %c0_23 = arith.constant 0 : index
    %47 = vector.load %arg7[%c0_22, %c0_23] : memref<1x40xf32, #tpu.memory_space<vmem>>, vector<1x40xf32>
    %48 = vector.broadcast %47 : vector<1x40xf32> to vector<52x40xf32>
    %49 = arith.addf %46, %48 : vector<52x40xf32>
    %c0_24 = arith.constant 0 : index
    %c0_25 = arith.constant 0 : index
    %50 = vector.load %arg14[%c0_24, %c0_25] : memref<52x40xf32, #tpu.memory_space<vmem>>, vector<52x40xf32>
    tpu.vector_store %arg14[%c0_24, %c0_25], %49 {strides = array<i32>} : memref<52x40xf32, #tpu.memory_space<vmem>>, vector<52x40xf32>,
    %c0_26 = arith.constant 0 : index
    %c0_27 = arith.constant 0 : index
    %51 = tpu.strided_load %arg14[%c0_26, %c0_27] {strides = array<i32: 4, 1>} : memref<52x40xf32, #tpu.memory_space<vmem>>, vector<13x40xf32>
    %c1_28 = arith.constant 1 : index
    %c0_29 = arith.constant 0 : index
    %52 = tpu.strided_load %arg14[%c1_28, %c0_29] {strides = array<i32: 4, 1>} : memref<52x40xf32, #tpu.memory_space<vmem>>, vector<13x40xf32>
    %53 = arith.maximumf %51, %52 : vector<13x40xf32>
    %c2_30 = arith.constant 2 : index
    %c0_31 = arith.constant 0 : index
    %54 = tpu.strided_load %arg14[%c2_30, %c0_31] {strides = array<i32: 4, 1>} : memref<52x40xf32, #tpu.memory_space<vmem>>, vector<13x40xf32>
    %55 = arith.maximumf %53, %54 : vector<13x40xf32>
    %c3_32 = arith.constant 3 : index
    %c0_33 = arith.constant 0 : index
    %56 = tpu.strided_load %arg14[%c3_32, %c0_33] {strides = array<i32: 4, 1>} : memref<52x40xf32, #tpu.memory_space<vmem>>, vector<13x40xf32>
    %57 = arith.maximumf %55, %56 : vector<13x40xf32>
    %cst_34 = arith.constant 0.000000e+00 : f32
    %58 = vector.broadcast %cst_34 : f32 to vector<13x40xf32>
    %59 = arith.maximumf %57, %58 : vector<13x40xf32>
    %60 = vector.extract_strided_slice %59 {offsets = [0, 0], sizes = [5, 40], strides = [1, 1]} : vector<13x40xf32> to vector<5x40xf32>
    %61 = vector.extract_strided_slice %59 {offsets = [1, 0], sizes = [5, 40], strides = [1, 1]} : vector<13x40xf32> to vector<5x40xf32>
    %62 = vector.extract_strided_slice %59 {offsets = [2, 0], sizes = [5, 40], strides = [1, 1]} : vector<13x40xf32> to vector<5x40xf32>
    %63 = vector.extract_strided_slice %59 {offsets = [3, 0], sizes = [5, 40], strides = [1, 1]} : vector<13x40xf32> to vector<5x40xf32>
    %64 = vector.extract_strided_slice %59 {offsets = [4, 0], sizes = [5, 40], strides = [1, 1]} : vector<13x40xf32> to vector<5x40xf32>
    %65 = vector.extract_strided_slice %59 {offsets = [5, 0], sizes = [5, 40], strides = [1, 1]} : vector<13x40xf32> to vector<5x40xf32>
    %66 = vector.extract_strided_slice %59 {offsets = [6, 0], sizes = [5, 40], strides = [1, 1]} : vector<13x40xf32> to vector<5x40xf32>
    %67 = vector.extract_strided_slice %59 {offsets = [7, 0], sizes = [5, 40], strides = [1, 1]} : vector<13x40xf32> to vector<5x40xf32>
    %68 = vector.extract_strided_slice %59 {offsets = [8, 0], sizes = [5, 40], strides = [1, 1]} : vector<13x40xf32> to vector<5x40xf32>
    %69 = tpu.concatenate %60, %61, %62, %63, %64, %65, %66, %67, %68 in 1 : vector<5x40xf32>, vector<5x40xf32>, vector<5x40xf32>, vector<5x40xf32>, vector<5x40xf32>, vector<5x40xf32>, vector<5x40xf32>, vector<5x40xf32>, vector<5x40xf32> -> vector<5x360xf32>
    %c0_35 = arith.constant 0 : index
    %c0_36 = arith.constant 0 : index
    %70 = vector.load %arg8[%c0_35, %c0_36] : memref<360x40xf32, #tpu.memory_space<vmem>>, vector<360x40xf32>
    %cst_37 = arith.constant dense<0.000000e+00> : vector<5x40xf32>
    %71 = tpu.matmul %69, %70, %cst_37 {dimension_numbers = #tpu.dot_dimension_numbers<[1], [0], [0], [1], [0, 0, 1, 1], [], []>} : vector<5x360xf32>, vector<360x40xf32>, vector<5x40xf32> -> vector<5x40xf32>
    %c0_38 = arith.constant 0 : index
    %c0_39 = arith.constant 0 : index
    %72 = vector.load %arg9[%c0_38, %c0_39] : memref<1x40xf32, #tpu.memory_space<vmem>>, vector<1x40xf32>
    %73 = vector.broadcast %72 : vector<1x40xf32> to vector<5x40xf32>
    %74 = arith.addf %71, %73 : vector<5x40xf32>
    %c0_40 = arith.constant 0 : index
    %c0_41 = arith.constant 0 : index
    %75 = vector.load %arg15[%c0_40, %c0_41] : memref<5x40xf32, #tpu.memory_space<vmem>>, vector<5x40xf32>
    tpu.vector_store %arg15[%c0_40, %c0_41], %74 {strides = array<i32>} : memref<5x40xf32, #tpu.memory_space<vmem>>, vector<5x40xf32>,
    %c0_42 = arith.constant 0 : index
    %c0_43 = arith.constant 0 : index
    %76 = tpu.strided_load %arg15[%c0_42, %c0_43] {strides = array<i32: 5, 1>} : memref<5x40xf32, #tpu.memory_space<vmem>>, vector<1x40xf32>
    %c1_44 = arith.constant 1 : index
    %c0_45 = arith.constant 0 : index
    %77 = tpu.strided_load %arg15[%c1_44, %c0_45] {strides = array<i32: 5, 1>} : memref<5x40xf32, #tpu.memory_space<vmem>>, vector<1x40xf32>
    %78 = arith.maximumf %76, %77 : vector<1x40xf32>
    %c2_46 = arith.constant 2 : index
    %c0_47 = arith.constant 0 : index
    %79 = tpu.strided_load %arg15[%c2_46, %c0_47] {strides = array<i32: 5, 1>} : memref<5x40xf32, #tpu.memory_space<vmem>>, vector<1x40xf32>
    %80 = arith.maximumf %78, %79 : vector<1x40xf32>
    %c3_48 = arith.constant 3 : index
    %c0_49 = arith.constant 0 : index
    %81 = tpu.strided_load %arg15[%c3_48, %c0_49] {strides = array<i32: 5, 1>} : memref<5x40xf32, #tpu.memory_space<vmem>>, vector<1x40xf32>
    %82 = arith.maximumf %80, %81 : vector<1x40xf32>
    %c4 = arith.constant 4 : index
    %c0_50 = arith.constant 0 : index
    %83 = tpu.strided_load %arg15[%c4, %c0_50] {strides = array<i32: 5, 1>} : memref<5x40xf32, #tpu.memory_space<vmem>>, vector<1x40xf32>
    %84 = arith.maximumf %82, %83 : vector<1x40xf32>
    %cst_51 = arith.constant 0.000000e+00 : f32
    %85 = vector.broadcast %cst_51 : f32 to vector<1x40xf32>
    %86 = arith.maximumf %84, %85 : vector<1x40xf32>
    %c0_52 = arith.constant 0 : index
    %c0_53 = arith.constant 0 : index
    %87 = vector.load %arg10[%c0_52, %c0_53] : memref<40x5xf32, #tpu.memory_space<vmem>>, vector<40x5xf32>
    %cst_54 = arith.constant dense<0.000000e+00> : vector<1x5xf32>
    %88 = tpu.matmul %86, %87, %cst_54 {dimension_numbers = #tpu.dot_dimension_numbers<[1], [0], [0], [1], [0, 0, 1, 1], [], []>} : vector<1x40xf32>, vector<40x5xf32>, vector<1x5xf32> -> vector<1x5xf32>
    %c0_55 = arith.constant 0 : index
    %c0_56 = arith.constant 0 : index
    %89 = vector.load %arg11[%c0_55, %c0_56] : memref<1x5xf32, #tpu.memory_space<vmem>>, vector<1x5xf32>
    %90 = arith.addf %88, %89 : vector<1x5xf32>
    %c0_57 = arith.constant 0 : index
    %c0_58 = arith.constant 0 : index
    %c0_59 = arith.constant 0 : index
    %91 = vector.load %arg12[%c0_57, %c0_58, %c0_59] : memref<1x1x5xf32, #tpu.memory_space<vmem>>, vector<1x1x5xf32>
    %92 = vector.shape_cast %91 : vector<1x1x5xf32> to vector<1x5xf32>
    %93 = vector.shape_cast %90 : vector<1x5xf32> to vector<1x1x5xf32>
    tpu.vector_store %arg12[%c0_57, %c0_58, %c0_59], %93 {strides = array<i32>} : memref<1x1x5xf32, #tpu.memory_space<vmem>>, vector<1x1x5xf32>,
    return
  }
  func.func @transform_0(%arg0: i32) -> (i32, i32, i32) {
    %c0_i32 = arith.constant 0 : i32
    %c0_i32_0 = arith.constant 0 : i32
    %c0_i32_1 = arith.constant 0 : i32
    return %arg0, %c0_i32, %c0_i32_0 : i32, i32, i32
  }
  func.func @transform_1(%arg0: i32) -> (i32, i32) {
    %c0_i32 = arith.constant 0 : i32
    %c0_i32_0 = arith.constant 0 : i32
    %c0_i32_1 = arith.constant 0 : i32
    return %c0_i32, %c0_i32_0 : i32, i32
  }
  func.func @transform_2(%arg0: i32) -> (i32, i32) {
    %c0_i32 = arith.constant 0 : i32
    %c0_i32_0 = arith.constant 0 : i32
    %c0_i32_1 = arith.constant 0 : i32
    return %c0_i32, %c0_i32_0 : i32, i32
  }
  func.func @transform_3(%arg0: i32) -> (i32, i32) {
    %c0_i32 = arith.constant 0 : i32
    %c0_i32_0 = arith.constant 0 : i32
    %c0_i32_1 = arith.constant 0 : i32
    return %c0_i32, %c0_i32_0 : i32, i32
  }
  func.func @transform_4(%arg0: i32) -> (i32, i32) {
    %c0_i32 = arith.constant 0 : i32
    %c0_i32_0 = arith.constant 0 : i32
    %c0_i32_1 = arith.constant 0 : i32
    return %c0_i32, %c0_i32_0 : i32, i32
  }
  func.func @transform_5(%arg0: i32) -> (i32, i32) {
    %c0_i32 = arith.constant 0 : i32
    %c0_i32_0 = arith.constant 0 : i32
    %c0_i32_1 = arith.constant 0 : i32
    return %c0_i32, %c0_i32_0 : i32, i32
  }
  func.func @transform_6(%arg0: i32) -> (i32, i32) {
    %c0_i32 = arith.constant 0 : i32
    %c0_i32_0 = arith.constant 0 : i32
    %c0_i32_1 = arith.constant 0 : i32
    return %c0_i32, %c0_i32_0 : i32, i32
  }
  func.func @transform_7(%arg0: i32) -> (i32, i32) {
    %c0_i32 = arith.constant 0 : i32
    %c0_i32_0 = arith.constant 0 : i32
    %c0_i32_1 = arith.constant 0 : i32
    return %c0_i32, %c0_i32_0 : i32, i32
  }
  func.func @transform_8(%arg0: i32) -> (i32, i32) {
    %c0_i32 = arith.constant 0 : i32
    %c0_i32_0 = arith.constant 0 : i32
    %c0_i32_1 = arith.constant 0 : i32
    return %c0_i32, %c0_i32_0 : i32, i32
  }
  func.func @transform_9(%arg0: i32) -> (i32, i32) {
    %c0_i32 = arith.constant 0 : i32
    %c0_i32_0 = arith.constant 0 : i32
    %c0_i32_1 = arith.constant 0 : i32
    return %c0_i32, %c0_i32_0 : i32, i32
  }
  func.func @transform_10(%arg0: i32) -> (i32, i32) {
    %c0_i32 = arith.constant 0 : i32
    %c0_i32_0 = arith.constant 0 : i32
    %c0_i32_1 = arith.constant 0 : i32
    return %c0_i32, %c0_i32_0 : i32, i32
  }
  func.func @transform_11(%arg0: i32) -> (i32, i32, i32) {
    %c0_i32 = arith.constant 0 : i32
    %c0_i32_0 = arith.constant 0 : i32
    %c0_i32_1 = arith.constant 0 : i32
    return %arg0, %c0_i32, %c0_i32_0 : i32, i32, i32
  }
}

</mosaic_0001>

<llo_original>
// kernel: net_forward.1
$region0: #{net_forward.1}
  #allocation0 [shape = 'u32[]', space=smem, size = 0x4, offset = 0x4, fixed_abs, tag = 'smem constant byte address 0x4 - core index']
  #allocation1 [shape = 'u32[144,128]{1,0:T(1,128)}', space=vmem, size = 0x12000, scoped, tag = 'internal scratch']
  #allocation2 [shape = 'f32[232,60]{1,0:T(8,128)}', space=vmem, size = 0x1d000, scoped, tag = 'scratch operand']
  #allocation3 [shape = 'f32[52,40]{1,0:T(8,128)}', space=vmem, size = 0x7000, scoped, tag = 'scratch operand']
  #allocation4 [shape = 'f32[5,40]{1,0:T(8,128)}', space=vmem, size = 0x1000, scoped, tag = 'scratch operand']
  %s0 = inlined_call_operand.vmem [shape: f32[2,240,4], index: 0, kind: input, shape index: {}]
  %s1 = inlined_call_operand.vmem [shape: f32[1,4], index: 1, kind: input, shape index: {}]
  %s2 = inlined_call_operand.vmem [shape: f32[1,4], index: 2, kind: input, shape index: {}]
  %s3 = inlined_call_operand.vmem [shape: f32[36,60], index: 3, kind: input, shape index: {}]
  %s4 = inlined_call_operand.vmem [shape: f32[1,60], index: 4, kind: input, shape index: {}]
  %s5 = inlined_call_operand.vmem [shape: f32[540,40], index: 5, kind: input, shape index: {}]
  %s6 = inlined_call_operand.vmem [shape: f32[1,40], index: 6, kind: input, shape index: {}]
  %s7 = inlined_call_operand.vmem [shape: f32[360,40], index: 7, kind: input, shape index: {}]
  %s8 = inlined_call_operand.vmem [shape: f32[1,40], index: 8, kind: input, shape index: {}]
  %s9 = inlined_call_operand.vmem [shape: f32[40,5], index: 9, kind: input, shape index: {}]
  %s10 = inlined_call_operand.vmem [shape: f32[1,5], index: 10, kind: input, shape index: {}]
  %s11 = inlined_call_operand.hbm [shape: f32[2,1,5], index: 11, kind: output, shape index: {}]
  %s12 = sld [smem:[#allocation0]]
  $region77: #{net_forward.1} parent=0
    _
  %s14 = ssub.s32 1, %s12
  %s15 = scalar_select 0, %s14, %s12
  $region1: #{net_forward.1} parent=0
    #allocation5 [shape = 'u8[1024]{0}', space=vmem, size = 0x400, scoped, tag = 'output window, operand 0']
    #allocation6 [shape = 's32[2]{0}', space=sflag, size = 0x8, scoped, tag = 'scoped memory for net_forward.1']
    %16 = vsyncpa [#allocation6], 0
    %s17 = scalar_lea.sflag [#allocation6], 1
    %18 = vsyncpa %s17, 0
    loop: start=0, step=1, limit=4
    $region2: #{net_forward.1} parent=1 // loop_pre_header
      _
    $region3: #{net_forward.1} parent=1 // loop_header
      %s20 = sphi 0, %s24
      %p21 = scmp.ge.s32.totalorder %s20, 4
      %s30 = sphi 0, %s32
      %s33 = sphi 0, %s30
      %s34 = sphi 0, %s33
      %s50 = sphi 0, %s34
      %s54 = sphi 0, %s54
      %s56 = sphi 0, %s54
      %s57 = sphi 0, %s56
      %s71 = sphi 0, %s57
      %s75 = sphi 0, %s75
      %s77 = sphi 0, %s75
      %s78 = sphi 0, %s77
      %s92 = sphi 0, %s78
      %s96 = sphi 0, %s96
      %s98 = sphi 0, %s96
      %s99 = sphi 0, %s98
      %s113 = sphi 0, %s99
      %s117 = sphi 0, %s117
      %s119 = sphi 0, %s117
      %s120 = sphi 0, %s119
      %s134 = sphi 0, %s120
      %s138 = sphi 0, %s138
      %s140 = sphi 0, %s138
      %s141 = sphi 0, %s140
      %s155 = sphi 0, %s141
      %s159 = sphi 0, %s159
      %s161 = sphi 0, %s159
      %s162 = sphi 0, %s161
      %s176 = sphi 0, %s162
      %s180 = sphi 0, %s180
      %s182 = sphi 0, %s180
      %s183 = sphi 0, %s182
      %s197 = sphi 0, %s183
      %s201 = sphi 0, %s201
      %s203 = sphi 0, %s201
      %s204 = sphi 0, %s203
      %s218 = sphi 0, %s204
      %s222 = sphi 0, %s222
      %s224 = sphi 0, %s222
      %s225 = sphi 0, %s224
      %s239 = sphi 0, %s225
      %s243 = sphi 0, %s243
      %s245 = sphi 0, %s243
      %s246 = sphi 0, %s245
      %s260 = sphi 0, %s246
      %s266 = sphi 0, %s268
      %s269 = sphi 0, %s266
      %s270 = sphi 0, %s269
      %s286 = sphi 0, %s270
    $region4: #{net_forward.1} parent=1 // loop_header_branch
      %23 = sbr.rel (%p21) target = $region8
    $region5: #{net_forward.1} parent=1 // loop_body
      %s25 = ssub.s32 %s20, 1
      %s26 = ssub.s32 %s20, 2
      %s27 = sadd.s32 %s20, 1
      %s28 = ssub.s32 %s20, %s27
      %p29 = scmp.eq.s32.totalorder %s28, 0
      %s31 = sadd.s32 %s30, 1
      %s32 = scalar_select %p29, %s30, %s31
      %p35 = pneg %p29
      %p36 = scmp.eq.s32.totalorder %s20, 1
      %p37 = por %p35, %p36
      %p38 = scmp.ne.s32.totalorder %s30, %s33
      %p39 = scmp.eq.s32.totalorder %s20, 0
      %p40 = por %p38, %p39
      %p41 = scmp.ne.s32.totalorder %s30, %s33
      %p42 = scmp.eq.s32.totalorder %s25, 1
      %p43 = por %p41, %p42
      %p44 = scmp.ne.s32.totalorder %s33, %s34
      %p45 = scmp.eq.s32.totalorder %s25, 0
      %p46 = por %p44, %p45
      %p47 = scmp.ne.s32.totalorder %s33, %s34
      %p48 = scmp.eq.s32.totalorder %s26, 1
      %p49 = por %p47, %p48
      %p51 = scmp.ne.s32.totalorder %s34, %s50
      %p52 = scmp.eq.s32.totalorder %s26, 0
      %p53 = por %p51, %p52
      %s55 = sadd.s32 %s54, 1
      %p58 = scmp.eq.s32.totalorder %s20, 1
      %p59 = scmp.ne.s32.totalorder %s54, %s56
      %p60 = scmp.eq.s32.totalorder %s20, 0
      %p61 = por %p59, %p60
      %p62 = scmp.ne.s32.totalorder %s54, %s56
      %p63 = scmp.eq.s32.totalorder %s25, 1
      %p64 = por %p62, %p63
      %p65 = scmp.ne.s32.totalorder %s56, %s57
      %p66 = scmp.eq.s32.totalorder %s25, 0
      %p67 = por %p65, %p66
      %p68 = scmp.ne.s32.totalorder %s56, %s57
      %p69 = scmp.eq.s32.totalorder %s26, 1
      %p70 = por %p68, %p69
      %p72 = scmp.ne.s32.totalorder %s57, %s71
      %p73 = scmp.eq.s32.totalorder %s26, 0
      %p74 = por %p72, %p73
      %s76 = sadd.s32 %s75, 1
      %p79 = scmp.eq.s32.totalorder %s20, 1
      %p80 = scmp.ne.s32.totalorder %s75, %s77
      %p81 = scmp.eq.s32.totalorder %s20, 0
      %p82 = por %p80, %p81
      %p83 = scmp.ne.s32.totalorder %s75, %s77
      %p84 = scmp.eq.s32.totalorder %s25, 1
      %p85 = por %p83, %p84
      %p86 = scmp.ne.s32.totalorder %s77, %s78
      %p87 = scmp.eq.s32.totalorder %s25, 0
      %p88 = por %p86, %p87
      %p89 = scmp.ne.s32.totalorder %s77, %s78
      %p90 = scmp.eq.s32.totalorder %s26, 1
      %p91 = por %p89, %p90
      %p93 = scmp.ne.s32.totalorder %s78, %s92
      %p94 = scmp.eq.s32.totalorder %s26, 0
      %p95 = por %p93, %p94
      %s97 = sadd.s32 %s96, 1
      %p100 = scmp.eq.s32.totalorder %s20, 1
      %p101 = scmp.ne.s32.totalorder %s96, %s98
      %p102 = scmp.eq.s32.totalorder %s20, 0
      %p103 = por %p101, %p102
      %p104 = scmp.ne.s32.totalorder %s96, %s98
      %p105 = scmp.eq.s32.totalorder %s25, 1
      %p106 = por %p104, %p105
      %p107 = scmp.ne.s32.totalorder %s98, %s99
      %p108 = scmp.eq.s32.totalorder %s25, 0
      %p109 = por %p107, %p108
      %p110 = scmp.ne.s32.totalorder %s98, %s99
      %p111 = scmp.eq.s32.totalorder %s26, 1
      %p112 = por %p110, %p111
      %p114 = scmp.ne.s32.totalorder %s99, %s113
      %p115 = scmp.eq.s32.totalorder %s26, 0
      %p116 = por %p114, %p115
      %s118 = sadd.s32 %s117, 1
      %p121 = scmp.eq.s32.totalorder %s20, 1
      %p122 = scmp.ne.s32.totalorder %s117, %s119
      %p123 = scmp.eq.s32.totalorder %s20, 0
      %p124 = por %p122, %p123
      %p125 = scmp.ne.s32.totalorder %s117, %s119
      %p126 = scmp.eq.s32.totalorder %s25, 1
      %p127 = por %p125, %p126
      %p128 = scmp.ne.s32.totalorder %s119, %s120
      %p129 = scmp.eq.s32.totalorder %s25, 0
      %p130 = por %p128, %p129
      %p131 = scmp.ne.s32.totalorder %s119, %s120
      %p132 = scmp.eq.s32.totalorder %s26, 1
      %p133 = por %p131, %p132
      %p135 = scmp.ne.s32.totalorder %s120, %s134
      %p136 = scmp.eq.s32.totalorder %s26, 0
      %p137 = por %p135, %p136
      %s139 = sadd.s32 %s138, 1
      %p142 = scmp.eq.s32.totalorder %s20, 1
      %p143 = scmp.ne.s32.totalorder %s138, %s140
      %p144 = scmp.eq.s32.totalorder %s20, 0
      %p145 = por %p143, %p144
      %p146 = scmp.ne.s32.totalorder %s138, %s140
      %p147 = scmp.eq.s32.totalorder %s25, 1
      %p148 = por %p146, %p147
      %p149 = scmp.ne.s32.totalorder %s140, %s141
      %p150 = scmp.eq.s32.totalorder %s25, 0
      %p151 = por %p149, %p150
      %p152 = scmp.ne.s32.totalorder %s140, %s141
      %p153 = scmp.eq.s32.totalorder %s26, 1
      %p154 = por %p152, %p153
      %p156 = scmp.ne.s32.totalorder %s141, %s155
      %p157 = scmp.eq.s32.totalorder %s26, 0
      %p158 = por %p156, %p157
      %s160 = sadd.s32 %s159, 1
      %p163 = scmp.eq.s32.totalorder %s20, 1
      %p164 = scmp.ne.s32.totalorder %s159, %s161
      %p165 = scmp.eq.s32.totalorder %s20, 0
      %p166 = por %p164, %p165
      %p167 = scmp.ne.s32.totalorder %s159, %s161
      %p168 = scmp.eq.s32.totalorder %s25, 1
      %p169 = por %p167, %p168
      %p170 = scmp.ne.s32.totalorder %s161, %s162
      %p171 = scmp.eq.s32.totalorder %s25, 0
      %p172 = por %p170, %p171
      %p173 = scmp.ne.s32.totalorder %s161, %s162
      %p174 = scmp.eq.s32.totalorder %s26, 1
      %p175 = por %p173, %p174
      %p177 = scmp.ne.s32.totalorder %s162, %s176
      %p178 = scmp.eq.s32.totalorder %s26, 0
      %p179 = por %p177, %p178
      %s181 = sadd.s32 %s180, 1
      %p184 = scmp.eq.s32.totalorder %s20, 1
      %p185 = scmp.ne.s32.totalorder %s180, %s182
      %p186 = scmp.eq.s32.totalorder %s20, 0
      %p187 = por %p185, %p186
      %p188 = scmp.ne.s32.totalorder %s180, %s182
      %p189 = scmp.eq.s32.totalorder %s25, 1
      %p190 = por %p188, %p189
      %p191 = scmp.ne.s32.totalorder %s182, %s183
      %p192 = scmp.eq.s32.totalorder %s25, 0
      %p193 = por %p191, %p192
      %p194 = scmp.ne.s32.totalorder %s182, %s183
      %p195 = scmp.eq.s32.totalorder %s26, 1
      %p196 = por %p194, %p195
      %p198 = scmp.ne.s32.totalorder %s183, %s197
      %p199 = scmp.eq.s32.totalorder %s26, 0
      %p200 = por %p198, %p199
      %s202 = sadd.s32 %s201, 1
      %p205 = scmp.eq.s32.totalorder %s20, 1
      %p206 = scmp.ne.s32.totalorder %s201, %s203
      %p207 = scmp.eq.s32.totalorder %s20, 0
      %p208 = por %p206, %p207
      %p209 = scmp.ne.s32.totalorder %s201, %s203
      %p210 = scmp.eq.s32.totalorder %s25, 1
      %p211 = por %p209, %p210
      %p212 = scmp.ne.s32.totalorder %s203, %s204
      %p213 = scmp.eq.s32.totalorder %s25, 0
      %p214 = por %p212, %p213
      %p215 = scmp.ne.s32.totalorder %s203, %s204
      %p216 = scmp.eq.s32.totalorder %s26, 1
      %p217 = por %p215, %p216
      %p219 = scmp.ne.s32.totalorder %s204, %s218
      %p220 = scmp.eq.s32.totalorder %s26, 0
      %p221 = por %p219, %p220
      %s223 = sadd.s32 %s222, 1
      %p226 = scmp.eq.s32.totalorder %s20, 1
      %p227 = scmp.ne.s32.totalorder %s222, %s224
      %p228 = scmp.eq.s32.totalorder %s20, 0
      %p229 = por %p227, %p228
      %p230 = scmp.ne.s32.totalorder %s222, %s224
      %p231 = scmp.eq.s32.totalorder %s25, 1
      %p232 = por %p230, %p231
      %p233 = scmp.ne.s32.totalorder %s224, %s225
      %p234 = scmp.eq.s32.totalorder %s25, 0
      %p235 = por %p233, %p234
      %p236 = scmp.ne.s32.totalorder %s224, %s225
      %p237 = scmp.eq.s32.totalorder %s26, 1
      %p238 = por %p236, %p237
      %p240 = scmp.ne.s32.totalorder %s225, %s239
      %p241 = scmp.eq.s32.totalorder %s26, 0
      %p242 = por %p240, %p241
      %s244 = sadd.s32 %s243, 1
      %p247 = scmp.eq.s32.totalorder %s20, 1
      %p248 = scmp.ne.s32.totalorder %s243, %s245
      %p249 = scmp.eq.s32.totalorder %s20, 0
      %p250 = por %p248, %p249
      %p251 = scmp.ne.s32.totalorder %s243, %s245
      %p252 = scmp.eq.s32.totalorder %s25, 1
      %p253 = por %p251, %p252
      %p254 = scmp.ne.s32.totalorder %s245, %s246
      %p255 = scmp.eq.s32.totalorder %s25, 0
      %p256 = por %p254, %p255
      %p257 = scmp.ne.s32.totalorder %s245, %s246
      %p258 = scmp.eq.s32.totalorder %s26, 1
      %p259 = por %p257, %p258
      %p261 = scmp.ne.s32.totalorder %s246, %s260
      %p262 = scmp.eq.s32.totalorder %s26, 0
      %p263 = por %p261, %p262
      %s264 = ssub.s32 %s20, %s27
      %p265 = scmp.eq.s32.totalorder %s264, 0
      %s267 = sadd.s32 %s266, 1
      %s268 = scalar_select %p265, %s266, %s267
      %p271 = pneg %p265
      %p272 = scmp.eq.s32.totalorder %s20, 1
      %p273 = por %p271, %p272
      %p274 = scmp.ne.s32.totalorder %s266, %s269
      %p275 = scmp.eq.s32.totalorder %s20, 0
      %p276 = por %p274, %p275
      %p277 = scmp.ne.s32.totalorder %s266, %s269
      %p278 = scmp.eq.s32.totalorder %s25, 1
      %p279 = por %p277, %p278
      %p280 = scmp.ne.s32.totalorder %s269, %s270
      %p281 = scmp.eq.s32.totalorder %s25, 0
      %p282 = por %p280, %p281
      %p283 = scmp.ne.s32.totalorder %s269, %s270
      %p284 = scmp.eq.s32.totalorder %s26, 1
      %p285 = por %p283, %p284
      %p287 = scmp.ne.s32.totalorder %s270, %s286
      %p288 = scmp.eq.s32.totalorder %s26, 0
      %p289 = por %p287, %p288
      %p290 = scmp.le.s32.totalorder 1, %s20
      %p291 = scmp.lt.s32.totalorder %s20, 3
      %p292 = pnand %p290, %p291
      %p293 = pneg %p292
      // Predicated region
      $region9: #{net_forward.1} parent=5 // pred_check
        _
      $region10: #{net_forward.1} parent=5 // pred_check_branch
        %295 = sbr.rel (%p292) target = $region12
      $region11: #{net_forward.1} parent=5 // pred_region
        %s296 = ssub.s32 %s20, 1
        // Predicated region
        $region13: #{net_forward.1} parent=11 // pred_check
          %p297 = pneg %p67
        $region14: #{net_forward.1} parent=11 // pred_check_branch
          %299 = sbr.rel (%p297) target = $region16
        $region15: #{net_forward.1} parent=11 // pred_region
          _
        $region16: #{net_forward.1} parent=11 // pred_fallthru
          _
        // Predicated region
        $region17: #{net_forward.1} parent=11 // pred_check
          %p300 = pneg %p88
        $region18: #{net_forward.1} parent=11 // pred_check_branch
          %302 = sbr.rel (%p300) target = $region20
        $region19: #{net_forward.1} parent=11 // pred_region
          _
        $region20: #{net_forward.1} parent=11 // pred_fallthru
          _
        // Predicated region
        $region21: #{net_forward.1} parent=11 // pred_check
          %p303 = pneg %p109
        $region22: #{net_forward.1} parent=11 // pred_check_branch
          %305 = sbr.rel (%p303) target = $region24
        $region23: #{net_forward.1} parent=11 // pred_region
          _
        $region24: #{net_forward.1} parent=11 // pred_fallthru
          _
        // Predicated region
        $region25: #{net_forward.1} parent=11 // pred_check
          %p306 = pneg %p130
        $region26: #{net_forward.1} parent=11 // pred_check_branch
          %308 = sbr.rel (%p306) target = $region28
        $region27: #{net_forward.1} parent=11 // pred_region
          _
        $region28: #{net_forward.1} parent=11 // pred_fallthru
          _
        // Predicated region
        $region29: #{net_forward.1} parent=11 // pred_check
          %p309 = pneg %p151
        $region30: #{net_forward.1} parent=11 // pred_check_branch
          %311 = sbr.rel (%p309) target = $region32
        $region31: #{net_forward.1} parent=11 // pred_region
          _
        $region32: #{net_forward.1} parent=11 // pred_fallthru
          _
        // Predicated region
        $region33: #{net_forward.1} parent=11 // pred_check
          %p312 = pneg %p172
        $region34: #{net_forward.1} parent=11 // pred_check_branch
          %314 = sbr.rel (%p312) target = $region36
        $region35: #{net_forward.1} parent=11 // pred_region
          _
        $region36: #{net_forward.1} parent=11 // pred_fallthru
          _
        // Predicated region
        $region37: #{net_forward.1} parent=11 // pred_check
          %p315 = pneg %p193
        $region38: #{net_forward.1} parent=11 // pred_check_branch
          %317 = sbr.rel (%p315) target = $region40
        $region39: #{net_forward.1} parent=11 // pred_region
          _
        $region40: #{net_forward.1} parent=11 // pred_fallthru
          _
        // Predicated region
        $region41: #{net_forward.1} parent=11 // pred_check
          %p318 = pneg %p214
        $region42: #{net_forward.1} parent=11 // pred_check_branch
          %320 = sbr.rel (%p318) target = $region44
        $region43: #{net_forward.1} parent=11 // pred_region
          _
        $region44: #{net_forward.1} parent=11 // pred_fallthru
          _
        // Predicated region
        $region45: #{net_forward.1} parent=11 // pred_check
          %p321 = pneg %p235
        $region46: #{net_forward.1} parent=11 // pred_check_branch
          %323 = sbr.rel (%p321) target = $region48
        $region47: #{net_forward.1} parent=11 // pred_region
          _
        $region48: #{net_forward.1} parent=11 // pred_fallthru
          _
        // Predicated region
        $region49: #{net_forward.1} parent=11 // pred_check
          %p324 = pneg %p256
        $region50: #{net_forward.1} parent=11 // pred_check_branch
          %326 = sbr.rel (%p324) target = $region52
        $region51: #{net_forward.1} parent=11 // pred_region
          _
        $region52: #{net_forward.1} parent=11 // pred_fallthru
          _
      $region12: #{net_forward.1} parent=5 // pred_fallthru
        _
      %p327 = scmp.lt.s32.totalorder %s20, 2
      // Predicated region
      $region53: #{net_forward.1} parent=5 // pred_check
        %p328 = pneg %p327
      $region54: #{net_forward.1} parent=5 // pred_check_branch
        %330 = sbr.rel (%p328) target = $region56
      $region55: #{net_forward.1} parent=5 // pred_region
        // Predicated region
        $region57: #{net_forward.1} parent=55 // pred_check
          %p331 = pneg %p40
        $region58: #{net_forward.1} parent=55 // pred_check_branch
          %333 = sbr.rel (%p331) target = $region60
        $region59: #{net_forward.1} parent=55 // pred_region
          %p334 = scmp.lt.s32.totalorder %s20, 1
          %s335 = scalar_select %p334, %s20, 1
          %s336 = smul.addr %s335, 30
          %s337 = smul.addr %s336, 8
          %s338 = scalar_lea.vmem %s0, %s337
        $region60: #{net_forward.1} parent=55 // pred_fallthru
          _
      $region56: #{net_forward.1} parent=5 // pred_fallthru
        _
      %p339 = scmp.le.s32.totalorder 1, %s20
      %p340 = scmp.lt.s32.totalorder %s20, 3
      %p341 = pnand %p339, %p340
      %p342 = pneg %p341
      // Predicated region
      $region61: #{net_forward.1} parent=5 // pred_check
        _
      $region62: #{net_forward.1} parent=5 // pred_check_branch
        %344 = sbr.rel (%p341) target = $region64
      $region63: #{net_forward.1} parent=5 // pred_region
        %s345 = ssub.s32 %s20, 1
        %p346 = scmp.lt.s32.totalorder %s25, 1
        %s347 = scalar_select %p346, %s25, 1
        %s348 = smul.addr %s347, 30
        %s349 = smul.addr %s348, 8
        %s350 = scalar_lea.vmem %s0, %s349
        %p351 = pneg %p46
        %p352 = pneg %p43
        %p353 = pneg %p67
        %p354 = pneg %p64
        %p355 = pneg %p88
        %p356 = pneg %p85
        %p357 = pneg %p109
        %p358 = pneg %p106
        %p359 = pneg %p130
        %p360 = pneg %p127
        %p361 = pneg %p151
        %p362 = pneg %p148
        %p363 = pneg %p172
        %p364 = pneg %p169
        %p365 = pneg %p193
        %p366 = pneg %p190
        %p367 = pneg %p214
        %p368 = pneg %p211
        %p369 = pneg %p235
        %p370 = pneg %p232
        %p371 = pneg %p256
        %p372 = pneg %p253
        %p373 = pneg %p282
        %p374 = pneg %p279
        %s375 = sand.u32 %s269, 1
        %s376 = scalar_lea.sflag [#allocation6], %s375
        %s377 = sand.u32 %s269, 1
        %s378 = scalar_lea.vmem [#allocation5], %s377
        %p379 = scmp.lt.s32.totalorder %s25, 1
        %s380 = scalar_select %p379, %s25, 1
        %s381 = smul.addr %s380, 30
        %s382 = smul.addr %s381, 8
        %s383 = scalar_lea.vmem %s0, %s382
        %v384 = vld [vmem:[%s383] sm:$0xff]
        %v385 = vld [vmem:[%s383 + $0x8] sm:$0xff]
        %v386 = vld [vmem:[%s383 + $0x10] sm:$0xff]
        %v387 = vld [vmem:[%s383 + $0x18] sm:$0xff]
        %v388 = vld [vmem:[%s383 + $0x20] sm:$0xff]
        %v389 = vld [vmem:[%s383 + $0x28] sm:$0xff]
        %v390 = vld [vmem:[%s383 + $0x30] sm:$0xff]
        %v391 = vld [vmem:[%s383 + $0x38] sm:$0xff]
        %v392 = vld [vmem:[%s383 + $0x40] sm:$0xff]
        %v393 = vld [vmem:[%s383 + $0x48] sm:$0xff]
        %v394 = vld [vmem:[%s383 + $0x50] sm:$0xff]
        %v395 = vld [vmem:[%s383 + $0x58] sm:$0xff]
        %v396 = vld [vmem:[%s383 + $0x60] sm:$0xff]
        %v397 = vld [vmem:[%s383 + $0x68] sm:$0xff]
        %v398 = vld [vmem:[%s383 + $0x70] sm:$0xff]
        %v399 = vld [vmem:[%s383 + $0x78] sm:$0xff]
        %v400 = vld [vmem:[%s383 + $0x80] sm:$0xff]
        %v401 = vld [vmem:[%s383 + $0x88] sm:$0xff]
        %v402 = vld [vmem:[%s383 + $0x90] sm:$0xff]
        %v403 = vld [vmem:[%s383 + $0x98] sm:$0xff]
        %v404 = vld [vmem:[%s383 + $0xa0] sm:$0xff]
        %v405 = vld [vmem:[%s383 + $0xa8] sm:$0xff]
        %v406 = vld [vmem:[%s383 + $0xb0] sm:$0xff]
        %v407 = vld [vmem:[%s383 + $0xb8] sm:$0xff]
        %v408 = vld [vmem:[%s383 + $0xc0] sm:$0xff]
        %v409 = vld [vmem:[%s383 + $0xc8] sm:$0xff]
        %v410 = vld [vmem:[%s383 + $0xd0] sm:$0xff]
        %v411 = vld [vmem:[%s383 + $0xd8] sm:$0xff]
        %v412 = vld [vmem:[%s383 + $0xe0] sm:$0xff]
        %v413 = vld [vmem:[%s383 + $0xe8] sm:$0xff]
        %v414 = vld [vmem:[%s1] sm:$0x1]
        %v416 = vlaneseq
        %v417 = vshrl.u32 %v416, 7
        %v418 = vsub.s32 0, %v417
        %v419 = vrot.slane %v414, %v418
        %v421 = vmul.f32 %v384, %v419
        %v422 = vmul.f32 %v385, %v419
        %v423 = vmul.f32 %v386, %v419
        %v424 = vmul.f32 %v387, %v419
        %v425 = vmul.f32 %v388, %v419
        %v426 = vmul.f32 %v389, %v419
        %v427 = vmul.f32 %v390, %v419
        %v428 = vmul.f32 %v391, %v419
        %v429 = vmul.f32 %v392, %v419
        %v430 = vmul.f32 %v393, %v419
        %v431 = vmul.f32 %v394, %v419
        %v432 = vmul.f32 %v395, %v419
        %v433 = vmul.f32 %v396, %v419
        %v434 = vmul.f32 %v397, %v419
        %v435 = vmul.f32 %v398, %v419
        %v436 = vmul.f32 %v399, %v419
        %v437 = vmul.f32 %v400, %v419
        %v438 = vmul.f32 %v401, %v419
        %v439 = vmul.f32 %v402, %v419
        %v440 = vmul.f32 %v403, %v419
        %v441 = vmul.f32 %v404, %v419
        %v442 = vmul.f32 %v405, %v419
        %v443 = vmul.f32 %v406, %v419
        %v444 = vmul.f32 %v407, %v419
        %v445 = vmul.f32 %v408, %v419
        %v446 = vmul.f32 %v409, %v419
        %v447 = vmul.f32 %v410, %v419
        %v448 = vmul.f32 %v411, %v419
        %v449 = vmul.f32 %v412, %v419
        %v450 = vmul.f32 %v413, %v419
        %v451 = vld [vmem:[%s2] sm:$0x1]
        %v453 = vlaneseq
        %v454 = vshrl.u32 %v453, 7
        %v455 = vsub.s32 0, %v454
        %v456 = vrot.slane %v451, %v455
        %v458 = vadd.f32 %v421, %v456
        %v459 = vadd.f32 %v422, %v456
        %v460 = vadd.f32 %v423, %v456
        %v461 = vadd.f32 %v424, %v456
        %v462 = vadd.f32 %v425, %v456
        %v463 = vadd.f32 %v426, %v456
        %v464 = vadd.f32 %v427, %v456
        %v465 = vadd.f32 %v428, %v456
        %v466 = vadd.f32 %v429, %v456
        %v467 = vadd.f32 %v430, %v456
        %v468 = vadd.f32 %v431, %v456
        %v469 = vadd.f32 %v432, %v456
        %v470 = vadd.f32 %v433, %v456
        %v471 = vadd.f32 %v434, %v456
        %v472 = vadd.f32 %v435, %v456
        %v473 = vadd.f32 %v436, %v456
        %v474 = vadd.f32 %v437, %v456
        %v475 = vadd.f32 %v438, %v456
        %v476 = vadd.f32 %v439, %v456
        %v477 = vadd.f32 %v440, %v456
        %v478 = vadd.f32 %v441, %v456
        %v479 = vadd.f32 %v442, %v456
        %v480 = vadd.f32 %v443, %v456
        %v481 = vadd.f32 %v444, %v456
        %v482 = vadd.f32 %v445, %v456
        %v483 = vadd.f32 %v446, %v456
        %v484 = vadd.f32 %v447, %v456
        %v485 = vadd.f32 %v448, %v456
        %v486 = vadd.f32 %v449, %v456
        %v487 = vadd.f32 %v450, %v456
        %vm518 = vcmask 1046528
        %v519 = vrot.slane %v458, 1
        %v520 = vrot.slane %v459, 1
        %v521 = vsel %vm518, %v519, %v520
        %v522 = vrot.slane %v460, 1
        %v523 = vsel %vm518, %v520, %v522
        %v524 = vrot.slane %v461, 1
        %v525 = vsel %vm518, %v522, %v524
        %v526 = vrot.slane %v462, 1
        %v527 = vsel %vm518, %v524, %v526
        %v528 = vrot.slane %v463, 1
        %v529 = vsel %vm518, %v526, %v528
        %v530 = vrot.slane %v464, 1
        %v531 = vsel %vm518, %v528, %v530
        %v532 = vrot.slane %v465, 1
        %v533 = vsel %vm518, %v530, %v532
        %v534 = vrot.slane %v466, 1
        %v535 = vsel %vm518, %v532, %v534
        %v536 = vrot.slane %v467, 1
        %v537 = vsel %vm518, %v534, %v536
        %v538 = vrot.slane %v468, 1
        %v539 = vsel %vm518, %v536, %v538
        %v540 = vrot.slane %v469, 1
        %v541 = vsel %vm518, %v538, %v540
        %v542 = vrot.slane %v470, 1
        %v543 = vsel %vm518, %v540, %v542
        %v544 = vrot.slane %v471, 1
        %v545 = vsel %vm518, %v542, %v544
        %v546 = vrot.slane %v472, 1
        %v547 = vsel %vm518, %v544, %v546
        %v548 = vrot.slane %v473, 1
        %v549 = vsel %vm518, %v546, %v548
        %v550 = vrot.slane %v474, 1
        %v551 = vsel %vm518, %v548, %v550
        %v552 = vrot.slane %v475, 1
        %v553 = vsel %vm518, %v550, %v552
        %v554 = vrot.slane %v476, 1
        %v555 = vsel %vm518, %v552, %v554
        %v556 = vrot.slane %v477, 1
        %v557 = vsel %vm518, %v554, %v556
        %v558 = vrot.slane %v478, 1
        %v559 = vsel %vm518, %v556, %v558
        %v560 = vrot.slane %v479, 1
        %v561 = vsel %vm518, %v558, %v560
        %v562 = vrot.slane %v480, 1
        %v563 = vsel %vm518, %v560, %v562
        %v564 = vrot.slane %v481, 1
        %v565 = vsel %vm518, %v562, %v564
        %v566 = vrot.slane %v482, 1
        %v567 = vsel %vm518, %v564, %v566
        %v568 = vrot.slane %v483, 1
        %v569 = vsel %vm518, %v566, %v568
        %v570 = vrot.slane %v484, 1
        %v571 = vsel %vm518, %v568, %v570
        %v572 = vrot.slane %v485, 1
        %v573 = vsel %vm518, %v570, %v572
        %v574 = vrot.slane %v486, 1
        %v575 = vsel %vm518, %v572, %v574
        %v576 = vrot.slane %v487, 1
        %v577 = vsel %vm518, %v574, %v576
        %578 = vrot.lane.b32.xlu0 %v521, 4
        %v579 = vpop.permute.xlu0 %578
        %580 = vrot.lane.b32.xlu0 %v523, 4
        %v581 = vpop.permute.xlu0 %580
        %582 = vrot.lane.b32.xlu0 %v525, 4
        %v583 = vpop.permute.xlu0 %582
        %584 = vrot.lane.b32.xlu0 %v527, 4
        %v585 = vpop.permute.xlu0 %584
        %586 = vrot.lane.b32.xlu0 %v529, 4
        %v587 = vpop.permute.xlu0 %586
        %588 = vrot.lane.b32.xlu0 %v531, 4
        %v589 = vpop.permute.xlu0 %588
        %590 = vrot.lane.b32.xlu0 %v533, 4
        %v591 = vpop.permute.xlu0 %590
        %592 = vrot.lane.b32.xlu0 %v535, 4
        %v593 = vpop.permute.xlu0 %592
        %594 = vrot.lane.b32.xlu0 %v537, 4
        %v595 = vpop.permute.xlu0 %594
        %596 = vrot.lane.b32.xlu0 %v539, 4
        %v597 = vpop.permute.xlu0 %596
        %598 = vrot.lane.b32.xlu0 %v541, 4
        %v599 = vpop.permute.xlu0 %598
        %600 = vrot.lane.b32.xlu0 %v543, 4
        %v601 = vpop.permute.xlu0 %600
        %602 = vrot.lane.b32.xlu0 %v545, 4
        %v603 = vpop.permute.xlu0 %602
        %604 = vrot.lane.b32.xlu0 %v547, 4
        %v605 = vpop.permute.xlu0 %604
        %606 = vrot.lane.b32.xlu0 %v549, 4
        %v607 = vpop.permute.xlu0 %606
        %608 = vrot.lane.b32.xlu0 %v551, 4
        %v609 = vpop.permute.xlu0 %608
        %610 = vrot.lane.b32.xlu0 %v553, 4
        %v611 = vpop.permute.xlu0 %610
        %612 = vrot.lane.b32.xlu0 %v555, 4
        %v613 = vpop.permute.xlu0 %612
        %614 = vrot.lane.b32.xlu0 %v557, 4
        %v615 = vpop.permute.xlu0 %614
        %616 = vrot.lane.b32.xlu0 %v559, 4
        %v617 = vpop.permute.xlu0 %616
        %618 = vrot.lane.b32.xlu0 %v561, 4
        %v619 = vpop.permute.xlu0 %618
        %620 = vrot.lane.b32.xlu0 %v563, 4
        %v621 = vpop.permute.xlu0 %620
        %622 = vrot.lane.b32.xlu0 %v565, 4
        %v623 = vpop.permute.xlu0 %622
        %624 = vrot.lane.b32.xlu0 %v567, 4
        %v625 = vpop.permute.xlu0 %624
        %626 = vrot.lane.b32.xlu0 %v569, 4
        %v627 = vpop.permute.xlu0 %626
        %628 = vrot.lane.b32.xlu0 %v571, 4
        %v629 = vpop.permute.xlu0 %628
        %630 = vrot.lane.b32.xlu0 %v573, 4
        %v631 = vpop.permute.xlu0 %630
        %632 = vrot.lane.b32.xlu0 %v575, 4
        %v633 = vpop.permute.xlu0 %632
        %634 = vrot.lane.b32.xlu0 %v577, 4
        %v635 = vpop.permute.xlu0 %634
        %vm665 = vcmask 1045504
        %v666 = vrot.slane %v458, 2
        %v667 = vrot.slane %v459, 2
        %v668 = vsel %vm665, %v666, %v667
        %v669 = vrot.slane %v460, 2
        %v670 = vsel %vm665, %v667, %v669
        %v671 = vrot.slane %v461, 2
        %v672 = vsel %vm665, %v669, %v671
        %v673 = vrot.slane %v462, 2
        %v674 = vsel %vm665, %v671, %v673
        %v675 = vrot.slane %v463, 2
        %v676 = vsel %vm665, %v673, %v675
        %v677 = vrot.slane %v464, 2
        %v678 = vsel %vm665, %v675, %v677
        %v679 = vrot.slane %v465, 2
        %v680 = vsel %vm665, %v677, %v679
        %v681 = vrot.slane %v466, 2
        %v682 = vsel %vm665, %v679, %v681
        %v683 = vrot.slane %v467, 2
        %v684 = vsel %vm665, %v681, %v683
        %v685 = vrot.slane %v468, 2
        %v686 = vsel %vm665, %v683, %v685
        %v687 = vrot.slane %v469, 2
        %v688 = vsel %vm665, %v685, %v687
        %v689 = vrot.slane %v470, 2
        %v690 = vsel %vm665, %v687, %v689
        %v691 = vrot.slane %v471, 2
        %v692 = vsel %vm665, %v689, %v691
        %v693 = vrot.slane %v472, 2
        %v694 = vsel %vm665, %v691, %v693
        %v695 = vrot.slane %v473, 2
        %v696 = vsel %vm665, %v693, %v695
        %v697 = vrot.slane %v474, 2
        %v698 = vsel %vm665, %v695, %v697
        %v699 = vrot.slane %v475, 2
        %v700 = vsel %vm665, %v697, %v699
        %v701 = vrot.slane %v476, 2
        %v702 = vsel %vm665, %v699, %v701
        %v703 = vrot.slane %v477, 2
        %v704 = vsel %vm665, %v701, %v703
        %v705 = vrot.slane %v478, 2
        %v706 = vsel %vm665, %v703, %v705
        %v707 = vrot.slane %v479, 2
        %v708 = vsel %vm665, %v705, %v707
        %v709 = vrot.slane %v480, 2
        %v710 = vsel %vm665, %v707, %v709
        %v711 = vrot.slane %v481, 2
        %v712 = vsel %vm665, %v709, %v711
        %v713 = vrot.slane %v482, 2
        %v714 = vsel %vm665, %v711, %v713
        %v715 = vrot.slane %v483, 2
        %v716 = vsel %vm665, %v713, %v715
        %v717 = vrot.slane %v484, 2
        %v718 = vsel %vm665, %v715, %v717
        %v719 = vrot.slane %v485, 2
        %v720 = vsel %vm665, %v717, %v719
        %v721 = vrot.slane %v486, 2
        %v722 = vsel %vm665, %v719, %v721
        %v723 = vrot.slane %v487, 2
        %v724 = vsel %vm665, %v721, %v723
        %725 = vrot.lane.b32.xlu0 %v668, 8
        %v726 = vpop.permute.xlu0 %725
        %727 = vrot.lane.b32.xlu0 %v670, 8
        %v728 = vpop.permute.xlu0 %727
        %729 = vrot.lane.b32.xlu0 %v672, 8
        %v730 = vpop.permute.xlu0 %729
        %731 = vrot.lane.b32.xlu0 %v674, 8
        %v732 = vpop.permute.xlu0 %731
        %733 = vrot.lane.b32.xlu0 %v676, 8
        %v734 = vpop.permute.xlu0 %733
        %735 = vrot.lane.b32.xlu0 %v678, 8
        %v736 = vpop.permute.xlu0 %735
        %737 = vrot.lane.b32.xlu0 %v680, 8
        %v738 = vpop.permute.xlu0 %737
        %739 = vrot.lane.b32.xlu0 %v682, 8
        %v740 = vpop.permute.xlu0 %739
        %741 = vrot.lane.b32.xlu0 %v684, 8
        %v742 = vpop.permute.xlu0 %741
        %743 = vrot.lane.b32.xlu0 %v686, 8
        %v744 = vpop.permute.xlu0 %743
        %745 = vrot.lane.b32.xlu0 %v688, 8
        %v746 = vpop.permute.xlu0 %745
        %747 = vrot.lane.b32.xlu0 %v690, 8
        %v748 = vpop.permute.xlu0 %747
        %749 = vrot.lane.b32.xlu0 %v692, 8
        %v750 = vpop.permute.xlu0 %749
        %751 = vrot.lane.b32.xlu0 %v694, 8
        %v752 = vpop.permute.xlu0 %751
        %753 = vrot.lane.b32.xlu0 %v696, 8
        %v754 = vpop.permute.xlu0 %753
        %755 = vrot.lane.b32.xlu0 %v698, 8
        %v756 = vpop.permute.xlu0 %755
        %757 = vrot.lane.b32.xlu0 %v700, 8
        %v758 = vpop.permute.xlu0 %757
        %759 = vrot.lane.b32.xlu0 %v702, 8
        %v760 = vpop.permute.xlu0 %759
        %761 = vrot.lane.b32.xlu0 %v704, 8
        %v762 = vpop.permute.xlu0 %761
        %763 = vrot.lane.b32.xlu0 %v706, 8
        %v764 = vpop.permute.xlu0 %763
        %765 = vrot.lane.b32.xlu0 %v708, 8
        %v766 = vpop.permute.xlu0 %765
        %767 = vrot.lane.b32.xlu0 %v710, 8
        %v768 = vpop.permute.xlu0 %767
        %769 = vrot.lane.b32.xlu0 %v712, 8
        %v770 = vpop.permute.xlu0 %769
        %771 = vrot.lane.b32.xlu0 %v714, 8
        %v772 = vpop.permute.xlu0 %771
        %773 = vrot.lane.b32.xlu0 %v716, 8
        %v774 = vpop.permute.xlu0 %773
        %775 = vrot.lane.b32.xlu0 %v718, 8
        %v776 = vpop.permute.xlu0 %775
        %777 = vrot.lane.b32.xlu0 %v720, 8
        %v778 = vpop.permute.xlu0 %777
        %779 = vrot.lane.b32.xlu0 %v722, 8
        %v780 = vpop.permute.xlu0 %779
        %781 = vrot.lane.b32.xlu0 %v724, 8
        %v782 = vpop.permute.xlu0 %781
        %vm812 = vcmask 1044480
        %v813 = vrot.slane %v458, 3
        %v814 = vrot.slane %v459, 3
        %v815 = vsel %vm812, %v813, %v814
        %v816 = vrot.slane %v460, 3
        %v817 = vsel %vm812, %v814, %v816
        %v818 = vrot.slane %v461, 3
        %v819 = vsel %vm812, %v816, %v818
        %v820 = vrot.slane %v462, 3
        %v821 = vsel %vm812, %v818, %v820
        %v822 = vrot.slane %v463, 3
        %v823 = vsel %vm812, %v820, %v822
        %v824 = vrot.slane %v464, 3
        %v825 = vsel %vm812, %v822, %v824
        %v826 = vrot.slane %v465, 3
        %v827 = vsel %vm812, %v824, %v826
        %v828 = vrot.slane %v466, 3
        %v829 = vsel %vm812, %v826, %v828
        %v830 = vrot.slane %v467, 3
        %v831 = vsel %vm812, %v828, %v830
        %v832 = vrot.slane %v468, 3
        %v833 = vsel %vm812, %v830, %v832
        %v834 = vrot.slane %v469, 3
        %v835 = vsel %vm812, %v832, %v834
        %v836 = vrot.slane %v470, 3
        %v837 = vsel %vm812, %v834, %v836
        %v838 = vrot.slane %v471, 3
        %v839 = vsel %vm812, %v836, %v838
        %v840 = vrot.slane %v472, 3
        %v841 = vsel %vm812, %v838, %v840
        %v842 = vrot.slane %v473, 3
        %v843 = vsel %vm812, %v840, %v842
        %v844 = vrot.slane %v474, 3
        %v845 = vsel %vm812, %v842, %v844
        %v846 = vrot.slane %v475, 3
        %v847 = vsel %vm812, %v844, %v846
        %v848 = vrot.slane %v476, 3
        %v849 = vsel %vm812, %v846, %v848
        %v850 = vrot.slane %v477, 3
        %v851 = vsel %vm812, %v848, %v850
        %v852 = vrot.slane %v478, 3
        %v853 = vsel %vm812, %v850, %v852
        %v854 = vrot.slane %v479, 3
        %v855 = vsel %vm812, %v852, %v854
        %v856 = vrot.slane %v480, 3
        %v857 = vsel %vm812, %v854, %v856
        %v858 = vrot.slane %v481, 3
        %v859 = vsel %vm812, %v856, %v858
        %v860 = vrot.slane %v482, 3
        %v861 = vsel %vm812, %v858, %v860
        %v862 = vrot.slane %v483, 3
        %v863 = vsel %vm812, %v860, %v862
        %v864 = vrot.slane %v484, 3
        %v865 = vsel %vm812, %v862, %v864
        %v866 = vrot.slane %v485, 3
        %v867 = vsel %vm812, %v864, %v866
        %v868 = vrot.slane %v486, 3
        %v869 = vsel %vm812, %v866, %v868
        %v870 = vrot.slane %v487, 3
        %v871 = vsel %vm812, %v868, %v870
        %872 = vrot.lane.b32.xlu0 %v815, 12
        %v873 = vpop.permute.xlu0 %872
        %874 = vrot.lane.b32.xlu0 %v817, 12
        %v875 = vpop.permute.xlu0 %874
        %876 = vrot.lane.b32.xlu0 %v819, 12
        %v877 = vpop.permute.xlu0 %876
        %878 = vrot.lane.b32.xlu0 %v821, 12
        %v879 = vpop.permute.xlu0 %878
        %880 = vrot.lane.b32.xlu0 %v823, 12
        %v881 = vpop.permute.xlu0 %880
        %882 = vrot.lane.b32.xlu0 %v825, 12
        %v883 = vpop.permute.xlu0 %882
        %884 = vrot.lane.b32.xlu0 %v827, 12
        %v885 = vpop.permute.xlu0 %884
        %886 = vrot.lane.b32.xlu0 %v829, 12
        %v887 = vpop.permute.xlu0 %886
        %888 = vrot.lane.b32.xlu0 %v831, 12
        %v889 = vpop.permute.xlu0 %888
        %890 = vrot.lane.b32.xlu0 %v833, 12
        %v891 = vpop.permute.xlu0 %890
        %892 = vrot.lane.b32.xlu0 %v835, 12
        %v893 = vpop.permute.xlu0 %892
        %894 = vrot.lane.b32.xlu0 %v837, 12
        %v895 = vpop.permute.xlu0 %894
        %896 = vrot.lane.b32.xlu0 %v839, 12
        %v897 = vpop.permute.xlu0 %896
        %898 = vrot.lane.b32.xlu0 %v841, 12
        %v899 = vpop.permute.xlu0 %898
        %900 = vrot.lane.b32.xlu0 %v843, 12
        %v901 = vpop.permute.xlu0 %900
        %902 = vrot.lane.b32.xlu0 %v845, 12
        %v903 = vpop.permute.xlu0 %902
        %904 = vrot.lane.b32.xlu0 %v847, 12
        %v905 = vpop.permute.xlu0 %904
        %906 = vrot.lane.b32.xlu0 %v849, 12
        %v907 = vpop.permute.xlu0 %906
        %908 = vrot.lane.b32.xlu0 %v851, 12
        %v909 = vpop.permute.xlu0 %908
        %910 = vrot.lane.b32.xlu0 %v853, 12
        %v911 = vpop.permute.xlu0 %910
        %912 = vrot.lane.b32.xlu0 %v855, 12
        %v913 = vpop.permute.xlu0 %912
        %914 = vrot.lane.b32.xlu0 %v857, 12
        %v915 = vpop.permute.xlu0 %914
        %916 = vrot.lane.b32.xlu0 %v859, 12
        %v917 = vpop.permute.xlu0 %916
        %918 = vrot.lane.b32.xlu0 %v861, 12
        %v919 = vpop.permute.xlu0 %918
        %920 = vrot.lane.b32.xlu0 %v863, 12
        %v921 = vpop.permute.xlu0 %920
        %922 = vrot.lane.b32.xlu0 %v865, 12
        %v923 = vpop.permute.xlu0 %922
        %924 = vrot.lane.b32.xlu0 %v867, 12
        %v925 = vpop.permute.xlu0 %924
        %926 = vrot.lane.b32.xlu0 %v869, 12
        %v927 = vpop.permute.xlu0 %926
        %928 = vrot.lane.b32.xlu0 %v871, 12
        %v929 = vpop.permute.xlu0 %928
        %vm959 = vcmask 1043456
        %v960 = vrot.slane %v458, 4
        %v961 = vrot.slane %v459, 4
        %v962 = vsel %vm959, %v960, %v961
        %v963 = vrot.slane %v460, 4
        %v964 = vsel %vm959, %v961, %v963
        %v965 = vrot.slane %v461, 4
        %v966 = vsel %vm959, %v963, %v965
        %v967 = vrot.slane %v462, 4
        %v968 = vsel %vm959, %v965, %v967
        %v969 = vrot.slane %v463, 4
        %v970 = vsel %vm959, %v967, %v969
        %v971 = vrot.slane %v464, 4
        %v972 = vsel %vm959, %v969, %v971
        %v973 = vrot.slane %v465, 4
        %v974 = vsel %vm959, %v971, %v973
        %v975 = vrot.slane %v466, 4
        %v976 = vsel %vm959, %v973, %v975
        %v977 = vrot.slane %v467, 4
        %v978 = vsel %vm959, %v975, %v977
        %v979 = vrot.slane %v468, 4
        %v980 = vsel %vm959, %v977, %v979
        %v981 = vrot.slane %v469, 4
        %v982 = vsel %vm959, %v979, %v981
        %v983 = vrot.slane %v470, 4
        %v984 = vsel %vm959, %v981, %v983
        %v985 = vrot.slane %v471, 4
        %v986 = vsel %vm959, %v983, %v985
        %v987 = vrot.slane %v472, 4
        %v988 = vsel %vm959, %v985, %v987
        %v989 = vrot.slane %v473, 4
        %v990 = vsel %vm959, %v987, %v989
        %v991 = vrot.slane %v474, 4
        %v992 = vsel %vm959, %v989, %v991
        %v993 = vrot.slane %v475, 4
        %v994 = vsel %vm959, %v991, %v993
        %v995 = vrot.slane %v476, 4
        %v996 = vsel %vm959, %v993, %v995
        %v997 = vrot.slane %v477, 4
        %v998 = vsel %vm959, %v995, %v997
        %v999 = vrot.slane %v478, 4
        %v1000 = vsel %vm959, %v997, %v999
        %v1001 = vrot.slane %v479, 4
        %v1002 = vsel %vm959, %v999, %v1001
        %v1003 = vrot.slane %v480, 4
        %v1004 = vsel %vm959, %v1001, %v1003
        %v1005 = vrot.slane %v481, 4
        %v1006 = vsel %vm959, %v1003, %v1005
        %v1007 = vrot.slane %v482, 4
        %v1008 = vsel %vm959, %v1005, %v1007
        %v1009 = vrot.slane %v483, 4
        %v1010 = vsel %vm959, %v1007, %v1009
        %v1011 = vrot.slane %v484, 4
        %v1012 = vsel %vm959, %v1009, %v1011
        %v1013 = vrot.slane %v485, 4
        %v1014 = vsel %vm959, %v1011, %v1013
        %v1015 = vrot.slane %v486, 4
        %v1016 = vsel %vm959, %v1013, %v1015
        %v1017 = vrot.slane %v487, 4
        %v1018 = vsel %vm959, %v1015, %v1017
        %1019 = vrot.lane.b32.xlu0 %v962, 16
        %v1020 = vpop.permute.xlu0 %1019
        %1021 = vrot.lane.b32.xlu0 %v964, 16
        %v1022 = vpop.permute.xlu0 %1021
        %1023 = vrot.lane.b32.xlu0 %v966, 16
        %v1024 = vpop.permute.xlu0 %1023
        %1025 = vrot.lane.b32.xlu0 %v968, 16
        %v1026 = vpop.permute.xlu0 %1025
        %1027 = vrot.lane.b32.xlu0 %v970, 16
        %v1028 = vpop.permute.xlu0 %1027
        %1029 = vrot.lane.b32.xlu0 %v972, 16
        %v1030 = vpop.permute.xlu0 %1029
        %1031 = vrot.lane.b32.xlu0 %v974, 16
        %v1032 = vpop.permute.xlu0 %1031
        %1033 = vrot.lane.b32.xlu0 %v976, 16
        %v1034 = vpop.permute.xlu0 %1033
        %1035 = vrot.lane.b32.xlu0 %v978, 16
        %v1036 = vpop.permute.xlu0 %1035
        %1037 = vrot.lane.b32.xlu0 %v980, 16
        %v1038 = vpop.permute.xlu0 %1037
        %1039 = vrot.lane.b32.xlu0 %v982, 16
        %v1040 = vpop.permute.xlu0 %1039
        %1041 = vrot.lane.b32.xlu0 %v984, 16
        %v1042 = vpop.permute.xlu0 %1041
        %1043 = vrot.lane.b32.xlu0 %v986, 16
        %v1044 = vpop.permute.xlu0 %1043
        %1045 = vrot.lane.b32.xlu0 %v988, 16
        %v1046 = vpop.permute.xlu0 %1045
        %1047 = vrot.lane.b32.xlu0 %v990, 16
        %v1048 = vpop.permute.xlu0 %1047
        %1049 = vrot.lane.b32.xlu0 %v992, 16
        %v1050 = vpop.permute.xlu0 %1049
        %1051 = vrot.lane.b32.xlu0 %v994, 16
        %v1052 = vpop.permute.xlu0 %1051
        %1053 = vrot.lane.b32.xlu0 %v996, 16
        %v1054 = vpop.permute.xlu0 %1053
        %1055 = vrot.lane.b32.xlu0 %v998, 16
        %v1056 = vpop.permute.xlu0 %1055
        %1057 = vrot.lane.b32.xlu0 %v1000, 16
        %v1058 = vpop.permute.xlu0 %1057
        %1059 = vrot.lane.b32.xlu0 %v1002, 16
        %v1060 = vpop.permute.xlu0 %1059
        %1061 = vrot.lane.b32.xlu0 %v1004, 16
        %v1062 = vpop.permute.xlu0 %1061
        %1063 = vrot.lane.b32.xlu0 %v1006, 16
        %v1064 = vpop.permute.xlu0 %1063
        %1065 = vrot.lane.b32.xlu0 %v1008, 16
        %v1066 = vpop.permute.xlu0 %1065
        %1067 = vrot.lane.b32.xlu0 %v1010, 16
        %v1068 = vpop.permute.xlu0 %1067
        %1069 = vrot.lane.b32.xlu0 %v1012, 16
        %v1070 = vpop.permute.xlu0 %1069
        %1071 = vrot.lane.b32.xlu0 %v1014, 16
        %v1072 = vpop.permute.xlu0 %1071
        %1073 = vrot.lane.b32.xlu0 %v1016, 16
        %v1074 = vpop.permute.xlu0 %1073
        %1075 = vrot.lane.b32.xlu0 %v1018, 16
        %v1076 = vpop.permute.xlu0 %1075
        %vm1106 = vcmask 1042432
        %v1107 = vrot.slane %v458, 5
        %v1108 = vrot.slane %v459, 5
        %v1109 = vsel %vm1106, %v1107, %v1108
        %v1110 = vrot.slane %v460, 5
        %v1111 = vsel %vm1106, %v1108, %v1110
        %v1112 = vrot.slane %v461, 5
        %v1113 = vsel %vm1106, %v1110, %v1112
        %v1114 = vrot.slane %v462, 5
        %v1115 = vsel %vm1106, %v1112, %v1114
        %v1116 = vrot.slane %v463, 5
        %v1117 = vsel %vm1106, %v1114, %v1116
        %v1118 = vrot.slane %v464, 5
        %v1119 = vsel %vm1106, %v1116, %v1118
        %v1120 = vrot.slane %v465, 5
        %v1121 = vsel %vm1106, %v1118, %v1120
        %v1122 = vrot.slane %v466, 5
        %v1123 = vsel %vm1106, %v1120, %v1122
        %v1124 = vrot.slane %v467, 5
        %v1125 = vsel %vm1106, %v1122, %v1124
        %v1126 = vrot.slane %v468, 5
        %v1127 = vsel %vm1106, %v1124, %v1126
        %v1128 = vrot.slane %v469, 5
        %v1129 = vsel %vm1106, %v1126, %v1128
        %v1130 = vrot.slane %v470, 5
        %v1131 = vsel %vm1106, %v1128, %v1130
        %v1132 = vrot.slane %v471, 5
        %v1133 = vsel %vm1106, %v1130, %v1132
        %v1134 = vrot.slane %v472, 5
        %v1135 = vsel %vm1106, %v1132, %v1134
        %v1136 = vrot.slane %v473, 5
        %v1137 = vsel %vm1106, %v1134, %v1136
        %v1138 = vrot.slane %v474, 5
        %v1139 = vsel %vm1106, %v1136, %v1138
        %v1140 = vrot.slane %v475, 5
        %v1141 = vsel %vm1106, %v1138, %v1140
        %v1142 = vrot.slane %v476, 5
        %v1143 = vsel %vm1106, %v1140, %v1142
        %v1144 = vrot.slane %v477, 5
        %v1145 = vsel %vm1106, %v1142, %v1144
        %v1146 = vrot.slane %v478, 5
        %v1147 = vsel %vm1106, %v1144, %v1146
        %v1148 = vrot.slane %v479, 5
        %v1149 = vsel %vm1106, %v1146, %v1148
        %v1150 = vrot.slane %v480, 5
        %v1151 = vsel %vm1106, %v1148, %v1150
        %v1152 = vrot.slane %v481, 5
        %v1153 = vsel %vm1106, %v1150, %v1152
        %v1154 = vrot.slane %v482, 5
        %v1155 = vsel %vm1106, %v1152, %v1154
        %v1156 = vrot.slane %v483, 5
        %v1157 = vsel %vm1106, %v1154, %v1156
        %v1158 = vrot.slane %v484, 5
        %v1159 = vsel %vm1106, %v1156, %v1158
        %v1160 = vrot.slane %v485, 5
        %v1161 = vsel %vm1106, %v1158, %v1160
        %v1162 = vrot.slane %v486, 5
        %v1163 = vsel %vm1106, %v1160, %v1162
        %v1164 = vrot.slane %v487, 5
        %v1165 = vsel %vm1106, %v1162, %v1164
        %1166 = vrot.lane.b32.xlu0 %v1109, 20
        %v1167 = vpop.permute.xlu0 %1166
        %1168 = vrot.lane.b32.xlu0 %v1111, 20
        %v1169 = vpop.permute.xlu0 %1168
        %1170 = vrot.lane.b32.xlu0 %v1113, 20
        %v1171 = vpop.permute.xlu0 %1170
        %1172 = vrot.lane.b32.xlu0 %v1115, 20
        %v1173 = vpop.permute.xlu0 %1172
        %1174 = vrot.lane.b32.xlu0 %v1117, 20
        %v1175 = vpop.permute.xlu0 %1174
        %1176 = vrot.lane.b32.xlu0 %v1119, 20
        %v1177 = vpop.permute.xlu0 %1176
        %1178 = vrot.lane.b32.xlu0 %v1121, 20
        %v1179 = vpop.permute.xlu0 %1178
        %1180 = vrot.lane.b32.xlu0 %v1123, 20
        %v1181 = vpop.permute.xlu0 %1180
        %1182 = vrot.lane.b32.xlu0 %v1125, 20
        %v1183 = vpop.permute.xlu0 %1182
        %1184 = vrot.lane.b32.xlu0 %v1127, 20
        %v1185 = vpop.permute.xlu0 %1184
        %1186 = vrot.lane.b32.xlu0 %v1129, 20
        %v1187 = vpop.permute.xlu0 %1186
        %1188 = vrot.lane.b32.xlu0 %v1131, 20
        %v1189 = vpop.permute.xlu0 %1188
        %1190 = vrot.lane.b32.xlu0 %v1133, 20
        %v1191 = vpop.permute.xlu0 %1190
        %1192 = vrot.lane.b32.xlu0 %v1135, 20
        %v1193 = vpop.permute.xlu0 %1192
        %1194 = vrot.lane.b32.xlu0 %v1137, 20
        %v1195 = vpop.permute.xlu0 %1194
        %1196 = vrot.lane.b32.xlu0 %v1139, 20
        %v1197 = vpop.permute.xlu0 %1196
        %1198 = vrot.lane.b32.xlu0 %v1141, 20
        %v1199 = vpop.permute.xlu0 %1198
        %1200 = vrot.lane.b32.xlu0 %v1143, 20
        %v1201 = vpop.permute.xlu0 %1200
        %1202 = vrot.lane.b32.xlu0 %v1145, 20
        %v1203 = vpop.permute.xlu0 %1202
        %1204 = vrot.lane.b32.xlu0 %v1147, 20
        %v1205 = vpop.permute.xlu0 %1204
        %1206 = vrot.lane.b32.xlu0 %v1149, 20
        %v1207 = vpop.permute.xlu0 %1206
        %1208 = vrot.lane.b32.xlu0 %v1151, 20
        %v1209 = vpop.permute.xlu0 %1208
        %1210 = vrot.lane.b32.xlu0 %v1153, 20
        %v1211 = vpop.permute.xlu0 %1210
        %1212 = vrot.lane.b32.xlu0 %v1155, 20
        %v1213 = vpop.permute.xlu0 %1212
        %1214 = vrot.lane.b32.xlu0 %v1157, 20
        %v1215 = vpop.permute.xlu0 %1214
        %1216 = vrot.lane.b32.xlu0 %v1159, 20
        %v1217 = vpop.permute.xlu0 %1216
        %1218 = vrot.lane.b32.xlu0 %v1161, 20
        %v1219 = vpop.permute.xlu0 %1218
        %1220 = vrot.lane.b32.xlu0 %v1163, 20
        %v1221 = vpop.permute.xlu0 %1220
        %1222 = vrot.lane.b32.xlu0 %v1165, 20
        %v1223 = vpop.permute.xlu0 %1222
        %vm1253 = vcmask 1041408
        %v1254 = vrot.slane %v458, 6
        %v1255 = vrot.slane %v459, 6
        %v1256 = vsel %vm1253, %v1254, %v1255
        %v1257 = vrot.slane %v460, 6
        %v1258 = vsel %vm1253, %v1255, %v1257
        %v1259 = vrot.slane %v461, 6
        %v1260 = vsel %vm1253, %v1257, %v1259
        %v1261 = vrot.slane %v462, 6
        %v1262 = vsel %vm1253, %v1259, %v1261
        %v1263 = vrot.slane %v463, 6
        %v1264 = vsel %vm1253, %v1261, %v1263
        %v1265 = vrot.slane %v464, 6
        %v1266 = vsel %vm1253, %v1263, %v1265
        %v1267 = vrot.slane %v465, 6
        %v1268 = vsel %vm1253, %v1265, %v1267
        %v1269 = vrot.slane %v466, 6
        %v1270 = vsel %vm1253, %v1267, %v1269
        %v1271 = vrot.slane %v467, 6
        %v1272 = vsel %vm1253, %v1269, %v1271
        %v1273 = vrot.slane %v468, 6
        %v1274 = vsel %vm1253, %v1271, %v1273
        %v1275 = vrot.slane %v469, 6
        %v1276 = vsel %vm1253, %v1273, %v1275
        %v1277 = vrot.slane %v470, 6
        %v1278 = vsel %vm1253, %v1275, %v1277
        %v1279 = vrot.slane %v471, 6
        %v1280 = vsel %vm1253, %v1277, %v1279
        %v1281 = vrot.slane %v472, 6
        %v1282 = vsel %vm1253, %v1279, %v1281
        %v1283 = vrot.slane %v473, 6
        %v1284 = vsel %vm1253, %v1281, %v1283
        %v1285 = vrot.slane %v474, 6
        %v1286 = vsel %vm1253, %v1283, %v1285
        %v1287 = vrot.slane %v475, 6
        %v1288 = vsel %vm1253, %v1285, %v1287
        %v1289 = vrot.slane %v476, 6
        %v1290 = vsel %vm1253, %v1287, %v1289
        %v1291 = vrot.slane %v477, 6
        %v1292 = vsel %vm1253, %v1289, %v1291
        %v1293 = vrot.slane %v478, 6
        %v1294 = vsel %vm1253, %v1291, %v1293
        %v1295 = vrot.slane %v479, 6
        %v1296 = vsel %vm1253, %v1293, %v1295
        %v1297 = vrot.slane %v480, 6
        %v1298 = vsel %vm1253, %v1295, %v1297
        %v1299 = vrot.slane %v481, 6
        %v1300 = vsel %vm1253, %v1297, %v1299
        %v1301 = vrot.slane %v482, 6
        %v1302 = vsel %vm1253, %v1299, %v1301
        %v1303 = vrot.slane %v483, 6
        %v1304 = vsel %vm1253, %v1301, %v1303
        %v1305 = vrot.slane %v484, 6
        %v1306 = vsel %vm1253, %v1303, %v1305
        %v1307 = vrot.slane %v485, 6
        %v1308 = vsel %vm1253, %v1305, %v1307
        %v1309 = vrot.slane %v486, 6
        %v1310 = vsel %vm1253, %v1307, %v1309
        %v1311 = vrot.slane %v487, 6
        %v1312 = vsel %vm1253, %v1309, %v1311
        %1313 = vrot.lane.b32.xlu0 %v1256, 24
        %v1314 = vpop.permute.xlu0 %1313
        %1315 = vrot.lane.b32.xlu0 %v1258, 24
        %v1316 = vpop.permute.xlu0 %1315
        %1317 = vrot.lane.b32.xlu0 %v1260, 24
        %v1318 = vpop.permute.xlu0 %1317
        %1319 = vrot.lane.b32.xlu0 %v1262, 24
        %v1320 = vpop.permute.xlu0 %1319
        %1321 = vrot.lane.b32.xlu0 %v1264, 24
        %v1322 = vpop.permute.xlu0 %1321
        %1323 = vrot.lane.b32.xlu0 %v1266, 24
        %v1324 = vpop.permute.xlu0 %1323
        %1325 = vrot.lane.b32.xlu0 %v1268, 24
        %v1326 = vpop.permute.xlu0 %1325
        %1327 = vrot.lane.b32.xlu0 %v1270, 24
        %v1328 = vpop.permute.xlu0 %1327
        %1329 = vrot.lane.b32.xlu0 %v1272, 24
        %v1330 = vpop.permute.xlu0 %1329
        %1331 = vrot.lane.b32.xlu0 %v1274, 24
        %v1332 = vpop.permute.xlu0 %1331
        %1333 = vrot.lane.b32.xlu0 %v1276, 24
        %v1334 = vpop.permute.xlu0 %1333
        %1335 = vrot.lane.b32.xlu0 %v1278, 24
        %v1336 = vpop.permute.xlu0 %1335
        %1337 = vrot.lane.b32.xlu0 %v1280, 24
        %v1338 = vpop.permute.xlu0 %1337
        %1339 = vrot.lane.b32.xlu0 %v1282, 24
        %v1340 = vpop.permute.xlu0 %1339
        %1341 = vrot.lane.b32.xlu0 %v1284, 24
        %v1342 = vpop.permute.xlu0 %1341
        %1343 = vrot.lane.b32.xlu0 %v1286, 24
        %v1344 = vpop.permute.xlu0 %1343
        %1345 = vrot.lane.b32.xlu0 %v1288, 24
        %v1346 = vpop.permute.xlu0 %1345
        %1347 = vrot.lane.b32.xlu0 %v1290, 24
        %v1348 = vpop.permute.xlu0 %1347
        %1349 = vrot.lane.b32.xlu0 %v1292, 24
        %v1350 = vpop.permute.xlu0 %1349
        %1351 = vrot.lane.b32.xlu0 %v1294, 24
        %v1352 = vpop.permute.xlu0 %1351
        %1353 = vrot.lane.b32.xlu0 %v1296, 24
        %v1354 = vpop.permute.xlu0 %1353
        %1355 = vrot.lane.b32.xlu0 %v1298, 24
        %v1356 = vpop.permute.xlu0 %1355
        %1357 = vrot.lane.b32.xlu0 %v1300, 24
        %v1358 = vpop.permute.xlu0 %1357
        %1359 = vrot.lane.b32.xlu0 %v1302, 24
        %v1360 = vpop.permute.xlu0 %1359
        %1361 = vrot.lane.b32.xlu0 %v1304, 24
        %v1362 = vpop.permute.xlu0 %1361
        %1363 = vrot.lane.b32.xlu0 %v1306, 24
        %v1364 = vpop.permute.xlu0 %1363
        %1365 = vrot.lane.b32.xlu0 %v1308, 24
        %v1366 = vpop.permute.xlu0 %1365
        %1367 = vrot.lane.b32.xlu0 %v1310, 24
        %v1368 = vpop.permute.xlu0 %1367
        %1369 = vrot.lane.b32.xlu0 %v1312, 24
        %v1370 = vpop.permute.xlu0 %1369
        %vm1400 = vcmask 1040384
        %v1401 = vrot.slane %v458, 7
        %v1402 = vrot.slane %v459, 7
        %v1403 = vsel %vm1400, %v1401, %v1402
        %v1404 = vrot.slane %v460, 7
        %v1405 = vsel %vm1400, %v1402, %v1404
        %v1406 = vrot.slane %v461, 7
        %v1407 = vsel %vm1400, %v1404, %v1406
        %v1408 = vrot.slane %v462, 7
        %v1409 = vsel %vm1400, %v1406, %v1408
        %v1410 = vrot.slane %v463, 7
        %v1411 = vsel %vm1400, %v1408, %v1410
        %v1412 = vrot.slane %v464, 7
        %v1413 = vsel %vm1400, %v1410, %v1412
        %v1414 = vrot.slane %v465, 7
        %v1415 = vsel %vm1400, %v1412, %v1414
        %v1416 = vrot.slane %v466, 7
        %v1417 = vsel %vm1400, %v1414, %v1416
        %v1418 = vrot.slane %v467, 7
        %v1419 = vsel %vm1400, %v1416, %v1418
        %v1420 = vrot.slane %v468, 7
        %v1421 = vsel %vm1400, %v1418, %v1420
        %v1422 = vrot.slane %v469, 7
        %v1423 = vsel %vm1400, %v1420, %v1422
        %v1424 = vrot.slane %v470, 7
        %v1425 = vsel %vm1400, %v1422, %v1424
        %v1426 = vrot.slane %v471, 7
        %v1427 = vsel %vm1400, %v1424, %v1426
        %v1428 = vrot.slane %v472, 7
        %v1429 = vsel %vm1400, %v1426, %v1428
        %v1430 = vrot.slane %v473, 7
        %v1431 = vsel %vm1400, %v1428, %v1430
        %v1432 = vrot.slane %v474, 7
        %v1433 = vsel %vm1400, %v1430, %v1432
        %v1434 = vrot.slane %v475, 7
        %v1435 = vsel %vm1400, %v1432, %v1434
        %v1436 = vrot.slane %v476, 7
        %v1437 = vsel %vm1400, %v1434, %v1436
        %v1438 = vrot.slane %v477, 7
        %v1439 = vsel %vm1400, %v1436, %v1438
        %v1440 = vrot.slane %v478, 7
        %v1441 = vsel %vm1400, %v1438, %v1440
        %v1442 = vrot.slane %v479, 7
        %v1443 = vsel %vm1400, %v1440, %v1442
        %v1444 = vrot.slane %v480, 7
        %v1445 = vsel %vm1400, %v1442, %v1444
        %v1446 = vrot.slane %v481, 7
        %v1447 = vsel %vm1400, %v1444, %v1446
        %v1448 = vrot.slane %v482, 7
        %v1449 = vsel %vm1400, %v1446, %v1448
        %v1450 = vrot.slane %v483, 7
        %v1451 = vsel %vm1400, %v1448, %v1450
        %v1452 = vrot.slane %v484, 7
        %v1453 = vsel %vm1400, %v1450, %v1452
        %v1454 = vrot.slane %v485, 7
        %v1455 = vsel %vm1400, %v1452, %v1454
        %v1456 = vrot.slane %v486, 7
        %v1457 = vsel %vm1400, %v1454, %v1456
        %v1458 = vrot.slane %v487, 7
        %v1459 = vsel %vm1400, %v1456, %v1458
        %1460 = vrot.lane.b32.xlu0 %v1403, 28
        %v1461 = vpop.permute.xlu0 %1460
        %1462 = vrot.lane.b32.xlu0 %v1405, 28
        %v1463 = vpop.permute.xlu0 %1462
        %1464 = vrot.lane.b32.xlu0 %v1407, 28
        %v1465 = vpop.permute.xlu0 %1464
        %1466 = vrot.lane.b32.xlu0 %v1409, 28
        %v1467 = vpop.permute.xlu0 %1466
        %1468 = vrot.lane.b32.xlu0 %v1411, 28
        %v1469 = vpop.permute.xlu0 %1468
        %1470 = vrot.lane.b32.xlu0 %v1413, 28
        %v1471 = vpop.permute.xlu0 %1470
        %1472 = vrot.lane.b32.xlu0 %v1415, 28
        %v1473 = vpop.permute.xlu0 %1472
        %1474 = vrot.lane.b32.xlu0 %v1417, 28
        %v1475 = vpop.permute.xlu0 %1474
        %1476 = vrot.lane.b32.xlu0 %v1419, 28
        %v1477 = vpop.permute.xlu0 %1476
        %1478 = vrot.lane.b32.xlu0 %v1421, 28
        %v1479 = vpop.permute.xlu0 %1478
        %1480 = vrot.lane.b32.xlu0 %v1423, 28
        %v1481 = vpop.permute.xlu0 %1480
        %1482 = vrot.lane.b32.xlu0 %v1425, 28
        %v1483 = vpop.permute.xlu0 %1482
        %1484 = vrot.lane.b32.xlu0 %v1427, 28
        %v1485 = vpop.permute.xlu0 %1484
        %1486 = vrot.lane.b32.xlu0 %v1429, 28
        %v1487 = vpop.permute.xlu0 %1486
        %1488 = vrot.lane.b32.xlu0 %v1431, 28
        %v1489 = vpop.permute.xlu0 %1488
        %1490 = vrot.lane.b32.xlu0 %v1433, 28
        %v1491 = vpop.permute.xlu0 %1490
        %1492 = vrot.lane.b32.xlu0 %v1435, 28
        %v1493 = vpop.permute.xlu0 %1492
        %1494 = vrot.lane.b32.xlu0 %v1437, 28
        %v1495 = vpop.permute.xlu0 %1494
        %1496 = vrot.lane.b32.xlu0 %v1439, 28
        %v1497 = vpop.permute.xlu0 %1496
        %1498 = vrot.lane.b32.xlu0 %v1441, 28
        %v1499 = vpop.permute.xlu0 %1498
        %1500 = vrot.lane.b32.xlu0 %v1443, 28
        %v1501 = vpop.permute.xlu0 %1500
        %1502 = vrot.lane.b32.xlu0 %v1445, 28
        %v1503 = vpop.permute.xlu0 %1502
        %1504 = vrot.lane.b32.xlu0 %v1447, 28
        %v1505 = vpop.permute.xlu0 %1504
        %1506 = vrot.lane.b32.xlu0 %v1449, 28
        %v1507 = vpop.permute.xlu0 %1506
        %1508 = vrot.lane.b32.xlu0 %v1451, 28
        %v1509 = vpop.permute.xlu0 %1508
        %1510 = vrot.lane.b32.xlu0 %v1453, 28
        %v1511 = vpop.permute.xlu0 %1510
        %1512 = vrot.lane.b32.xlu0 %v1455, 28
        %v1513 = vpop.permute.xlu0 %1512
        %1514 = vrot.lane.b32.xlu0 %v1457, 28
        %v1515 = vpop.permute.xlu0 %1514
        %1516 = vrot.lane.b32.xlu0 %v1459, 28
        %v1517 = vpop.permute.xlu0 %1516
        %1547 = vrot.lane.b32.xlu0 %v459, 32
        %v1548 = vpop.permute.xlu0 %1547
        %1549 = vrot.lane.b32.xlu0 %v460, 32
        %v1550 = vpop.permute.xlu0 %1549
        %1551 = vrot.lane.b32.xlu0 %v461, 32
        %v1552 = vpop.permute.xlu0 %1551
        %1553 = vrot.lane.b32.xlu0 %v462, 32
        %v1554 = vpop.permute.xlu0 %1553
        %1555 = vrot.lane.b32.xlu0 %v463, 32
        %v1556 = vpop.permute.xlu0 %1555
        %1557 = vrot.lane.b32.xlu0 %v464, 32
        %v1558 = vpop.permute.xlu0 %1557
        %1559 = vrot.lane.b32.xlu0 %v465, 32
        %v1560 = vpop.permute.xlu0 %1559
        %1561 = vrot.lane.b32.xlu0 %v466, 32
        %v1562 = vpop.permute.xlu0 %1561
        %1563 = vrot.lane.b32.xlu0 %v467, 32
        %v1564 = vpop.permute.xlu0 %1563
        %1565 = vrot.lane.b32.xlu0 %v468, 32
        %v1566 = vpop.permute.xlu0 %1565
        %1567 = vrot.lane.b32.xlu0 %v469, 32
        %v1568 = vpop.permute.xlu0 %1567
        %1569 = vrot.lane.b32.xlu0 %v470, 32
        %v1570 = vpop.permute.xlu0 %1569
        %1571 = vrot.lane.b32.xlu0 %v471, 32
        %v1572 = vpop.permute.xlu0 %1571
        %1573 = vrot.lane.b32.xlu0 %v472, 32
        %v1574 = vpop.permute.xlu0 %1573
        %1575 = vrot.lane.b32.xlu0 %v473, 32
        %v1576 = vpop.permute.xlu0 %1575
        %1577 = vrot.lane.b32.xlu0 %v474, 32
        %v1578 = vpop.permute.xlu0 %1577
        %1579 = vrot.lane.b32.xlu0 %v475, 32
        %v1580 = vpop.permute.xlu0 %1579
        %1581 = vrot.lane.b32.xlu0 %v476, 32
        %v1582 = vpop.permute.xlu0 %1581
        %1583 = vrot.lane.b32.xlu0 %v477, 32
        %v1584 = vpop.permute.xlu0 %1583
        %1585 = vrot.lane.b32.xlu0 %v478, 32
        %v1586 = vpop.permute.xlu0 %1585
        %1587 = vrot.lane.b32.xlu0 %v479, 32
        %v1588 = vpop.permute.xlu0 %1587
        %1589 = vrot.lane.b32.xlu0 %v480, 32
        %v1590 = vpop.permute.xlu0 %1589
        %1591 = vrot.lane.b32.xlu0 %v481, 32
        %v1592 = vpop.permute.xlu0 %1591
        %1593 = vrot.lane.b32.xlu0 %v482, 32
        %v1594 = vpop.permute.xlu0 %1593
        %1595 = vrot.lane.b32.xlu0 %v483, 32
        %v1596 = vpop.permute.xlu0 %1595
        %1597 = vrot.lane.b32.xlu0 %v484, 32
        %v1598 = vpop.permute.xlu0 %1597
        %1599 = vrot.lane.b32.xlu0 %v485, 32
        %v1600 = vpop.permute.xlu0 %1599
        %1601 = vrot.lane.b32.xlu0 %v486, 32
        %v1602 = vpop.permute.xlu0 %1601
        %1603 = vrot.lane.b32.xlu0 %v487, 32
        %v1604 = vpop.permute.xlu0 %1603
        %vm1634 = vcmask 31744
        %v1635 = vsel %vm1634, %v458, %v579
        %v1636 = vsel %vm1634, %v459, %v581
        %v1637 = vsel %vm1634, %v460, %v583
        %v1638 = vsel %vm1634, %v461, %v585
        %v1639 = vsel %vm1634, %v462, %v587
        %v1640 = vsel %vm1634, %v463, %v589
        %v1641 = vsel %vm1634, %v464, %v591
        %v1642 = vsel %vm1634, %v465, %v593
        %v1643 = vsel %vm1634, %v466, %v595
        %v1644 = vsel %vm1634, %v467, %v597
        %v1645 = vsel %vm1634, %v468, %v599
        %v1646 = vsel %vm1634, %v469, %v601
        %v1647 = vsel %vm1634, %v470, %v603
        %v1648 = vsel %vm1634, %v471, %v605
        %v1649 = vsel %vm1634, %v472, %v607
        %v1650 = vsel %vm1634, %v473, %v609
        %v1651 = vsel %vm1634, %v474, %v611
        %v1652 = vsel %vm1634, %v475, %v613
        %v1653 = vsel %vm1634, %v476, %v615
        %v1654 = vsel %vm1634, %v477, %v617
        %v1655 = vsel %vm1634, %v478, %v619
        %v1656 = vsel %vm1634, %v479, %v621
        %v1657 = vsel %vm1634, %v480, %v623
        %v1658 = vsel %vm1634, %v481, %v625
        %v1659 = vsel %vm1634, %v482, %v627
        %v1660 = vsel %vm1634, %v483, %v629
        %v1661 = vsel %vm1634, %v484, %v631
        %v1662 = vsel %vm1634, %v485, %v633
        %v1663 = vsel %vm1634, %v486, %v635
        %vm1664 = vcmask 64512
        %v1665 = vsel %vm1664, %v1635, %v726
        %v1666 = vsel %vm1664, %v1636, %v728
        %v1667 = vsel %vm1664, %v1637, %v730
        %v1668 = vsel %vm1664, %v1638, %v732
        %v1669 = vsel %vm1664, %v1639, %v734
        %v1670 = vsel %vm1664, %v1640, %v736
        %v1671 = vsel %vm1664, %v1641, %v738
        %v1672 = vsel %vm1664, %v1642, %v740
        %v1673 = vsel %vm1664, %v1643, %v742
        %v1674 = vsel %vm1664, %v1644, %v744
        %v1675 = vsel %vm1664, %v1645, %v746
        %v1676 = vsel %vm1664, %v1646, %v748
        %v1677 = vsel %vm1664, %v1647, %v750
        %v1678 = vsel %vm1664, %v1648, %v752
        %v1679 = vsel %vm1664, %v1649, %v754
        %v1680 = vsel %vm1664, %v1650, %v756
        %v1681 = vsel %vm1664, %v1651, %v758
        %v1682 = vsel %vm1664, %v1652, %v760
        %v1683 = vsel %vm1664, %v1653, %v762
        %v1684 = vsel %vm1664, %v1654, %v764
        %v1685 = vsel %vm1664, %v1655, %v766
        %v1686 = vsel %vm1664, %v1656, %v768
        %v1687 = vsel %vm1664, %v1657, %v770
        %v1688 = vsel %vm1664, %v1658, %v772
        %v1689 = vsel %vm1664, %v1659, %v774
        %v1690 = vsel %vm1664, %v1660, %v776
        %v1691 = vsel %vm1664, %v1661, %v778
        %v1692 = vsel %vm1664, %v1662, %v780
        %v1693 = vsel %vm1664, %v1663, %v782
        %vm1694 = vcmask 97280
        %v1695 = vsel %vm1694, %v1665, %v873
        %v1696 = vsel %vm1694, %v1666, %v875
        %v1697 = vsel %vm1694, %v1667, %v877
        %v1698 = vsel %vm1694, %v1668, %v879
        %v1699 = vsel %vm1694, %v1669, %v881
        %v1700 = vsel %vm1694, %v1670, %v883
        %v1701 = vsel %vm1694, %v1671, %v885
        %v1702 = vsel %vm1694, %v1672, %v887
        %v1703 = vsel %vm1694, %v1673, %v889
        %v1704 = vsel %vm1694, %v1674, %v891
        %v1705 = vsel %vm1694, %v1675, %v893
        %v1706 = vsel %vm1694, %v1676, %v895
        %v1707 = vsel %vm1694, %v1677, %v897
        %v1708 = vsel %vm1694, %v1678, %v899
        %v1709 = vsel %vm1694, %v1679, %v901
        %v1710 = vsel %vm1694, %v1680, %v903
        %v1711 = vsel %vm1694, %v1681, %v905
        %v1712 = vsel %vm1694, %v1682, %v907
        %v1713 = vsel %vm1694, %v1683, %v909
        %v1714 = vsel %vm1694, %v1684, %v911
        %v1715 = vsel %vm1694, %v1685, %v913
        %v1716 = vsel %vm1694, %v1686, %v915
        %v1717 = vsel %vm1694, %v1687, %v917
        %v1718 = vsel %vm1694, %v1688, %v919
        %v1719 = vsel %vm1694, %v1689, %v921
        %v1720 = vsel %vm1694, %v1690, %v923
        %v1721 = vsel %vm1694, %v1691, %v925
        %v1722 = vsel %vm1694, %v1692, %v927
        %v1723 = vsel %vm1694, %v1693, %v929
        %vm1724 = vcmask 130048
        %v1725 = vsel %vm1724, %v1695, %v1020
        %v1726 = vsel %vm1724, %v1696, %v1022
        %v1727 = vsel %vm1724, %v1697, %v1024
        %v1728 = vsel %vm1724, %v1698, %v1026
        %v1729 = vsel %vm1724, %v1699, %v1028
        %v1730 = vsel %vm1724, %v1700, %v1030
        %v1731 = vsel %vm1724, %v1701, %v1032
        %v1732 = vsel %vm1724, %v1702, %v1034
        %v1733 = vsel %vm1724, %v1703, %v1036
        %v1734 = vsel %vm1724, %v1704, %v1038
        %v1735 = vsel %vm1724, %v1705, %v1040
        %v1736 = vsel %vm1724, %v1706, %v1042
        %v1737 = vsel %vm1724, %v1707, %v1044
        %v1738 = vsel %vm1724, %v1708, %v1046
        %v1739 = vsel %vm1724, %v1709, %v1048
        %v1740 = vsel %vm1724, %v1710, %v1050
        %v1741 = vsel %vm1724, %v1711, %v1052
        %v1742 = vsel %vm1724, %v1712, %v1054
        %v1743 = vsel %vm1724, %v1713, %v1056
        %v1744 = vsel %vm1724, %v1714, %v1058
        %v1745 = vsel %vm1724, %v1715, %v1060
        %v1746 = vsel %vm1724, %v1716, %v1062
        %v1747 = vsel %vm1724, %v1717, %v1064
        %v1748 = vsel %vm1724, %v1718, %v1066
        %v1749 = vsel %vm1724, %v1719, %v1068
        %v1750 = vsel %vm1724, %v1720, %v1070
        %v1751 = vsel %vm1724, %v1721, %v1072
        %v1752 = vsel %vm1724, %v1722, %v1074
        %v1753 = vsel %vm1724, %v1723, %v1076
        %vm1754 = vcmask 162816
        %v1755 = vsel %vm1754, %v1725, %v1167
        %v1756 = vsel %vm1754, %v1726, %v1169
        %v1757 = vsel %vm1754, %v1727, %v1171
        %v1758 = vsel %vm1754, %v1728, %v1173
        %v1759 = vsel %vm1754, %v1729, %v1175
        %v1760 = vsel %vm1754, %v1730, %v1177
        %v1761 = vsel %vm1754, %v1731, %v1179
        %v1762 = vsel %vm1754, %v1732, %v1181
        %v1763 = vsel %vm1754, %v1733, %v1183
        %v1764 = vsel %vm1754, %v1734, %v1185
        %v1765 = vsel %vm1754, %v1735, %v1187
        %v1766 = vsel %vm1754, %v1736, %v1189
        %v1767 = vsel %vm1754, %v1737, %v1191
        %v1768 = vsel %vm1754, %v1738, %v1193
        %v1769 = vsel %vm1754, %v1739, %v1195
        %v1770 = vsel %vm1754, %v1740, %v1197
        %v1771 = vsel %vm1754, %v1741, %v1199
        %v1772 = vsel %vm1754, %v1742, %v1201
        %v1773 = vsel %vm1754, %v1743, %v1203
        %v1774 = vsel %vm1754, %v1744, %v1205
        %v1775 = vsel %vm1754, %v1745, %v1207
        %v1776 = vsel %vm1754, %v1746, %v1209
        %v1777 = vsel %vm1754, %v1747, %v1211
        %v1778 = vsel %vm1754, %v1748, %v1213
        %v1779 = vsel %vm1754, %v1749, %v1215
        %v1780 = vsel %vm1754, %v1750, %v1217
        %v1781 = vsel %vm1754, %v1751, %v1219
        %v1782 = vsel %vm1754, %v1752, %v1221
        %v1783 = vsel %vm1754, %v1753, %v1223
        %vm1784 = vcmask 195584
        %v1785 = vsel %vm1784, %v1755, %v1314
        %v1786 = vsel %vm1784, %v1756, %v1316
        %v1787 = vsel %vm1784, %v1757, %v1318
        %v1788 = vsel %vm1784, %v1758, %v1320
        %v1789 = vsel %vm1784, %v1759, %v1322
        %v1790 = vsel %vm1784, %v1760, %v1324
        %v1791 = vsel %vm1784, %v1761, %v1326
        %v1792 = vsel %vm1784, %v1762, %v1328
        %v1793 = vsel %vm1784, %v1763, %v1330
        %v1794 = vsel %vm1784, %v1764, %v1332
        %v1795 = vsel %vm1784, %v1765, %v1334
        %v1796 = vsel %vm1784, %v1766, %v1336
        %v1797 = vsel %vm1784, %v1767, %v1338
        %v1798 = vsel %vm1784, %v1768, %v1340
        %v1799 = vsel %vm1784, %v1769, %v1342
        %v1800 = vsel %vm1784, %v1770, %v1344
        %v1801 = vsel %vm1784, %v1771, %v1346
        %v1802 = vsel %vm1784, %v1772, %v1348
        %v1803 = vsel %vm1784, %v1773, %v1350
        %v1804 = vsel %vm1784, %v1774, %v1352
        %v1805 = vsel %vm1784, %v1775, %v1354
        %v1806 = vsel %vm1784, %v1776, %v1356
        %v1807 = vsel %vm1784, %v1777, %v1358
        %v1808 = vsel %vm1784, %v1778, %v1360
        %v1809 = vsel %vm1784, %v1779, %v1362
        %v1810 = vsel %vm1784, %v1780, %v1364
        %v1811 = vsel %vm1784, %v1781, %v1366
        %v1812 = vsel %vm1784, %v1782, %v1368
        %v1813 = vsel %vm1784, %v1783, %v1370
        %vm1814 = vcmask 228352
        %v1815 = vsel %vm1814, %v1785, %v1461
        %v1816 = vsel %vm1814, %v1786, %v1463
        %v1817 = vsel %vm1814, %v1787, %v1465
        %v1818 = vsel %vm1814, %v1788, %v1467
        %v1819 = vsel %vm1814, %v1789, %v1469
        %v1820 = vsel %vm1814, %v1790, %v1471
        %v1821 = vsel %vm1814, %v1791, %v1473
        %v1822 = vsel %vm1814, %v1792, %v1475
        %v1823 = vsel %vm1814, %v1793, %v1477
        %v1824 = vsel %vm1814, %v1794, %v1479
        %v1825 = vsel %vm1814, %v1795, %v1481
        %v1826 = vsel %vm1814, %v1796, %v1483
        %v1827 = vsel %vm1814, %v1797, %v1485
        %v1828 = vsel %vm1814, %v1798, %v1487
        %v1829 = vsel %vm1814, %v1799, %v1489
        %v1830 = vsel %vm1814, %v1800, %v1491
        %v1831 = vsel %vm1814, %v1801, %v1493
        %v1832 = vsel %vm1814, %v1802, %v1495
        %v1833 = vsel %vm1814, %v1803, %v1497
        %v1834 = vsel %vm1814, %v1804, %v1499
        %v1835 = vsel %vm1814, %v1805, %v1501
        %v1836 = vsel %vm1814, %v1806, %v1503
        %v1837 = vsel %vm1814, %v1807, %v1505
        %v1838 = vsel %vm1814, %v1808, %v1507
        %v1839 = vsel %vm1814, %v1809, %v1509
        %v1840 = vsel %vm1814, %v1810, %v1511
        %v1841 = vsel %vm1814, %v1811, %v1513
        %v1842 = vsel %vm1814, %v1812, %v1515
        %v1843 = vsel %vm1814, %v1813, %v1517
        %vm1844 = vcmask 261120
        %v1845 = vsel %vm1844, %v1815, %v1548
        %v1846 = vsel %vm1844, %v1816, %v1550
        %v1847 = vsel %vm1844, %v1817, %v1552
        %v1848 = vsel %vm1844, %v1818, %v1554
        %v1849 = vsel %vm1844, %v1819, %v1556
        %v1850 = vsel %vm1844, %v1820, %v1558
        %v1851 = vsel %vm1844, %v1821, %v1560
        %v1852 = vsel %vm1844, %v1822, %v1562
        %v1853 = vsel %vm1844, %v1823, %v1564
        %v1854 = vsel %vm1844, %v1824, %v1566
        %v1855 = vsel %vm1844, %v1825, %v1568
        %v1856 = vsel %vm1844, %v1826, %v1570
        %v1857 = vsel %vm1844, %v1827, %v1572
        %v1858 = vsel %vm1844, %v1828, %v1574
        %v1859 = vsel %vm1844, %v1829, %v1576
        %v1860 = vsel %vm1844, %v1830, %v1578
        %v1861 = vsel %vm1844, %v1831, %v1580
        %v1862 = vsel %vm1844, %v1832, %v1582
        %v1863 = vsel %vm1844, %v1833, %v1584
        %v1864 = vsel %vm1844, %v1834, %v1586
        %v1865 = vsel %vm1844, %v1835, %v1588
        %v1866 = vsel %vm1844, %v1836, %v1590
        %v1867 = vsel %vm1844, %v1837, %v1592
        %v1868 = vsel %vm1844, %v1838, %v1594
        %v1869 = vsel %vm1844, %v1839, %v1596
        %v1870 = vsel %vm1844, %v1840, %v1598
        %v1871 = vsel %vm1844, %v1841, %v1600
        %v1872 = vsel %vm1844, %v1842, %v1602
        %v1873 = vsel %vm1844, %v1843, %v1604
        %v1874 = vld [vmem:[%s3] sm:$0xff]
        %v1875 = vld [vmem:[%s3 + $0x8] sm:$0xff]
        %v1876 = vld [vmem:[%s3 + $0x10] sm:$0xff]
        %v1877 = vld [vmem:[%s3 + $0x18] sm:$0xff]
        %v1878 = vld [vmem:[%s3 + $0x20] sm:$0xf]
        %v1879 = vld [vmem:[%s4] sm:$0x1]
        %v1881 = vlaneseq
        %v1882 = vshrl.u32 %v1881, 7
        %v1883 = vsub.s32 0, %v1882
        %v1884 = vrot.slane %v1879, %v1883
        %vm1886 = vcmask 293888
        %v1888 = vsel %vm1886, %v1845, 0
        %v1891 = vsel %vm1886, %v1846, 0
        %v1894 = vsel %vm1886, %v1847, 0
        %v1897 = vsel %vm1886, %v1848, 0
        %v1900 = vsel %vm1886, %v1849, 0
        %v1903 = vsel %vm1886, %v1850, 0
        %v1906 = vsel %vm1886, %v1851, 0
        %v1909 = vsel %vm1886, %v1852, 0
        %v1912 = vsel %vm1886, %v1853, 0
        %v1915 = vsel %vm1886, %v1854, 0
        %v1918 = vsel %vm1886, %v1855, 0
        %v1921 = vsel %vm1886, %v1856, 0
        %v1924 = vsel %vm1886, %v1857, 0
        %v1927 = vsel %vm1886, %v1858, 0
        %v1930 = vsel %vm1886, %v1859, 0
        %v1933 = vsel %vm1886, %v1860, 0
        %v1936 = vsel %vm1886, %v1861, 0
        %v1939 = vsel %vm1886, %v1862, 0
        %v1942 = vsel %vm1886, %v1863, 0
        %v1945 = vsel %vm1886, %v1864, 0
        %v1948 = vsel %vm1886, %v1865, 0
        %v1951 = vsel %vm1886, %v1866, 0
        %v1954 = vsel %vm1886, %v1867, 0
        %v1957 = vsel %vm1886, %v1868, 0
        %v1960 = vsel %vm1886, %v1869, 0
        %v1963 = vsel %vm1886, %v1870, 0
        %v1966 = vsel %vm1886, %v1871, 0
        %v1969 = vsel %vm1886, %v1872, 0
        %v1972 = vsel %vm1886, %v1873, 0
        %v1975 = vsel %vm959, %v1878, 0
        %1977 = vmatprep.subr.mxu0 0.0
        %1978 = vmatpush1.msra.mxu0 %v1874
        %1979 = vmatprep.subr.mxu0 0.0
        %1980 = vmatpush1.msra.mxu0 %v1875
        %1981 = vmatprep.subr.mxu0 0.0
        %1982 = vmatpush1.msra.mxu0 %v1876
        %1983 = vmatprep.subr.mxu0 0.0
        %1984 = vmatpush1.msra.mxu0 %v1877
        %1985 = vmatprep.subr.mxu0 0.0
        %1986 = vmatpush1.msra.mxu0 %v1975
        %1987 = vmatprep.subr.mxu0 0.0
        %1988 = vmatpush1.msra.mxu0 0.0
        %1989 = vmatprep.subr.mxu0 0.0
        %1990 = vmatpush1.msra.mxu0 0.0
        %1991 = vmatprep.subr.mxu0 0.0
        %1992 = vmatpush1.msra.mxu0 0.0
        %1993 = vmatprep.subr.mxu0 0.0
        %1994 = vmatpush1.msra.mxu0 0.0
        %1995 = vmatprep.subr.mxu0 0.0
        %1996 = vmatpush1.msra.mxu0 0.0
        %1997 = vmatprep.subr.mxu0 0.0
        %1998 = vmatpush1.msra.mxu0 0.0
        %1999 = vmatprep.subr.mxu0 0.0
        %2000 = vmatpush1.msra.mxu0 0.0
        %2001 = vmatprep.subr.mxu0 0.0
        %2002 = vmatpush1.msra.mxu0 0.0
        %2003 = vmatprep.subr.mxu0 0.0
        %2004 = vmatpush1.msra.mxu0 0.0
        %2005 = vmatprep.subr.mxu0 0.0
        %2006 = vmatpush1.msra.mxu0 0.0
        %2007 = vmatprep.subr.mxu0 0.0
        %2008 = vmatpush1.msra.mxu0 0.0
        %2009 = vmatprep.subr.mxu0 0.0
        %2010 = vmatpush1.msra.mxu0 0.0
        %2011 = vmatprep.subr.mxu0 0.0
        %2012 = vmatpush1.msra.mxu0 0.0
        %2013 = vmatprep.subr.mxu0 0.0
        %2014 = vmatpush1.msra.mxu0 0.0
        %2015 = vmatprep.subr.mxu0 0.0
        %2016 = vmatpush1.msra.mxu0 0.0
        %2017 = vmatprep.subr.mxu0 0.0
        %2018 = vmatpush1.msra.mxu0 0.0
        %2019 = vmatprep.subr.mxu0 0.0
        %2020 = vmatpush1.msra.mxu0 0.0
        %2021 = vmatprep.subr.mxu0 0.0
        %2022 = vmatpush1.msra.mxu0 0.0
        %2023 = vmatprep.subr.mxu0 0.0
        %2024 = vmatpush1.msra.mxu0 0.0
        %2025 = vmatprep.subr.mxu0 0.0
        %2026 = vmatpush1.msra.mxu0 0.0
        %2027 = vmatprep.subr.mxu0 0.0
        %2028 = vmatpush1.msra.mxu0 0.0
        %2029 = vmatprep.subr.mxu0 0.0
        %2030 = vmatpush1.msra.mxu0 0.0
        %2031 = vmatprep.subr.mxu0 0.0
        %2032 = vmatpush1.msra.mxu0 0.0
        %2033 = vmatprep.subr.mxu0 0.0
        %2034 = vmatpush1.msra.mxu0 0.0
        %2035 = vmatprep.subr.mxu0 0.0
        %2036 = vmatpush1.msra.mxu0 0.0
        %2037 = vmatprep.subr.mxu0 0.0
        %2038 = vmatpush1.msra.mxu0 0.0
        %2039 = vmatprep.subr.mxu0 0.0
        %2040 = vmatpush1.msra.mxu0 0.0
        %2041 = vmatprep.mubr.f32.mxu0 0.0
        %2042 = vmatmul.mubr.f32.gmra.mrb[0].mxu0 %v1888
        %v2043 = vpop.f32.mrb[0].mxu0
        %v2044 = vadd.f32 %v1884, %v2043
        %v2045 = vpop.f32.mrb[0].mxu0
        %2046 = vmatprep.mubr.f32.mxu0 0.0
        %2047 = vmatmul.mubr.f32.gmra.mrb[0].mxu0 %v1891
        %v2048 = vpop.f32.mrb[0].mxu0
        %v2049 = vadd.f32 %v1884, %v2048
        %v2050 = vpop.f32.mrb[0].mxu0
        %2051 = vmatprep.mubr.f32.mxu0 0.0
        %2052 = vmatmul.mubr.f32.gmra.mrb[0].mxu0 %v1894
        %v2053 = vpop.f32.mrb[0].mxu0
        %v2054 = vadd.f32 %v1884, %v2053
        %v2055 = vpop.f32.mrb[0].mxu0
        %2056 = vmatprep.mubr.f32.mxu0 0.0
        %2057 = vmatmul.mubr.f32.gmra.mrb[0].mxu0 %v1897
        %v2058 = vpop.f32.mrb[0].mxu0
        %v2059 = vadd.f32 %v1884, %v2058
        %v2060 = vpop.f32.mrb[0].mxu0
        %2061 = vmatprep.mubr.f32.mxu0 0.0
        %2062 = vmatmul.mubr.f32.gmra.mrb[0].mxu0 %v1900
        %v2063 = vpop.f32.mrb[0].mxu0
        %v2064 = vadd.f32 %v1884, %v2063
        %v2065 = vpop.f32.mrb[0].mxu0
        %2066 = vmatprep.mubr.f32.mxu0 0.0
        %2067 = vmatmul.mubr.f32.gmra.mrb[0].mxu0 %v1903
        %v2068 = vpop.f32.mrb[0].mxu0
        %v2069 = vadd.f32 %v1884, %v2068
        %v2070 = vpop.f32.mrb[0].mxu0
        %2071 = vmatprep.mubr.f32.mxu0 0.0
        %2072 = vmatmul.mubr.f32.gmra.mrb[0].mxu0 %v1906
        %v2073 = vpop.f32.mrb[0].mxu0
        %v2074 = vadd.f32 %v1884, %v2073
        %v2075 = vpop.f32.mrb[0].mxu0
        %2076 = vmatprep.mubr.f32.mxu0 0.0
        %2077 = vmatmul.mubr.f32.gmra.mrb[0].mxu0 %v1909
        %v2078 = vpop.f32.mrb[0].mxu0
        %v2079 = vadd.f32 %v1884, %v2078
        %v2080 = vpop.f32.mrb[0].mxu0
        %2081 = vmatprep.mubr.f32.mxu0 0.0
        %2082 = vmatmul.mubr.f32.gmra.mrb[0].mxu0 %v1912
        %v2083 = vpop.f32.mrb[0].mxu0
        %v2084 = vadd.f32 %v1884, %v2083
        %v2085 = vpop.f32.mrb[0].mxu0
        %2086 = vmatprep.mubr.f32.mxu0 0.0
        %2087 = vmatmul.mubr.f32.gmra.mrb[0].mxu0 %v1915
        %v2088 = vpop.f32.mrb[0].mxu0
        %v2089 = vadd.f32 %v1884, %v2088
        %v2090 = vpop.f32.mrb[0].mxu0
        %2091 = vmatprep.mubr.f32.mxu0 0.0
        %2092 = vmatmul.mubr.f32.gmra.mrb[0].mxu0 %v1918
        %v2093 = vpop.f32.mrb[0].mxu0
        %v2094 = vadd.f32 %v1884, %v2093
        %v2095 = vpop.f32.mrb[0].mxu0
        %2096 = vmatprep.mubr.f32.mxu0 0.0
        %2097 = vmatmul.mubr.f32.gmra.mrb[0].mxu0 %v1921
        %v2098 = vpop.f32.mrb[0].mxu0
        %v2099 = vadd.f32 %v1884, %v2098
        %v2100 = vpop.f32.mrb[0].mxu0
        %2101 = vmatprep.mubr.f32.mxu0 0.0
        %2102 = vmatmul.mubr.f32.gmra.mrb[0].mxu0 %v1924
        %v2103 = vpop.f32.mrb[0].mxu0
        %v2104 = vadd.f32 %v1884, %v2103
        %v2105 = vpop.f32.mrb[0].mxu0
        %2106 = vmatprep.mubr.f32.mxu0 0.0
        %2107 = vmatmul.mubr.f32.gmra.mrb[0].mxu0 %v1927
        %v2108 = vpop.f32.mrb[0].mxu0
        %v2109 = vadd.f32 %v1884, %v2108
        %v2110 = vpop.f32.mrb[0].mxu0
        %2111 = vmatprep.mubr.f32.mxu0 0.0
        %2112 = vmatmul.mubr.f32.gmra.mrb[0].mxu0 %v1930
        %v2113 = vpop.f32.mrb[0].mxu0
        %v2114 = vadd.f32 %v1884, %v2113
        %v2115 = vpop.f32.mrb[0].mxu0
        %2116 = vmatprep.mubr.f32.mxu0 0.0
        %2117 = vmatmul.mubr.f32.gmra.mrb[0].mxu0 %v1933
        %v2118 = vpop.f32.mrb[0].mxu0
        %v2119 = vadd.f32 %v1884, %v2118
        %v2120 = vpop.f32.mrb[0].mxu0
        %2121 = vmatprep.mubr.f32.mxu0 0.0
        %2122 = vmatmul.mubr.f32.gmra.mrb[0].mxu0 %v1936
        %v2123 = vpop.f32.mrb[0].mxu0
        %v2124 = vadd.f32 %v1884, %v2123
        %v2125 = vpop.f32.mrb[0].mxu0
        %2126 = vmatprep.mubr.f32.mxu0 0.0
        %2127 = vmatmul.mubr.f32.gmra.mrb[0].mxu0 %v1939
        %v2128 = vpop.f32.mrb[0].mxu0
        %v2129 = vadd.f32 %v1884, %v2128
        %v2130 = vpop.f32.mrb[0].mxu0
        %2131 = vmatprep.mubr.f32.mxu0 0.0
        %2132 = vmatmul.mubr.f32.gmra.mrb[0].mxu0 %v1942
        %v2133 = vpop.f32.mrb[0].mxu0
        %v2134 = vadd.f32 %v1884, %v2133
        %v2135 = vpop.f32.mrb[0].mxu0
        %2136 = vmatprep.mubr.f32.mxu0 0.0
        %2137 = vmatmul.mubr.f32.gmra.mrb[0].mxu0 %v1945
        %v2138 = vpop.f32.mrb[0].mxu0
        %v2139 = vadd.f32 %v1884, %v2138
        %v2140 = vpop.f32.mrb[0].mxu0
        %2141 = vmatprep.mubr.f32.mxu0 0.0
        %2142 = vmatmul.mubr.f32.gmra.mrb[0].mxu0 %v1948
        %v2143 = vpop.f32.mrb[0].mxu0
        %v2144 = vadd.f32 %v1884, %v2143
        %v2145 = vpop.f32.mrb[0].mxu0
        %2146 = vmatprep.mubr.f32.mxu0 0.0
        %2147 = vmatmul.mubr.f32.gmra.mrb[0].mxu0 %v1951
        %v2148 = vpop.f32.mrb[0].mxu0
        %v2149 = vadd.f32 %v1884, %v2148
        %v2150 = vpop.f32.mrb[0].mxu0
        %2151 = vmatprep.mubr.f32.mxu0 0.0
        %2152 = vmatmul.mubr.f32.gmra.mrb[0].mxu0 %v1954
        %v2153 = vpop.f32.mrb[0].mxu0
        %v2154 = vadd.f32 %v1884, %v2153
        %v2155 = vpop.f32.mrb[0].mxu0
        %2156 = vmatprep.mubr.f32.mxu0 0.0
        %2157 = vmatmul.mubr.f32.gmra.mrb[0].mxu0 %v1957
        %v2158 = vpop.f32.mrb[0].mxu0
        %v2159 = vadd.f32 %v1884, %v2158
        %v2160 = vpop.f32.mrb[0].mxu0
        %2161 = vmatprep.mubr.f32.mxu0 0.0
        %2162 = vmatmul.mubr.f32.gmra.mrb[0].mxu0 %v1960
        %v2163 = vpop.f32.mrb[0].mxu0
        %v2164 = vadd.f32 %v1884, %v2163
        %v2165 = vpop.f32.mrb[0].mxu0
        %2166 = vmatprep.mubr.f32.mxu0 0.0
        %2167 = vmatmul.mubr.f32.gmra.mrb[0].mxu0 %v1963
        %v2168 = vpop.f32.mrb[0].mxu0
        %v2169 = vadd.f32 %v1884, %v2168
        %v2170 = vpop.f32.mrb[0].mxu0
        %2171 = vmatprep.mubr.f32.mxu0 0.0
        %2172 = vmatmul.mubr.f32.gmra.mrb[0].mxu0 %v1966
        %v2173 = vpop.f32.mrb[0].mxu0
        %v2174 = vadd.f32 %v1884, %v2173
        %v2175 = vpop.f32.mrb[0].mxu0
        %2176 = vmatprep.mubr.f32.mxu0 0.0
        %2177 = vmatmul.mubr.f32.gmra.mrb[0].mxu0 %v1969
        %v2178 = vpop.f32.mrb[0].mxu0
        %v2179 = vadd.f32 %v1884, %v2178
        %v2180 = vpop.f32.mrb[0].mxu0
        %2181 = vmatprep.mubr.f32.mxu0 0.0
        %2182 = vmatmul.mubr.f32.gmra.mrb[0].mxu0 %v1972
        %v2183 = vpop.f32.mrb[0].mxu0
        %v2184 = vadd.f32 %v1884, %v2183
        %v2185 = vpop.f32.mrb[0].mxu0
        %2186 = vdwg.mxu0
        %vm2187 = vcmask 490496
        %2188 = vst.msk [vmem:[#allocation2] sm:$0xff] %vm2187, %v2044
        %2189 = vst.msk [vmem:[#allocation2 + $0x8] sm:$0xff] %vm2187, %v2049
        %2190 = vst.msk [vmem:[#allocation2 + $0x10] sm:$0xff] %vm2187, %v2054
        %2191 = vst.msk [vmem:[#allocation2 + $0x18] sm:$0xff] %vm2187, %v2059
        %2192 = vst.msk [vmem:[#allocation2 + $0x20] sm:$0xff] %vm2187, %v2064
        %2193 = vst.msk [vmem:[#allocation2 + $0x28] sm:$0xff] %vm2187, %v2069
        %2194 = vst.msk [vmem:[#allocation2 + $0x30] sm:$0xff] %vm2187, %v2074
        %2195 = vst.msk [vmem:[#allocation2 + $0x38] sm:$0xff] %vm2187, %v2079
        %2196 = vst.msk [vmem:[#allocation2 + $0x40] sm:$0xff] %vm2187, %v2084
        %2197 = vst.msk [vmem:[#allocation2 + $0x48] sm:$0xff] %vm2187, %v2089
        %2198 = vst.msk [vmem:[#allocation2 + $0x50] sm:$0xff] %vm2187, %v2094
        %2199 = vst.msk [vmem:[#allocation2 + $0x58] sm:$0xff] %vm2187, %v2099
        %2200 = vst.msk [vmem:[#allocation2 + $0x60] sm:$0xff] %vm2187, %v2104
        %2201 = vst.msk [vmem:[#allocation2 + $0x68] sm:$0xff] %vm2187, %v2109
        %2202 = vst.msk [vmem:[#allocation2 + $0x70] sm:$0xff] %vm2187, %v2114
        %2203 = vst.msk [vmem:[#allocation2 + $0x78] sm:$0xff] %vm2187, %v2119
        %2204 = vst.msk [vmem:[#allocation2 + $0x80] sm:$0xff] %vm2187, %v2124
        %2205 = vst.msk [vmem:[#allocation2 + $0x88] sm:$0xff] %vm2187, %v2129
        %2206 = vst.msk [vmem:[#allocation2 + $0x90] sm:$0xff] %vm2187, %v2134
        %2207 = vst.msk [vmem:[#allocation2 + $0x98] sm:$0xff] %vm2187, %v2139
        %2208 = vst.msk [vmem:[#allocation2 + $0xa0] sm:$0xff] %vm2187, %v2144
        %2209 = vst.msk [vmem:[#allocation2 + $0xa8] sm:$0xff] %vm2187, %v2149
        %2210 = vst.msk [vmem:[#allocation2 + $0xb0] sm:$0xff] %vm2187, %v2154
        %2211 = vst.msk [vmem:[#allocation2 + $0xb8] sm:$0xff] %vm2187, %v2159
        %2212 = vst.msk [vmem:[#allocation2 + $0xc0] sm:$0xff] %vm2187, %v2164
        %2213 = vst.msk [vmem:[#allocation2 + $0xc8] sm:$0xff] %vm2187, %v2169
        %2214 = vst.msk [vmem:[#allocation2 + $0xd0] sm:$0xff] %vm2187, %v2174
        %2215 = vst.msk [vmem:[#allocation2 + $0xd8] sm:$0xff] %vm2187, %v2179
        %2216 = vst.msk [vmem:[#allocation2 + $0xe0] sm:$0xff] %vm2187, %v2184
        %v2217 = vld [vmem:[#allocation2] ss:$4 sm:$0xff]
        %s2218 = scalar_lea.vmem [#allocation2], 32
        %v2219 = vld [vmem:[%s2218] ss:$4 sm:$0xff]
        %s2220 = scalar_lea.vmem [#allocation2], 64
        %v2221 = vld [vmem:[%s2220] ss:$4 sm:$0xff]
        %s2222 = scalar_lea.vmem [#allocation2], 96
        %v2223 = vld [vmem:[%s2222] ss:$4 sm:$0xff]
        %s2224 = scalar_lea.vmem [#allocation2], 128
        %v2225 = vld [vmem:[%s2224] ss:$4 sm:$0xff]
        %s2226 = scalar_lea.vmem [#allocation2], 160
        %v2227 = vld [vmem:[%s2226] ss:$4 sm:$0xff]
        %s2228 = scalar_lea.vmem [#allocation2], 192
        %v2229 = vld [vmem:[%s2228] ss:$4 sm:$0xff]
        %s2230 = scalar_lea.vmem [#allocation2], 224
        %v2231 = vld [vmem:[%s2230] ss:$4 sm:$0x3]
        %s2232 = scalar_lea.vmem [#allocation2], 1
        %v2233 = vld [vmem:[%s2232] ss:$4 sm:$0xff]
        %s2234 = scalar_lea.vmem [#allocation2], 33
        %v2235 = vld [vmem:[%s2234] ss:$4 sm:$0xff]
        %s2236 = scalar_lea.vmem [#allocation2], 65
        %v2237 = vld [vmem:[%s2236] ss:$4 sm:$0xff]
        %s2238 = scalar_lea.vmem [#allocation2], 97
        %v2239 = vld [vmem:[%s2238] ss:$4 sm:$0xff]
        %s2240 = scalar_lea.vmem [#allocation2], 129
        %v2241 = vld [vmem:[%s2240] ss:$4 sm:$0xff]
        %s2242 = scalar_lea.vmem [#allocation2], 161
        %v2243 = vld [vmem:[%s2242] ss:$4 sm:$0xff]
        %s2244 = scalar_lea.vmem [#allocation2], 193
        %v2245 = vld [vmem:[%s2244] ss:$4 sm:$0xff]
        %s2246 = scalar_lea.vmem [#allocation2], 225
        %v2247 = vld [vmem:[%s2246] ss:$4 sm:$0x3]
        %v2248 = vmax.f32 %v2217, %v2233
        %v2249 = vmax.f32 %v2219, %v2235
        %v2250 = vmax.f32 %v2221, %v2237
        %v2251 = vmax.f32 %v2223, %v2239
        %v2252 = vmax.f32 %v2225, %v2241
        %v2253 = vmax.f32 %v2227, %v2243
        %v2254 = vmax.f32 %v2229, %v2245
        %v2255 = vmax.f32 %v2231, %v2247
        %s2256 = scalar_lea.vmem [#allocation2], 2
        %v2257 = vld [vmem:[%s2256] ss:$4 sm:$0xff]
        %s2258 = scalar_lea.vmem [#allocation2], 34
        %v2259 = vld [vmem:[%s2258] ss:$4 sm:$0xff]
        %s2260 = scalar_lea.vmem [#allocation2], 66
        %v2261 = vld [vmem:[%s2260] ss:$4 sm:$0xff]
        %s2262 = scalar_lea.vmem [#allocation2], 98
        %v2263 = vld [vmem:[%s2262] ss:$4 sm:$0xff]
        %s2264 = scalar_lea.vmem [#allocation2], 130
        %v2265 = vld [vmem:[%s2264] ss:$4 sm:$0xff]
        %s2266 = scalar_lea.vmem [#allocation2], 162
        %v2267 = vld [vmem:[%s2266] ss:$4 sm:$0xff]
        %s2268 = scalar_lea.vmem [#allocation2], 194
        %v2269 = vld [vmem:[%s2268] ss:$4 sm:$0xff]
        %s2270 = scalar_lea.vmem [#allocation2], 226
        %v2271 = vld [vmem:[%s2270] ss:$4 sm:$0x3]
        %v2272 = vmax.f32 %v2248, %v2257
        %v2273 = vmax.f32 %v2249, %v2259
        %v2274 = vmax.f32 %v2250, %v2261
        %v2275 = vmax.f32 %v2251, %v2263
        %v2276 = vmax.f32 %v2252, %v2265
        %v2277 = vmax.f32 %v2253, %v2267
        %v2278 = vmax.f32 %v2254, %v2269
        %v2279 = vmax.f32 %v2255, %v2271
        %s2280 = scalar_lea.vmem [#allocation2], 3
        %v2281 = vld [vmem:[%s2280] ss:$4 sm:$0xff]
        %s2282 = scalar_lea.vmem [#allocation2], 35
        %v2283 = vld [vmem:[%s2282] ss:$4 sm:$0xff]
        %s2284 = scalar_lea.vmem [#allocation2], 67
        %v2285 = vld [vmem:[%s2284] ss:$4 sm:$0xff]
        %s2286 = scalar_lea.vmem [#allocation2], 99
        %v2287 = vld [vmem:[%s2286] ss:$4 sm:$0xff]
        %s2288 = scalar_lea.vmem [#allocation2], 131
        %v2289 = vld [vmem:[%s2288] ss:$4 sm:$0xff]
        %s2290 = scalar_lea.vmem [#allocation2], 163
        %v2291 = vld [vmem:[%s2290] ss:$4 sm:$0xff]
        %s2292 = scalar_lea.vmem [#allocation2], 195
        %v2293 = vld [vmem:[%s2292] ss:$4 sm:$0xff]
        %s2294 = scalar_lea.vmem [#allocation2], 227
        %v2295 = vld [vmem:[%s2294] ss:$4 sm:$0x3]
        %v2296 = vmax.f32 %v2272, %v2281
        %v2297 = vmax.f32 %v2273, %v2283
        %v2298 = vmax.f32 %v2274, %v2285
        %v2299 = vmax.f32 %v2275, %v2287
        %v2300 = vmax.f32 %v2276, %v2289
        %v2301 = vmax.f32 %v2277, %v2291
        %v2302 = vmax.f32 %v2278, %v2293
        %v2303 = vmax.f32 %v2279, %v2295
        %v2304 = vmax.f32 %v2296, 0.0
        %v2305 = vmax.f32 %v2297, 0.0
        %v2306 = vmax.f32 %v2298, 0.0
        %v2307 = vmax.f32 %v2299, 0.0
        %v2308 = vmax.f32 %v2300, 0.0
        %v2309 = vmax.f32 %v2301, 0.0
        %v2310 = vmax.f32 %v2302, 0.0
        %v2311 = vmax.f32 %v2303, 0.0
        %v2320 = vrot.slane %v2304, 7
        %v2321 = vrot.slane %v2305, 7
        %v2322 = vsel %vm1400, %v2320, %v2321
        %v2323 = vrot.slane %v2306, 7
        %v2324 = vsel %vm1400, %v2321, %v2323
        %v2325 = vrot.slane %v2307, 7
        %v2326 = vsel %vm1400, %v2323, %v2325
        %v2327 = vrot.slane %v2308, 7
        %v2328 = vsel %vm1400, %v2325, %v2327
        %v2329 = vrot.slane %v2309, 7
        %v2330 = vsel %vm1400, %v2327, %v2329
        %v2331 = vrot.slane %v2310, 7
        %v2332 = vsel %vm1400, %v2329, %v2331
        %v2333 = vrot.slane %v2311, 7
        %v2334 = vsel %vm1400, %v2331, %v2333
        %v2343 = vsel %vm1400, 0.0, %v2320
        %v2344 = vsel %vm1106, %v2334, 0.0
        %v2346 = vrot.slane %v2343, 1
        %v2347 = vrot.slane %v2322, 1
        %v2348 = vsel %vm518, %v2346, %v2347
        %v2349 = vrot.slane %v2324, 1
        %v2350 = vsel %vm518, %v2347, %v2349
        %v2351 = vrot.slane %v2326, 1
        %v2352 = vsel %vm518, %v2349, %v2351
        %v2353 = vrot.slane %v2328, 1
        %v2354 = vsel %vm518, %v2351, %v2353
        %v2355 = vrot.slane %v2330, 1
        %v2356 = vsel %vm518, %v2353, %v2355
        %v2357 = vrot.slane %v2332, 1
        %v2358 = vsel %vm518, %v2355, %v2357
        %2359 = vrot.lane.b32.xlu0 %v2348, 60
        %v2360 = vpop.permute.xlu0 %2359
        %2361 = vrot.lane.b32.xlu0 %v2350, 60
        %v2362 = vpop.permute.xlu0 %2361
        %2363 = vrot.lane.b32.xlu0 %v2352, 60
        %v2364 = vpop.permute.xlu0 %2363
        %2365 = vrot.lane.b32.xlu0 %v2354, 60
        %v2366 = vpop.permute.xlu0 %2365
        %2367 = vrot.lane.b32.xlu0 %v2356, 60
        %v2368 = vpop.permute.xlu0 %2367
        %2369 = vrot.lane.b32.xlu0 %v2358, 60
        %v2370 = vpop.permute.xlu0 %2369
        %2371 = vrot.lane.b32.xlu0 %v2357, 60
        %v2372 = vpop.permute.xlu0 %2371
        %v2380 = vrot.slane %v2343, 2
        %v2381 = vrot.slane %v2322, 2
        %v2382 = vsel %vm665, %v2380, %v2381
        %v2383 = vrot.slane %v2324, 2
        %v2384 = vsel %vm665, %v2381, %v2383
        %v2385 = vrot.slane %v2326, 2
        %v2386 = vsel %vm665, %v2383, %v2385
        %v2387 = vrot.slane %v2328, 2
        %v2388 = vsel %vm665, %v2385, %v2387
        %v2389 = vrot.slane %v2330, 2
        %v2390 = vsel %vm665, %v2387, %v2389
        %v2391 = vrot.slane %v2332, 2
        %v2392 = vsel %vm665, %v2389, %v2391
        %2393 = vrot.lane.b32.xlu0 %v2382, 120
        %v2394 = vpop.permute.xlu0 %2393
        %2395 = vrot.lane.b32.xlu0 %v2384, 120
        %v2396 = vpop.permute.xlu0 %2395
        %2397 = vrot.lane.b32.xlu0 %v2386, 120
        %v2398 = vpop.permute.xlu0 %2397
        %2399 = vrot.lane.b32.xlu0 %v2388, 120
        %v2400 = vpop.permute.xlu0 %2399
        %2401 = vrot.lane.b32.xlu0 %v2390, 120
        %v2402 = vpop.permute.xlu0 %2401
        %2403 = vrot.lane.b32.xlu0 %v2392, 120
        %v2404 = vpop.permute.xlu0 %2403
        %2405 = vrot.lane.b32.xlu0 %v2391, 120
        %v2406 = vpop.permute.xlu0 %2405
        %v2414 = vrot.slane %v2343, 3
        %v2415 = vrot.slane %v2322, 3
        %v2416 = vsel %vm812, %v2414, %v2415
        %v2417 = vrot.slane %v2324, 3
        %v2418 = vsel %vm812, %v2415, %v2417
        %v2419 = vrot.slane %v2326, 3
        %v2420 = vsel %vm812, %v2417, %v2419
        %v2421 = vrot.slane %v2328, 3
        %v2422 = vsel %vm812, %v2419, %v2421
        %v2423 = vrot.slane %v2330, 3
        %v2424 = vsel %vm812, %v2421, %v2423
        %v2425 = vrot.slane %v2332, 3
        %v2426 = vsel %vm812, %v2423, %v2425
        %2427 = vrot.lane.b32.xlu0 %v2416, 52
        %v2428 = vpop.permute.xlu0 %2427
        %2429 = vrot.lane.b32.xlu0 %v2418, 52
        %v2430 = vpop.permute.xlu0 %2429
        %2431 = vrot.lane.b32.xlu0 %v2420, 52
        %v2432 = vpop.permute.xlu0 %2431
        %2433 = vrot.lane.b32.xlu0 %v2422, 52
        %v2434 = vpop.permute.xlu0 %2433
        %2435 = vrot.lane.b32.xlu0 %v2424, 52
        %v2436 = vpop.permute.xlu0 %2435
        %2437 = vrot.lane.b32.xlu0 %v2426, 52
        %v2438 = vpop.permute.xlu0 %2437
        %2439 = vrot.lane.b32.xlu0 %v2425, 52
        %v2440 = vpop.permute.xlu0 %2439
        %v2448 = vrot.slane %v2343, 4
        %v2449 = vrot.slane %v2322, 4
        %v2450 = vsel %vm959, %v2448, %v2449
        %v2451 = vrot.slane %v2324, 4
        %v2452 = vsel %vm959, %v2449, %v2451
        %v2453 = vrot.slane %v2326, 4
        %v2454 = vsel %vm959, %v2451, %v2453
        %v2455 = vrot.slane %v2328, 4
        %v2456 = vsel %vm959, %v2453, %v2455
        %v2457 = vrot.slane %v2330, 4
        %v2458 = vsel %vm959, %v2455, %v2457
        %v2459 = vrot.slane %v2332, 4
        %v2460 = vsel %vm959, %v2457, %v2459
        %2461 = vrot.lane.b32.xlu0 %v2450, 112
        %v2462 = vpop.permute.xlu0 %2461
        %2463 = vrot.lane.b32.xlu0 %v2452, 112
        %v2464 = vpop.permute.xlu0 %2463
        %2465 = vrot.lane.b32.xlu0 %v2454, 112
        %v2466 = vpop.permute.xlu0 %2465
        %2467 = vrot.lane.b32.xlu0 %v2456, 112
        %v2468 = vpop.permute.xlu0 %2467
        %2469 = vrot.lane.b32.xlu0 %v2458, 112
        %v2470 = vpop.permute.xlu0 %2469
        %2471 = vrot.lane.b32.xlu0 %v2460, 112
        %v2472 = vpop.permute.xlu0 %2471
        %2473 = vrot.lane.b32.xlu0 %v2459, 112
        %v2474 = vpop.permute.xlu0 %2473
        %v2483 = vrot.slane %v2343, 5
        %v2484 = vrot.slane %v2322, 5
        %v2485 = vsel %vm1106, %v2483, %v2484
        %v2486 = vrot.slane %v2324, 5
        %v2487 = vsel %vm1106, %v2484, %v2486
        %v2488 = vrot.slane %v2326, 5
        %v2489 = vsel %vm1106, %v2486, %v2488
        %v2490 = vrot.slane %v2328, 5
        %v2491 = vsel %vm1106, %v2488, %v2490
        %v2492 = vrot.slane %v2330, 5
        %v2493 = vsel %vm1106, %v2490, %v2492
        %v2494 = vrot.slane %v2332, 5
        %v2495 = vsel %vm1106, %v2492, %v2494
        %v2496 = vrot.slane %v2344, 5
        %v2497 = vsel %vm1106, %v2494, %v2496
        %2498 = vrot.lane.b32.xlu0 %v2485, 44
        %v2499 = vpop.permute.xlu0 %2498
        %2500 = vrot.lane.b32.xlu0 %v2487, 44
        %v2501 = vpop.permute.xlu0 %2500
        %2502 = vrot.lane.b32.xlu0 %v2489, 44
        %v2503 = vpop.permute.xlu0 %2502
        %2504 = vrot.lane.b32.xlu0 %v2491, 44
        %v2505 = vpop.permute.xlu0 %2504
        %2506 = vrot.lane.b32.xlu0 %v2493, 44
        %v2507 = vpop.permute.xlu0 %2506
        %2508 = vrot.lane.b32.xlu0 %v2495, 44
        %v2509 = vpop.permute.xlu0 %2508
        %2510 = vrot.lane.b32.xlu0 %v2497, 44
        %v2511 = vpop.permute.xlu0 %2510
        %v2519 = vrot.slane %v2343, 6
        %v2520 = vrot.slane %v2322, 6
        %v2521 = vsel %vm1253, %v2519, %v2520
        %v2522 = vrot.slane %v2324, 6
        %v2523 = vsel %vm1253, %v2520, %v2522
        %v2524 = vrot.slane %v2326, 6
        %v2525 = vsel %vm1253, %v2522, %v2524
        %v2526 = vrot.slane %v2328, 6
        %v2527 = vsel %vm1253, %v2524, %v2526
        %v2528 = vrot.slane %v2330, 6
        %v2529 = vsel %vm1253, %v2526, %v2528
        %v2530 = vrot.slane %v2332, 6
        %v2531 = vsel %vm1253, %v2528, %v2530
        %v2532 = vrot.slane %v2344, 6
        %v2533 = vsel %vm1253, %v2530, %v2532
        %2534 = vrot.lane.b32.xlu0 %v2521, 104
        %v2535 = vpop.permute.xlu0 %2534
        %2536 = vrot.lane.b32.xlu0 %v2523, 104
        %v2537 = vpop.permute.xlu0 %2536
        %2538 = vrot.lane.b32.xlu0 %v2525, 104
        %v2539 = vpop.permute.xlu0 %2538
        %2540 = vrot.lane.b32.xlu0 %v2527, 104
        %v2541 = vpop.permute.xlu0 %2540
        %2542 = vrot.lane.b32.xlu0 %v2529, 104
        %v2543 = vpop.permute.xlu0 %2542
        %2544 = vrot.lane.b32.xlu0 %v2531, 104
        %v2545 = vpop.permute.xlu0 %2544
        %2546 = vrot.lane.b32.xlu0 %v2533, 104
        %v2547 = vpop.permute.xlu0 %2546
        %v2555 = vrot.slane %v2343, 7
        %v2556 = vrot.slane %v2322, 7
        %v2557 = vsel %vm1400, %v2555, %v2556
        %v2558 = vrot.slane %v2324, 7
        %v2559 = vsel %vm1400, %v2556, %v2558
        %v2560 = vrot.slane %v2326, 7
        %v2561 = vsel %vm1400, %v2558, %v2560
        %v2562 = vrot.slane %v2328, 7
        %v2563 = vsel %vm1400, %v2560, %v2562
        %v2564 = vrot.slane %v2330, 7
        %v2565 = vsel %vm1400, %v2562, %v2564
        %v2566 = vrot.slane %v2332, 7
        %v2567 = vsel %vm1400, %v2564, %v2566
        %v2568 = vrot.slane %v2344, 7
        %v2569 = vsel %vm1400, %v2566, %v2568
        %2570 = vrot.lane.b32.xlu0 %v2557, 36
        %v2571 = vpop.permute.xlu0 %2570
        %2572 = vrot.lane.b32.xlu0 %v2559, 36
        %v2573 = vpop.permute.xlu0 %2572
        %2574 = vrot.lane.b32.xlu0 %v2561, 36
        %v2575 = vpop.permute.xlu0 %2574
        %2576 = vrot.lane.b32.xlu0 %v2563, 36
        %v2577 = vpop.permute.xlu0 %2576
        %2578 = vrot.lane.b32.xlu0 %v2565, 36
        %v2579 = vpop.permute.xlu0 %2578
        %2580 = vrot.lane.b32.xlu0 %v2567, 36
        %v2581 = vpop.permute.xlu0 %2580
        %2582 = vrot.lane.b32.xlu0 %v2569, 36
        %v2583 = vpop.permute.xlu0 %2582
        %2591 = vrot.lane.b32.xlu0 %v2322, 96
        %v2592 = vpop.permute.xlu0 %2591
        %2593 = vrot.lane.b32.xlu0 %v2324, 96
        %v2594 = vpop.permute.xlu0 %2593
        %2595 = vrot.lane.b32.xlu0 %v2326, 96
        %v2596 = vpop.permute.xlu0 %2595
        %2597 = vrot.lane.b32.xlu0 %v2328, 96
        %v2598 = vpop.permute.xlu0 %2597
        %2599 = vrot.lane.b32.xlu0 %v2330, 96
        %v2600 = vpop.permute.xlu0 %2599
        %2601 = vrot.lane.b32.xlu0 %v2332, 96
        %v2602 = vpop.permute.xlu0 %2601
        %2603 = vrot.lane.b32.xlu0 %v2344, 96
        %v2604 = vpop.permute.xlu0 %2603
        %v2612 = vsel %vm2187, %v2343, %v2360
        %v2613 = vsel %vm2187, %v2322, %v2362
        %v2614 = vsel %vm2187, %v2324, %v2364
        %v2615 = vsel %vm2187, %v2326, %v2366
        %v2616 = vsel %vm2187, %v2328, %v2368
        %v2617 = vsel %vm2187, %v2330, %v2370
        %v2618 = vsel %vm2187, %v2332, %v2372
        %vm2619 = vcmask 982016
        %v2620 = vsel %vm2619, %v2612, %v2394
        %v2621 = vsel %vm2619, %v2613, %v2396
        %v2622 = vsel %vm2619, %v2614, %v2398
        %v2623 = vsel %vm2619, %v2615, %v2400
        %v2624 = vsel %vm2619, %v2616, %v2402
        %v2625 = vsel %vm2619, %v2617, %v2404
        %v2626 = vsel %vm2619, %v2618, %v2406
        %vm2627 = vcmask 424960
        %v2628 = vsel %vm2627, %v2394, %v2428
        %v2629 = vsel %vm2627, %v2396, %v2430
        %v2630 = vsel %vm2627, %v2398, %v2432
        %v2631 = vsel %vm2627, %v2400, %v2434
        %v2632 = vsel %vm2627, %v2402, %v2436
        %v2633 = vsel %vm2627, %v2404, %v2438
        %v2634 = vsel %vm2627, %v2406, %v2440
        %vm2635 = vcmask 916480
        %v2636 = vsel %vm2635, %v2628, %v2462
        %v2637 = vsel %vm2635, %v2629, %v2464
        %v2638 = vsel %vm2635, %v2630, %v2466
        %v2639 = vsel %vm2635, %v2631, %v2468
        %v2640 = vsel %vm2635, %v2632, %v2470
        %v2641 = vsel %vm2635, %v2633, %v2472
        %v2642 = vsel %vm2635, %v2634, %v2474
        %vm2643 = vcmask 359424
        %v2644 = vsel %vm2643, %v2462, %v2499
        %v2645 = vsel %vm2643, %v2464, %v2501
        %v2646 = vsel %vm2643, %v2466, %v2503
        %v2647 = vsel %vm2643, %v2468, %v2505
        %v2648 = vsel %vm2643, %v2470, %v2507
        %v2649 = vsel %vm2643, %v2472, %v2509
        %v2650 = vsel %vm2643, %v2474, %v2511
        %vm2651 = vcmask 850944
        %v2652 = vsel %vm2651, %v2644, %v2535
        %v2653 = vsel %vm2651, %v2645, %v2537
        %v2654 = vsel %vm2651, %v2646, %v2539
        %v2655 = vsel %vm2651, %v2647, %v2541
        %v2656 = vsel %vm2651, %v2648, %v2543
        %v2657 = vsel %vm2651, %v2649, %v2545
        %v2658 = vsel %vm2651, %v2650, %v2547
        %v2659 = vsel %vm1886, %v2535, %v2571
        %v2660 = vsel %vm1886, %v2537, %v2573
        %v2661 = vsel %vm1886, %v2539, %v2575
        %v2662 = vsel %vm1886, %v2541, %v2577
        %v2663 = vsel %vm1886, %v2543, %v2579
        %v2664 = vsel %vm1886, %v2545, %v2581
        %v2665 = vsel %vm1886, %v2547, %v2583
        %vm2666 = vcmask 785408
        %v2667 = vsel %vm2666, %v2659, %v2592
        %v2668 = vsel %vm2666, %v2660, %v2594
        %v2669 = vsel %vm2666, %v2661, %v2596
        %v2670 = vsel %vm2666, %v2662, %v2598
        %v2671 = vsel %vm2666, %v2663, %v2600
        %v2672 = vsel %vm2666, %v2664, %v2602
        %v2673 = vsel %vm2666, %v2665, %v2604
        %v2674 = vld [vmem:[%s5] sm:$0xff]
        %v2675 = vld [vmem:[%s5 + $0x8] sm:$0xff]
        %v2676 = vld [vmem:[%s5 + $0x10] sm:$0xff]
        %v2677 = vld [vmem:[%s5 + $0x18] sm:$0xff]
        %v2678 = vld [vmem:[%s5 + $0x20] sm:$0xff]
        %v2679 = vld [vmem:[%s5 + $0x28] sm:$0xff]
        %v2680 = vld [vmem:[%s5 + $0x30] sm:$0xff]
        %v2681 = vld [vmem:[%s5 + $0x38] sm:$0xff]
        %v2682 = vld [vmem:[%s5 + $0x40] sm:$0xff]
        %v2683 = vld [vmem:[%s5 + $0x48] sm:$0xff]
        %v2684 = vld [vmem:[%s5 + $0x50] sm:$0xff]
        %v2685 = vld [vmem:[%s5 + $0x58] sm:$0xff]
        %v2686 = vld [vmem:[%s5 + $0x60] sm:$0xff]
        %v2687 = vld [vmem:[%s5 + $0x68] sm:$0xff]
        %v2688 = vld [vmem:[%s5 + $0x70] sm:$0xff]
        %v2689 = vld [vmem:[%s5 + $0x78] sm:$0xff]
        %v2690 = vld [vmem:[%s5 + $0x80] sm:$0xff]
        %v2691 = vld [vmem:[%s5 + $0x88] sm:$0xff]
        %v2692 = vld [vmem:[%s5 + $0x90] sm:$0xff]
        %v2693 = vld [vmem:[%s5 + $0x98] sm:$0xff]
        %v2694 = vld [vmem:[%s5 + $0xa0] sm:$0xff]
        %v2695 = vld [vmem:[%s5 + $0xa8] sm:$0xff]
        %v2696 = vld [vmem:[%s5 + $0xb0] sm:$0xff]
        %v2697 = vld [vmem:[%s5 + $0xb8] sm:$0xff]
        %v2698 = vld [vmem:[%s5 + $0xc0] sm:$0xff]
        %v2699 = vld [vmem:[%s5 + $0xc8] sm:$0xff]
        %v2700 = vld [vmem:[%s5 + $0xd0] sm:$0xff]
        %v2701 = vld [vmem:[%s5 + $0xd8] sm:$0xff]
        %v2702 = vld [vmem:[%s5 + $0xe0] sm:$0xff]
        %v2703 = vld [vmem:[%s5 + $0xe8] sm:$0xff]
        %v2704 = vld [vmem:[%s5 + $0xf0] sm:$0xff]
        %v2705 = vld [vmem:[%s5 + $0xf8] sm:$0xff]
        %v2706 = vld [vmem:[%s5 + $0x100] sm:$0xff]
        %v2707 = vld [vmem:[%s5 + $0x108] sm:$0xff]
        %v2708 = vld [vmem:[%s5 + $0x110] sm:$0xff]
        %v2709 = vld [vmem:[%s5 + $0x118] sm:$0xff]
        %v2710 = vld [vmem:[%s5 + $0x120] sm:$0xff]
        %v2711 = vld [vmem:[%s5 + $0x128] sm:$0xff]
        %v2712 = vld [vmem:[%s5 + $0x130] sm:$0xff]
        %v2713 = vld [vmem:[%s5 + $0x138] sm:$0xff]
        %v2714 = vld [vmem:[%s5 + $0x140] sm:$0xff]
        %v2715 = vld [vmem:[%s5 + $0x148] sm:$0xff]
        %v2716 = vld [vmem:[%s5 + $0x150] sm:$0xff]
        %v2717 = vld [vmem:[%s5 + $0x158] sm:$0xff]
        %v2718 = vld [vmem:[%s5 + $0x160] sm:$0xff]
        %v2719 = vld [vmem:[%s5 + $0x168] sm:$0xff]
        %v2720 = vld [vmem:[%s5 + $0x170] sm:$0xff]
        %v2721 = vld [vmem:[%s5 + $0x178] sm:$0xff]
        %v2722 = vld [vmem:[%s5 + $0x180] sm:$0xff]
        %v2723 = vld [vmem:[%s5 + $0x188] sm:$0xff]
        %v2724 = vld [vmem:[%s5 + $0x190] sm:$0xff]
        %v2725 = vld [vmem:[%s5 + $0x198] sm:$0xff]
        %v2726 = vld [vmem:[%s5 + $0x1a0] sm:$0xff]
        %v2727 = vld [vmem:[%s5 + $0x1a8] sm:$0xff]
        %v2728 = vld [vmem:[%s5 + $0x1b0] sm:$0xff]
        %v2729 = vld [vmem:[%s5 + $0x1b8] sm:$0xff]
        %v2730 = vld [vmem:[%s5 + $0x1c0] sm:$0xff]
        %v2731 = vld [vmem:[%s5 + $0x1c8] sm:$0xff]
        %v2732 = vld [vmem:[%s5 + $0x1d0] sm:$0xff]
        %v2733 = vld [vmem:[%s5 + $0x1d8] sm:$0xff]
        %v2734 = vld [vmem:[%s5 + $0x1e0] sm:$0xff]
        %v2735 = vld [vmem:[%s5 + $0x1e8] sm:$0xff]
        %v2736 = vld [vmem:[%s5 + $0x1f0] sm:$0xff]
        %v2737 = vld [vmem:[%s5 + $0x1f8] sm:$0xff]
        %v2738 = vld [vmem:[%s5 + $0x200] sm:$0xff]
        %v2739 = vld [vmem:[%s5 + $0x208] sm:$0xff]
        %v2740 = vld [vmem:[%s5 + $0x210] sm:$0xff]
        %v2741 = vld [vmem:[%s5 + $0x218] sm:$0xf]
        %v2742 = vld [vmem:[%s6] sm:$0x1]
        %v2744 = vlaneseq
        %v2745 = vshrl.u32 %v2744, 7
        %v2746 = vsub.s32 0, %v2745
        %v2747 = vrot.slane %v2742, %v2746
        %v2749 = vsel %vm1814, %v2592, 0
        %v2751 = vsel %vm1814, %v2594, 0
        %v2753 = vsel %vm1814, %v2596, 0
        %v2755 = vsel %vm1814, %v2598, 0
        %v2757 = vsel %vm1814, %v2600, 0
        %v2759 = vsel %vm1814, %v2602, 0
        %v2761 = vsel %vm1814, %v2604, 0
        %v2764 = vsel %vm959, %v2741, 0
        %2766 = vmatprep.subr.mxu0 0.0
        %2767 = vmatpush1.msra.mxu0 %v2674
        %2768 = vmatprep.subr.mxu0 0.0
        %2769 = vmatpush1.msra.mxu0 %v2675
        %2770 = vmatprep.subr.mxu0 0.0
        %2771 = vmatpush1.msra.mxu0 %v2676
        %2772 = vmatprep.subr.mxu0 0.0
        %2773 = vmatpush1.msra.mxu0 %v2677
        %2774 = vmatprep.subr.mxu0 0.0
        %2775 = vmatpush1.msra.mxu0 %v2678
        %2776 = vmatprep.subr.mxu0 0.0
        %2777 = vmatpush1.msra.mxu0 %v2679
        %2778 = vmatprep.subr.mxu0 0.0
        %2779 = vmatpush1.msra.mxu0 %v2680
        %2780 = vmatprep.subr.mxu0 0.0
        %2781 = vmatpush1.msra.mxu0 %v2681
        %2782 = vmatprep.subr.mxu0 0.0
        %2783 = vmatpush1.msra.mxu0 %v2682
        %2784 = vmatprep.subr.mxu0 0.0
        %2785 = vmatpush1.msra.mxu0 %v2683
        %2786 = vmatprep.subr.mxu0 0.0
        %2787 = vmatpush1.msra.mxu0 %v2684
        %2788 = vmatprep.subr.mxu0 0.0
        %2789 = vmatpush1.msra.mxu0 %v2685
        %2790 = vmatprep.subr.mxu0 0.0
        %2791 = vmatpush1.msra.mxu0 %v2686
        %2792 = vmatprep.subr.mxu0 0.0
        %2793 = vmatpush1.msra.mxu0 %v2687
        %2794 = vmatprep.subr.mxu0 0.0
        %2795 = vmatpush1.msra.mxu0 %v2688
        %2796 = vmatprep.subr.mxu0 0.0
        %2797 = vmatpush1.msra.mxu0 %v2689
        %2798 = vmatprep.subr.mxu0 0.0
        %2799 = vmatpush1.msra.mxu0 %v2690
        %2800 = vmatprep.subr.mxu0 0.0
        %2801 = vmatpush1.msra.mxu0 %v2691
        %2802 = vmatprep.subr.mxu0 0.0
        %2803 = vmatpush1.msra.mxu0 %v2692
        %2804 = vmatprep.subr.mxu0 0.0
        %2805 = vmatpush1.msra.mxu0 %v2693
        %2806 = vmatprep.subr.mxu0 0.0
        %2807 = vmatpush1.msra.mxu0 %v2694
        %2808 = vmatprep.subr.mxu0 0.0
        %2809 = vmatpush1.msra.mxu0 %v2695
        %2810 = vmatprep.subr.mxu0 0.0
        %2811 = vmatpush1.msra.mxu0 %v2696
        %2812 = vmatprep.subr.mxu0 0.0
        %2813 = vmatpush1.msra.mxu0 %v2697
        %2814 = vmatprep.subr.mxu0 0.0
        %2815 = vmatpush1.msra.mxu0 %v2698
        %2816 = vmatprep.subr.mxu0 0.0
        %2817 = vmatpush1.msra.mxu0 %v2699
        %2818 = vmatprep.subr.mxu0 0.0
        %2819 = vmatpush1.msra.mxu0 %v2700
        %2820 = vmatprep.subr.mxu0 0.0
        %2821 = vmatpush1.msra.mxu0 %v2701
        %2822 = vmatprep.subr.mxu0 0.0
        %2823 = vmatpush1.msra.mxu0 %v2702
        %2824 = vmatprep.subr.mxu0 0.0
        %2825 = vmatpush1.msra.mxu0 %v2703
        %2826 = vmatprep.subr.mxu0 0.0
        %2827 = vmatpush1.msra.mxu0 %v2704
        %2828 = vmatprep.subr.mxu0 0.0
        %2829 = vmatpush1.msra.mxu0 %v2705
        %2830 = vmatprep.mubr.f32.mxu0 %v2636
        %2831 = vmatmul.mubr.f32.gmra.mrb[0].mxu0 %v2620
        %v2832 = vpop.f32.mrb[0].mxu0
        %v2833 = vadd.f32 %v2747, %v2832
        %v2834 = vpop.f32.mrb[0].mxu0
        %2835 = vmatprep.mubr.f32.mxu0 %v2637
        %2836 = vmatmul.mubr.f32.gmra.mrb[0].mxu0 %v2621
        %v2837 = vpop.f32.mrb[0].mxu0
        %v2838 = vadd.f32 %v2747, %v2837
        %v2839 = vpop.f32.mrb[0].mxu0
        %2840 = vmatprep.mubr.f32.mxu0 %v2638
        %2841 = vmatmul.mubr.f32.gmra.mrb[0].mxu0 %v2622
        %v2842 = vpop.f32.mrb[0].mxu0
        %v2843 = vadd.f32 %v2747, %v2842
        %v2844 = vpop.f32.mrb[0].mxu0
        %2845 = vmatprep.mubr.f32.mxu0 %v2639
        %2846 = vmatmul.mubr.f32.gmra.mrb[0].mxu0 %v2623
        %v2847 = vpop.f32.mrb[0].mxu0
        %v2848 = vadd.f32 %v2747, %v2847
        %v2849 = vpop.f32.mrb[0].mxu0
        %2850 = vmatprep.mubr.f32.mxu0 %v2640
        %2851 = vmatmul.mubr.f32.gmra.mrb[0].mxu0 %v2624
        %v2852 = vpop.f32.mrb[0].mxu0
        %v2853 = vadd.f32 %v2747, %v2852
        %v2854 = vpop.f32.mrb[0].mxu0
        %2855 = vmatprep.mubr.f32.mxu0 %v2641
        %2856 = vmatmul.mubr.f32.gmra.mrb[0].mxu0 %v2625
        %v2857 = vpop.f32.mrb[0].mxu0
        %v2858 = vadd.f32 %v2747, %v2857
        %v2859 = vpop.f32.mrb[0].mxu0
        %2860 = vmatprep.mubr.f32.mxu0 %v2642
        %2861 = vmatmul.mubr.f32.gmra.mrb[0].mxu0 %v2626
        %v2862 = vpop.f32.mrb[0].mxu0
        %v2863 = vadd.f32 %v2747, %v2862
        %v2864 = vpop.f32.mrb[0].mxu0
        %2865 = vdwg.mxu0
        %2866 = vmatprep.subr.mxu0 0.0
        %2867 = vmatpush1.msra.mxu0 %v2706
        %2868 = vmatprep.subr.mxu0 0.0
        %2869 = vmatpush1.msra.mxu0 %v2707
        %2870 = vmatprep.subr.mxu0 0.0
        %2871 = vmatpush1.msra.mxu0 %v2708
        %2872 = vmatprep.subr.mxu0 0.0
        %2873 = vmatpush1.msra.mxu0 %v2709
        %2874 = vmatprep.subr.mxu0 0.0
        %2875 = vmatpush1.msra.mxu0 %v2710
        %2876 = vmatprep.subr.mxu0 0.0
        %2877 = vmatpush1.msra.mxu0 %v2711
        %2878 = vmatprep.subr.mxu0 0.0
        %2879 = vmatpush1.msra.mxu0 %v2712
        %2880 = vmatprep.subr.mxu0 0.0
        %2881 = vmatpush1.msra.mxu0 %v2713
        %2882 = vmatprep.subr.mxu0 0.0
        %2883 = vmatpush1.msra.mxu0 %v2714
        %2884 = vmatprep.subr.mxu0 0.0
        %2885 = vmatpush1.msra.mxu0 %v2715
        %2886 = vmatprep.subr.mxu0 0.0
        %2887 = vmatpush1.msra.mxu0 %v2716
        %2888 = vmatprep.subr.mxu0 0.0
        %2889 = vmatpush1.msra.mxu0 %v2717
        %2890 = vmatprep.subr.mxu0 0.0
        %2891 = vmatpush1.msra.mxu0 %v2718
        %2892 = vmatprep.subr.mxu0 0.0
        %2893 = vmatpush1.msra.mxu0 %v2719
        %2894 = vmatprep.subr.mxu0 0.0
        %2895 = vmatpush1.msra.mxu0 %v2720
        %2896 = vmatprep.subr.mxu0 0.0
        %2897 = vmatpush1.msra.mxu0 %v2721
        %2898 = vmatprep.subr.mxu0 0.0
        %2899 = vmatpush1.msra.mxu0 %v2722
        %2900 = vmatprep.subr.mxu0 0.0
        %2901 = vmatpush1.msra.mxu0 %v2723
        %2902 = vmatprep.subr.mxu0 0.0
        %2903 = vmatpush1.msra.mxu0 %v2724
        %2904 = vmatprep.subr.mxu0 0.0
        %2905 = vmatpush1.msra.mxu0 %v2725
        %2906 = vmatprep.subr.mxu0 0.0
        %2907 = vmatpush1.msra.mxu0 %v2726
        %2908 = vmatprep.subr.mxu0 0.0
        %2909 = vmatpush1.msra.mxu0 %v2727
        %2910 = vmatprep.subr.mxu0 0.0
        %2911 = vmatpush1.msra.mxu0 %v2728
        %2912 = vmatprep.subr.mxu0 0.0
        %2913 = vmatpush1.msra.mxu0 %v2729
        %2914 = vmatprep.subr.mxu0 0.0
        %2915 = vmatpush1.msra.mxu0 %v2730
        %2916 = vmatprep.subr.mxu0 0.0
        %2917 = vmatpush1.msra.mxu0 %v2731
        %2918 = vmatprep.subr.mxu0 0.0
        %2919 = vmatpush1.msra.mxu0 %v2732
        %2920 = vmatprep.subr.mxu0 0.0
        %2921 = vmatpush1.msra.mxu0 %v2733
        %2922 = vmatprep.subr.mxu0 0.0
        %2923 = vmatpush1.msra.mxu0 %v2734
        %2924 = vmatprep.subr.mxu0 0.0
        %2925 = vmatpush1.msra.mxu0 %v2735
        %2926 = vmatprep.subr.mxu0 0.0
        %2927 = vmatpush1.msra.mxu0 %v2736
        %2928 = vmatprep.subr.mxu0 0.0
        %2929 = vmatpush1.msra.mxu0 %v2737
        %2930 = vmatprep.mubr.f32.mxu0 %v2667
        %2931 = vmatmul.mubr.f32.gmra.mrb[0].mxu0 %v2652
        %v2932 = vpop.f32.mrb[0].mxu0
        %v2933 = vadd.f32 %v2833, %v2932
        %v2934 = vpop.f32.mrb[0].mxu0
        %2935 = vmatprep.mubr.f32.mxu0 %v2668
        %2936 = vmatmul.mubr.f32.gmra.mrb[0].mxu0 %v2653
        %v2937 = vpop.f32.mrb[0].mxu0
        %v2938 = vadd.f32 %v2838, %v2937
        %v2939 = vpop.f32.mrb[0].mxu0
        %2940 = vmatprep.mubr.f32.mxu0 %v2669
        %2941 = vmatmul.mubr.f32.gmra.mrb[0].mxu0 %v2654
        %v2942 = vpop.f32.mrb[0].mxu0
        %v2943 = vadd.f32 %v2843, %v2942
        %v2944 = vpop.f32.mrb[0].mxu0
        %2945 = vmatprep.mubr.f32.mxu0 %v2670
        %2946 = vmatmul.mubr.f32.gmra.mrb[0].mxu0 %v2655
        %v2947 = vpop.f32.mrb[0].mxu0
        %v2948 = vadd.f32 %v2848, %v2947
        %v2949 = vpop.f32.mrb[0].mxu0
        %2950 = vmatprep.mubr.f32.mxu0 %v2671
        %2951 = vmatmul.mubr.f32.gmra.mrb[0].mxu0 %v2656
        %v2952 = vpop.f32.mrb[0].mxu0
        %v2953 = vadd.f32 %v2853, %v2952
        %v2954 = vpop.f32.mrb[0].mxu0
        %2955 = vmatprep.mubr.f32.mxu0 %v2672
        %2956 = vmatmul.mubr.f32.gmra.mrb[0].mxu0 %v2657
        %v2957 = vpop.f32.mrb[0].mxu0
        %v2958 = vadd.f32 %v2858, %v2957
        %v2959 = vpop.f32.mrb[0].mxu0
        %2960 = vmatprep.mubr.f32.mxu0 %v2673
        %2961 = vmatmul.mubr.f32.gmra.mrb[0].mxu0 %v2658
        %v2962 = vpop.f32.mrb[0].mxu0
        %v2963 = vadd.f32 %v2863, %v2962
        %v2964 = vpop.f32.mrb[0].mxu0
        %2965 = vdwg.mxu0
        %2966 = vmatprep.subr.mxu0 0.0
        %2967 = vmatpush1.msra.mxu0 %v2738
        %2968 = vmatprep.subr.mxu0 0.0
        %2969 = vmatpush1.msra.mxu0 %v2739
        %2970 = vmatprep.subr.mxu0 0.0
        %2971 = vmatpush1.msra.mxu0 %v2740
        %2972 = vmatprep.subr.mxu0 0.0
        %2973 = vmatpush1.msra.mxu0 %v2764
        %2974 = vmatprep.subr.mxu0 0.0
        %2975 = vmatpush1.msra.mxu0 0.0
        %2976 = vmatprep.subr.mxu0 0.0
        %2977 = vmatpush1.msra.mxu0 0.0
        %2978 = vmatprep.subr.mxu0 0.0
        %2979 = vmatpush1.msra.mxu0 0.0
        %2980 = vmatprep.subr.mxu0 0.0
        %2981 = vmatpush1.msra.mxu0 0.0
        %2982 = vmatprep.subr.mxu0 0.0
        %2983 = vmatpush1.msra.mxu0 0.0
        %2984 = vmatprep.subr.mxu0 0.0
        %2985 = vmatpush1.msra.mxu0 0.0
        %2986 = vmatprep.subr.mxu0 0.0
        %2987 = vmatpush1.msra.mxu0 0.0
        %2988 = vmatprep.subr.mxu0 0.0
        %2989 = vmatpush1.msra.mxu0 0.0
        %2990 = vmatprep.subr.mxu0 0.0
        %2991 = vmatpush1.msra.mxu0 0.0
        %2992 = vmatprep.subr.mxu0 0.0
        %2993 = vmatpush1.msra.mxu0 0.0
        %2994 = vmatprep.subr.mxu0 0.0
        %2995 = vmatpush1.msra.mxu0 0.0
        %2996 = vmatprep.subr.mxu0 0.0
        %2997 = vmatpush1.msra.mxu0 0.0
        %2998 = vmatprep.subr.mxu0 0.0
        %2999 = vmatpush1.msra.mxu0 0.0
        %3000 = vmatprep.subr.mxu0 0.0
        %3001 = vmatpush1.msra.mxu0 0.0
        %3002 = vmatprep.subr.mxu0 0.0
        %3003 = vmatpush1.msra.mxu0 0.0
        %3004 = vmatprep.subr.mxu0 0.0
        %3005 = vmatpush1.msra.mxu0 0.0
        %3006 = vmatprep.subr.mxu0 0.0
        %3007 = vmatpush1.msra.mxu0 0.0
        %3008 = vmatprep.subr.mxu0 0.0
        %3009 = vmatpush1.msra.mxu0 0.0
        %3010 = vmatprep.subr.mxu0 0.0
        %3011 = vmatpush1.msra.mxu0 0.0
        %3012 = vmatprep.subr.mxu0 0.0
        %3013 = vmatpush1.msra.mxu0 0.0
        %3014 = vmatprep.subr.mxu0 0.0
        %3015 = vmatpush1.msra.mxu0 0.0
        %3016 = vmatprep.subr.mxu0 0.0
        %3017 = vmatpush1.msra.mxu0 0.0
        %3018 = vmatprep.subr.mxu0 0.0
        %3019 = vmatpush1.msra.mxu0 0.0
        %3020 = vmatprep.subr.mxu0 0.0
        %3021 = vmatpush1.msra.mxu0 0.0
        %3022 = vmatprep.subr.mxu0 0.0
        %3023 = vmatpush1.msra.mxu0 0.0
        %3024 = vmatprep.subr.mxu0 0.0
        %3025 = vmatpush1.msra.mxu0 0.0
        %3026 = vmatprep.subr.mxu0 0.0
        %3027 = vmatpush1.msra.mxu0 0.0
        %3028 = vmatprep.subr.mxu0 0.0
        %3029 = vmatpush1.msra.mxu0 0.0
        %3030 = vmatprep.mubr.f32.mxu0 0.0
        %3031 = vmatmul.mubr.f32.gmra.mrb[0].mxu0 %v2749
        %v3032 = vpop.f32.mrb[0].mxu0
        %v3033 = vadd.f32 %v2933, %v3032
        %v3034 = vpop.f32.mrb[0].mxu0
        %3035 = vmatprep.mubr.f32.mxu0 0.0
        %3036 = vmatmul.mubr.f32.gmra.mrb[0].mxu0 %v2751
        %v3037 = vpop.f32.mrb[0].mxu0
        %v3038 = vadd.f32 %v2938, %v3037
        %v3039 = vpop.f32.mrb[0].mxu0
        %3040 = vmatprep.mubr.f32.mxu0 0.0
        %3041 = vmatmul.mubr.f32.gmra.mrb[0].mxu0 %v2753
        %v3042 = vpop.f32.mrb[0].mxu0
        %v3043 = vadd.f32 %v2943, %v3042
        %v3044 = vpop.f32.mrb[0].mxu0
        %3045 = vmatprep.mubr.f32.mxu0 0.0
        %3046 = vmatmul.mubr.f32.gmra.mrb[0].mxu0 %v2755
        %v3047 = vpop.f32.mrb[0].mxu0
        %v3048 = vadd.f32 %v2948, %v3047
        %v3049 = vpop.f32.mrb[0].mxu0
        %3050 = vmatprep.mubr.f32.mxu0 0.0
        %3051 = vmatmul.mubr.f32.gmra.mrb[0].mxu0 %v2757
        %v3052 = vpop.f32.mrb[0].mxu0
        %v3053 = vadd.f32 %v2953, %v3052
        %v3054 = vpop.f32.mrb[0].mxu0
        %3055 = vmatprep.mubr.f32.mxu0 0.0
        %3056 = vmatmul.mubr.f32.gmra.mrb[0].mxu0 %v2759
        %v3057 = vpop.f32.mrb[0].mxu0
        %v3058 = vadd.f32 %v2958, %v3057
        %v3059 = vpop.f32.mrb[0].mxu0
        %3060 = vmatprep.mubr.f32.mxu0 0.0
        %3061 = vmatmul.mubr.f32.gmra.mrb[0].mxu0 %v2761
        %v3062 = vpop.f32.mrb[0].mxu0
        %v3063 = vadd.f32 %v2963, %v3062
        %v3064 = vpop.f32.mrb[0].mxu0
        %3065 = vdwg.mxu0
        %vm3066 = vcmask 326656
        %3067 = vst.msk [vmem:[#allocation3] sm:$0xff] %vm3066, %v3033
        %3068 = vst.msk [vmem:[#allocation3 + $0x8] sm:$0xff] %vm3066, %v3038
        %3069 = vst.msk [vmem:[#allocation3 + $0x10] sm:$0xff] %vm3066, %v3043
        %3070 = vst.msk [vmem:[#allocation3 + $0x18] sm:$0xff] %vm3066, %v3048
        %3071 = vst.msk [vmem:[#allocation3 + $0x20] sm:$0xff] %vm3066, %v3053
        %3072 = vst.msk [vmem:[#allocation3 + $0x28] sm:$0xff] %vm3066, %v3058
        %vm3073 = vcmask 322560
        %3074 = vst.msk [vmem:[#allocation3 + $0x30] sm:$0xf] %vm3073, %v3063
        %v3075 = vld [vmem:[#allocation3] ss:$4 sm:$0xff]
        %s3076 = scalar_lea.vmem [#allocation3], 32
        %v3077 = vld [vmem:[%s3076] ss:$4 sm:$0x1f]
        %s3078 = scalar_lea.vmem [#allocation3], 1
        %v3079 = vld [vmem:[%s3078] ss:$4 sm:$0xff]
        %s3080 = scalar_lea.vmem [#allocation3], 33
        %v3081 = vld [vmem:[%s3080] ss:$4 sm:$0x1f]
        %v3082 = vmax.f32 %v3075, %v3079
        %v3083 = vmax.f32 %v3077, %v3081
        %s3084 = scalar_lea.vmem [#allocation3], 2
        %v3085 = vld [vmem:[%s3084] ss:$4 sm:$0xff]
        %s3086 = scalar_lea.vmem [#allocation3], 34
        %v3087 = vld [vmem:[%s3086] ss:$4 sm:$0x1f]
        %v3088 = vmax.f32 %v3082, %v3085
        %v3089 = vmax.f32 %v3083, %v3087
        %s3090 = scalar_lea.vmem [#allocation3], 3
        %v3091 = vld [vmem:[%s3090] ss:$4 sm:$0xff]
        %s3092 = scalar_lea.vmem [#allocation3], 35
        %v3093 = vld [vmem:[%s3092] ss:$4 sm:$0x1f]
        %v3094 = vmax.f32 %v3088, %v3091
        %v3095 = vmax.f32 %v3089, %v3093
        %v3096 = vmax.f32 %v3094, 0.0
        %v3097 = vmax.f32 %v3095, 0.0
        %v3099 = vrot.slane %v3096, 1
        %3100 = vrot.lane.b32.xlu0 %v3099, 40
        %v3101 = vpop.permute.xlu0 %3100
        %v3103 = vrot.slane %v3096, 2
        %3104 = vrot.lane.b32.xlu0 %v3103, 80
        %v3105 = vpop.permute.xlu0 %3104
        %v3107 = vrot.slane %v3096, 3
        %3108 = vrot.lane.b32.xlu0 %v3107, 120
        %v3109 = vpop.permute.xlu0 %3108
        %v3112 = vrot.slane %v3096, 4
        %v3113 = vrot.slane %v3097, 4
        %v3114 = vsel %vm959, %v3112, %v3113
        %3115 = vrot.lane.b32.xlu0 %v3114, 32
        %v3116 = vpop.permute.xlu0 %3115
        %v3118 = vrot.slane %v3096, 5
        %v3119 = vrot.slane %v3097, 5
        %v3120 = vsel %vm1106, %v3118, %v3119
        %3121 = vrot.lane.b32.xlu0 %v3120, 72
        %v3122 = vpop.permute.xlu0 %3121
        %v3124 = vrot.slane %v3096, 6
        %v3125 = vrot.slane %v3097, 6
        %v3126 = vsel %vm1253, %v3124, %v3125
        %3127 = vrot.lane.b32.xlu0 %v3126, 112
        %v3128 = vpop.permute.xlu0 %3127
        %v3130 = vrot.slane %v3096, 7
        %v3131 = vrot.slane %v3097, 7
        %v3132 = vsel %vm1400, %v3130, %v3131
        %3133 = vrot.lane.b32.xlu0 %v3132, 24
        %v3134 = vpop.permute.xlu0 %3133
        %3136 = vrot.lane.b32.xlu0 %v3097, 64
        %v3137 = vpop.permute.xlu0 %3136
        %v3139 = vsel %vm3066, %v3096, %v3101
        %vm3140 = vcmask 654336
        %v3141 = vsel %vm3140, %v3139, %v3105
        %v3142 = vsel %vm2619, %v3141, %v3109
        %v3143 = vsel %vm1844, %v3109, %v3116
        %vm3144 = vcmask 588800
        %v3145 = vsel %vm3144, %v3143, %v3122
        %v3146 = vsel %vm2635, %v3145, %v3128
        %v3147 = vsel %vm1784, %v3128, %v3134
        %vm3148 = vcmask 523264
        %v3149 = vsel %vm3148, %v3147, %v3137
        %v3150 = vld [vmem:[%s7] sm:$0xff]
        %v3151 = vld [vmem:[%s7 + $0x8] sm:$0xff]
        %v3152 = vld [vmem:[%s7 + $0x10] sm:$0xff]
        %v3153 = vld [vmem:[%s7 + $0x18] sm:$0xff]
        %v3154 = vld [vmem:[%s7 + $0x20] sm:$0xff]
        %v3155 = vld [vmem:[%s7 + $0x28] sm:$0xff]
        %v3156 = vld [vmem:[%s7 + $0x30] sm:$0xff]
        %v3157 = vld [vmem:[%s7 + $0x38] sm:$0xff]
        %v3158 = vld [vmem:[%s7 + $0x40] sm:$0xff]
        %v3159 = vld [vmem:[%s7 + $0x48] sm:$0xff]
        %v3160 = vld [vmem:[%s7 + $0x50] sm:$0xff]
        %v3161 = vld [vmem:[%s7 + $0x58] sm:$0xff]
        %v3162 = vld [vmem:[%s7 + $0x60] sm:$0xff]
        %v3163 = vld [vmem:[%s7 + $0x68] sm:$0xff]
        %v3164 = vld [vmem:[%s7 + $0x70] sm:$0xff]
        %v3165 = vld [vmem:[%s7 + $0x78] sm:$0xff]
        %v3166 = vld [vmem:[%s7 + $0x80] sm:$0xff]
        %v3167 = vld [vmem:[%s7 + $0x88] sm:$0xff]
        %v3168 = vld [vmem:[%s7 + $0x90] sm:$0xff]
        %v3169 = vld [vmem:[%s7 + $0x98] sm:$0xff]
        %v3170 = vld [vmem:[%s7 + $0xa0] sm:$0xff]
        %v3171 = vld [vmem:[%s7 + $0xa8] sm:$0xff]
        %v3172 = vld [vmem:[%s7 + $0xb0] sm:$0xff]
        %v3173 = vld [vmem:[%s7 + $0xb8] sm:$0xff]
        %v3174 = vld [vmem:[%s7 + $0xc0] sm:$0xff]
        %v3175 = vld [vmem:[%s7 + $0xc8] sm:$0xff]
        %v3176 = vld [vmem:[%s7 + $0xd0] sm:$0xff]
        %v3177 = vld [vmem:[%s7 + $0xd8] sm:$0xff]
        %v3178 = vld [vmem:[%s7 + $0xe0] sm:$0xff]
        %v3179 = vld [vmem:[%s7 + $0xe8] sm:$0xff]
        %v3180 = vld [vmem:[%s7 + $0xf0] sm:$0xff]
        %v3181 = vld [vmem:[%s7 + $0xf8] sm:$0xff]
        %v3182 = vld [vmem:[%s7 + $0x100] sm:$0xff]
        %v3183 = vld [vmem:[%s7 + $0x108] sm:$0xff]
        %v3184 = vld [vmem:[%s7 + $0x110] sm:$0xff]
        %v3185 = vld [vmem:[%s7 + $0x118] sm:$0xff]
        %v3186 = vld [vmem:[%s7 + $0x120] sm:$0xff]
        %v3187 = vld [vmem:[%s7 + $0x128] sm:$0xff]
        %v3188 = vld [vmem:[%s7 + $0x130] sm:$0xff]
        %v3189 = vld [vmem:[%s7 + $0x138] sm:$0xff]
        %v3190 = vld [vmem:[%s7 + $0x140] sm:$0xff]
        %v3191 = vld [vmem:[%s7 + $0x148] sm:$0xff]
        %v3192 = vld [vmem:[%s7 + $0x150] sm:$0xff]
        %v3193 = vld [vmem:[%s7 + $0x158] sm:$0xff]
        %v3194 = vld [vmem:[%s7 + $0x160] sm:$0xff]
        %v3195 = vld [vmem:[%s8] sm:$0x1]
        %v3197 = vlaneseq
        %v3198 = vshrl.u32 %v3197, 7
        %v3199 = vsub.s32 0, %v3198
        %v3200 = vrot.slane %v3195, %v3199
        %v3203 = vsel %vm2651, %v3149, 0
        %3205 = vmatprep.subr.mxu0 0.0
        %3206 = vmatpush1.msra.mxu0 %v3150
        %3207 = vmatprep.subr.mxu0 0.0
        %3208 = vmatpush1.msra.mxu0 %v3151
        %3209 = vmatprep.subr.mxu0 0.0
        %3210 = vmatpush1.msra.mxu0 %v3152
        %3211 = vmatprep.subr.mxu0 0.0
        %3212 = vmatpush1.msra.mxu0 %v3153
        %3213 = vmatprep.subr.mxu0 0.0
        %3214 = vmatpush1.msra.mxu0 %v3154
        %3215 = vmatprep.subr.mxu0 0.0
        %3216 = vmatpush1.msra.mxu0 %v3155
        %3217 = vmatprep.subr.mxu0 0.0
        %3218 = vmatpush1.msra.mxu0 %v3156
        %3219 = vmatprep.subr.mxu0 0.0
        %3220 = vmatpush1.msra.mxu0 %v3157
        %3221 = vmatprep.subr.mxu0 0.0
        %3222 = vmatpush1.msra.mxu0 %v3158
        %3223 = vmatprep.subr.mxu0 0.0
        %3224 = vmatpush1.msra.mxu0 %v3159
        %3225 = vmatprep.subr.mxu0 0.0
        %3226 = vmatpush1.msra.mxu0 %v3160
        %3227 = vmatprep.subr.mxu0 0.0
        %3228 = vmatpush1.msra.mxu0 %v3161
        %3229 = vmatprep.subr.mxu0 0.0
        %3230 = vmatpush1.msra.mxu0 %v3162
        %3231 = vmatprep.subr.mxu0 0.0
        %3232 = vmatpush1.msra.mxu0 %v3163
        %3233 = vmatprep.subr.mxu0 0.0
        %3234 = vmatpush1.msra.mxu0 %v3164
        %3235 = vmatprep.subr.mxu0 0.0
        %3236 = vmatpush1.msra.mxu0 %v3165
        %3237 = vmatprep.subr.mxu0 0.0
        %3238 = vmatpush1.msra.mxu0 %v3166
        %3239 = vmatprep.subr.mxu0 0.0
        %3240 = vmatpush1.msra.mxu0 %v3167
        %3241 = vmatprep.subr.mxu0 0.0
        %3242 = vmatpush1.msra.mxu0 %v3168
        %3243 = vmatprep.subr.mxu0 0.0
        %3244 = vmatpush1.msra.mxu0 %v3169
        %3245 = vmatprep.subr.mxu0 0.0
        %3246 = vmatpush1.msra.mxu0 %v3170
        %3247 = vmatprep.subr.mxu0 0.0
        %3248 = vmatpush1.msra.mxu0 %v3171
        %3249 = vmatprep.subr.mxu0 0.0
        %3250 = vmatpush1.msra.mxu0 %v3172
        %3251 = vmatprep.subr.mxu0 0.0
        %3252 = vmatpush1.msra.mxu0 %v3173
        %3253 = vmatprep.subr.mxu0 0.0
        %3254 = vmatpush1.msra.mxu0 %v3174
        %3255 = vmatprep.subr.mxu0 0.0
        %3256 = vmatpush1.msra.mxu0 %v3175
        %3257 = vmatprep.subr.mxu0 0.0
        %3258 = vmatpush1.msra.mxu0 %v3176
        %3259 = vmatprep.subr.mxu0 0.0
        %3260 = vmatpush1.msra.mxu0 %v3177
        %3261 = vmatprep.subr.mxu0 0.0
        %3262 = vmatpush1.msra.mxu0 %v3178
        %3263 = vmatprep.subr.mxu0 0.0
        %3264 = vmatpush1.msra.mxu0 %v3179
        %3265 = vmatprep.subr.mxu0 0.0
        %3266 = vmatpush1.msra.mxu0 %v3180
        %3267 = vmatprep.subr.mxu0 0.0
        %3268 = vmatpush1.msra.mxu0 %v3181
        %3269 = vmatprep.mubr.f32.mxu0 %v3146
        %3270 = vmatmul.mubr.f32.gmra.mrb[0].mxu0 %v3142
        %v3271 = vpop.f32.mrb[0].mxu0
        %v3272 = vadd.f32 %v3200, %v3271
        %v3273 = vpop.f32.mrb[0].mxu0
        %3274 = vdwg.mxu0
        %3275 = vmatprep.subr.mxu0 0.0
        %3276 = vmatpush1.msra.mxu0 %v3182
        %3277 = vmatprep.subr.mxu0 0.0
        %3278 = vmatpush1.msra.mxu0 %v3183
        %3279 = vmatprep.subr.mxu0 0.0
        %3280 = vmatpush1.msra.mxu0 %v3184
        %3281 = vmatprep.subr.mxu0 0.0
        %3282 = vmatpush1.msra.mxu0 %v3185
        %3283 = vmatprep.subr.mxu0 0.0
        %3284 = vmatpush1.msra.mxu0 %v3186
        %3285 = vmatprep.subr.mxu0 0.0
        %3286 = vmatpush1.msra.mxu0 %v3187
        %3287 = vmatprep.subr.mxu0 0.0
        %3288 = vmatpush1.msra.mxu0 %v3188
        %3289 = vmatprep.subr.mxu0 0.0
        %3290 = vmatpush1.msra.mxu0 %v3189
        %3291 = vmatprep.subr.mxu0 0.0
        %3292 = vmatpush1.msra.mxu0 %v3190
        %3293 = vmatprep.subr.mxu0 0.0
        %3294 = vmatpush1.msra.mxu0 %v3191
        %3295 = vmatprep.subr.mxu0 0.0
        %3296 = vmatpush1.msra.mxu0 %v3192
        %3297 = vmatprep.subr.mxu0 0.0
        %3298 = vmatpush1.msra.mxu0 %v3193
        %3299 = vmatprep.subr.mxu0 0.0
        %3300 = vmatpush1.msra.mxu0 %v3194
        %3301 = vmatprep.subr.mxu0 0.0
        %3302 = vmatpush1.msra.mxu0 0.0
        %3303 = vmatprep.subr.mxu0 0.0
        %3304 = vmatpush1.msra.mxu0 0.0
        %3305 = vmatprep.subr.mxu0 0.0
        %3306 = vmatpush1.msra.mxu0 0.0
        %3307 = vmatprep.subr.mxu0 0.0
        %3308 = vmatpush1.msra.mxu0 0.0
        %3309 = vmatprep.subr.mxu0 0.0
        %3310 = vmatpush1.msra.mxu0 0.0
        %3311 = vmatprep.subr.mxu0 0.0
        %3312 = vmatpush1.msra.mxu0 0.0
        %3313 = vmatprep.subr.mxu0 0.0
        %3314 = vmatpush1.msra.mxu0 0.0
        %3315 = vmatprep.subr.mxu0 0.0
        %3316 = vmatpush1.msra.mxu0 0.0
        %3317 = vmatprep.subr.mxu0 0.0
        %3318 = vmatpush1.msra.mxu0 0.0
        %3319 = vmatprep.subr.mxu0 0.0
        %3320 = vmatpush1.msra.mxu0 0.0
        %3321 = vmatprep.subr.mxu0 0.0
        %3322 = vmatpush1.msra.mxu0 0.0
        %3323 = vmatprep.subr.mxu0 0.0
        %3324 = vmatpush1.msra.mxu0 0.0
        %3325 = vmatprep.subr.mxu0 0.0
        %3326 = vmatpush1.msra.mxu0 0.0
        %3327 = vmatprep.subr.mxu0 0.0
        %3328 = vmatpush1.msra.mxu0 0.0
        %3329 = vmatprep.subr.mxu0 0.0
        %3330 = vmatpush1.msra.mxu0 0.0
        %3331 = vmatprep.subr.mxu0 0.0
        %3332 = vmatpush1.msra.mxu0 0.0
        %3333 = vmatprep.subr.mxu0 0.0
        %3334 = vmatpush1.msra.mxu0 0.0
        %3335 = vmatprep.subr.mxu0 0.0
        %3336 = vmatpush1.msra.mxu0 0.0
        %3337 = vmatprep.subr.mxu0 0.0
        %3338 = vmatpush1.msra.mxu0 0.0
        %3339 = vmatprep.mubr.f32.mxu0 0.0
        %3340 = vmatmul.mubr.f32.gmra.mrb[0].mxu0 %v3203
        %v3341 = vpop.f32.mrb[0].mxu0
        %v3342 = vadd.f32 %v3272, %v3341
        %v3343 = vpop.f32.mrb[0].mxu0
        %3344 = vdwg.mxu0
        %vm3345 = vcmask 323584
        %3346 = vst.msk [vmem:[#allocation4] sm:$0x1f] %vm3345, %v3342
        %v3347 = vld [vmem:[#allocation4] ss:$5 sm:$0x1]
        %s3348 = scalar_lea.vmem [#allocation4], 1
        %v3349 = vld [vmem:[%s3348] ss:$5 sm:$0x1]
        %v3350 = vmax.f32 %v3347, %v3349
        %s3351 = scalar_lea.vmem [#allocation4], 2
        %v3352 = vld [vmem:[%s3351] ss:$5 sm:$0x1]
        %v3353 = vmax.f32 %v3350, %v3352
        %s3354 = scalar_lea.vmem [#allocation4], 3
        %v3355 = vld [vmem:[%s3354] ss:$5 sm:$0x1]
        %v3356 = vmax.f32 %v3353, %v3355
        %s3357 = scalar_lea.vmem [#allocation4], 4
        %v3358 = vld [vmem:[%s3357] ss:$5 sm:$0x1]
        %v3359 = vmax.f32 %v3356, %v3358
        %v3360 = vmax.f32 %v3359, 0.0
        %v3361 = vld [vmem:[%s9] sm:$0xff]
        %v3362 = vld [vmem:[%s9 + $0x8] sm:$0xff]
        %v3363 = vld [vmem:[%s9 + $0x10] sm:$0xff]
        %v3364 = vld [vmem:[%s9 + $0x18] sm:$0xff]
        %v3365 = vld [vmem:[%s9 + $0x20] sm:$0xff]
        %v3366 = vld [vmem:[%s10] sm:$0x1]
        %v3368 = vsel %vm3066, %v3360, 0
        %3370 = vmatprep.subr.mxu0 0.0
        %3371 = vmatpush1.msra.mxu0 %v3361
        %3372 = vmatprep.subr.mxu0 0.0
        %3373 = vmatpush1.msra.mxu0 %v3362
        %3374 = vmatprep.subr.mxu0 0.0
        %3375 = vmatpush1.msra.mxu0 %v3363
        %3376 = vmatprep.subr.mxu0 0.0
        %3377 = vmatpush1.msra.mxu0 %v3364
        %3378 = vmatprep.subr.mxu0 0.0
        %3379 = vmatpush1.msra.mxu0 %v3365
        %3380 = vmatprep.subr.mxu0 0.0
        %3381 = vmatpush1.msra.mxu0 0.0
        %3382 = vmatprep.subr.mxu0 0.0
        %3383 = vmatpush1.msra.mxu0 0.0
        %3384 = vmatprep.subr.mxu0 0.0
        %3385 = vmatpush1.msra.mxu0 0.0
        %3386 = vmatprep.subr.mxu0 0.0
        %3387 = vmatpush1.msra.mxu0 0.0
        %3388 = vmatprep.subr.mxu0 0.0
        %3389 = vmatpush1.msra.mxu0 0.0
        %3390 = vmatprep.subr.mxu0 0.0
        %3391 = vmatpush1.msra.mxu0 0.0
        %3392 = vmatprep.subr.mxu0 0.0
        %3393 = vmatpush1.msra.mxu0 0.0
        %3394 = vmatprep.subr.mxu0 0.0
        %3395 = vmatpush1.msra.mxu0 0.0
        %3396 = vmatprep.subr.mxu0 0.0
        %3397 = vmatpush1.msra.mxu0 0.0
        %3398 = vmatprep.subr.mxu0 0.0
        %3399 = vmatpush1.msra.mxu0 0.0
        %3400 = vmatprep.subr.mxu0 0.0
        %3401 = vmatpush1.msra.mxu0 0.0
        %3402 = vmatprep.subr.mxu0 0.0
        %3403 = vmatpush1.msra.mxu0 0.0
        %3404 = vmatprep.subr.mxu0 0.0
        %3405 = vmatpush1.msra.mxu0 0.0
        %3406 = vmatprep.subr.mxu0 0.0
        %3407 = vmatpush1.msra.mxu0 0.0
        %3408 = vmatprep.subr.mxu0 0.0
        %3409 = vmatpush1.msra.mxu0 0.0
        %3410 = vmatprep.subr.mxu0 0.0
        %3411 = vmatpush1.msra.mxu0 0.0
        %3412 = vmatprep.subr.mxu0 0.0
        %3413 = vmatpush1.msra.mxu0 0.0
        %3414 = vmatprep.subr.mxu0 0.0
        %3415 = vmatpush1.msra.mxu0 0.0
        %3416 = vmatprep.subr.mxu0 0.0
        %3417 = vmatpush1.msra.mxu0 0.0
        %3418 = vmatprep.subr.mxu0 0.0
        %3419 = vmatpush1.msra.mxu0 0.0
        %3420 = vmatprep.subr.mxu0 0.0
        %3421 = vmatpush1.msra.mxu0 0.0
        %3422 = vmatprep.subr.mxu0 0.0
        %3423 = vmatpush1.msra.mxu0 0.0
        %3424 = vmatprep.subr.mxu0 0.0
        %3425 = vmatpush1.msra.mxu0 0.0
        %3426 = vmatprep.subr.mxu0 0.0
        %3427 = vmatpush1.msra.mxu0 0.0
        %3428 = vmatprep.subr.mxu0 0.0
        %3429 = vmatpush1.msra.mxu0 0.0
        %3430 = vmatprep.subr.mxu0 0.0
        %3431 = vmatpush1.msra.mxu0 0.0
        %3432 = vmatprep.subr.mxu0 0.0
        %3433 = vmatpush1.msra.mxu0 0.0
        %3434 = vmatprep.mubr.f32.mxu0 0.0
        %3435 = vmatmul.mubr.f32.gmra.mrb[0].mxu0 %v3368
        %v3436 = vpop.f32.mrb[0].mxu0
        %v3437 = vadd.f32 %v3366, %v3436
        %v3438 = vpop.f32.mrb[0].mxu0
        %3439 = vdwg.mxu0
        %vm3440 = vcmask 32768
        %3441 = vst.msk [vmem:[%s378] sm:$0x1] %vm3440, %v3437
        %s3442 = sand.u32 %s269, 1
        %s3443 = scalar_lea.sflag [#allocation6], %s3442
        %s3444 = sand.u32 %s269, 1
        %s3445 = scalar_lea.vmem [#allocation5], %s3444
        // Predicated region
        $region65: #{net_forward.1} parent=63 // pred_check
          %p3446 = pneg %p279
        $region66: #{net_forward.1} parent=63 // pred_check_branch
          %3448 = sbr.rel (%p3446) target = $region68
        $region67: #{net_forward.1} parent=63 // pred_region
          %s3450 = ssub.s32 16, 16
          %3451 = vsyncadd %s3443, %s3450
          %s3452 = smul.addr %s25, 16
          %s3453 = scalar_lea.hbm %s11, %s3452
          %s3455 = sshll.u32 %s3445, 4
          %s3456 = int_to_ptr.vmem [resolvable:$true] %s3455
          %3458 = dma.vmem_to_hbm [thread:$0]  %s3456, 16, %s3453, %s3443
        $region68: #{net_forward.1} parent=63 // pred_fallthru
          _
      $region64: #{net_forward.1} parent=5 // pred_fallthru
        _
      %p3459 = scmp.le.s32.totalorder 2, %s20
      // Predicated region
      $region69: #{net_forward.1} parent=5 // pred_check
        %p3460 = pneg %p3459
      $region70: #{net_forward.1} parent=5 // pred_check_branch
        %3462 = sbr.rel (%p3460) target = $region72
      $region71: #{net_forward.1} parent=5 // pred_region
        %s3463 = ssub.s32 %s20, 2
        // Predicated region
        $region73: #{net_forward.1} parent=71 // pred_check
          %p3464 = pneg %p285
        $region74: #{net_forward.1} parent=71 // pred_check_branch
          %3466 = sbr.rel (%p3464) target = $region76
        $region75: #{net_forward.1} parent=71 // pred_region
          %s3467 = sand.u32 %s270, 1
          %s3468 = scalar_lea.sflag [#allocation6], %s3467
          %s3469 = sand.u32 %s270, 1
          %s3470 = scalar_lea.vmem [#allocation5], %s3469
          %3471 = dma.done %s3468, 16
        $region76: #{net_forward.1} parent=71 // pred_fallthru
          _
      $region72: #{net_forward.1} parent=5 // pred_fallthru
        _
    $region6: #{net_forward.1} parent=1 // loop_footer
      %s24 = sadd.s32 1, %s20
    $region7: #{net_forward.1} parent=1 // loop_footer_branch
      %19 = sbr.rel target = $region3
    $region8: #{net_forward.1} parent=1 // loop_exit
      _
    %3472 = vsyncpa [#allocation6], 1
    %s3473 = scalar_lea.sflag [#allocation6], 1
    %3474 = vsyncpa %s3473, 1

</llo_original>
